<compile_context>
chip_gen: v7x
topology: tpu7x:2x2x1
jax: 0.10.0
libtpu: 0.0.40
codegen_flags: <defaults>
</compile_context>

<pallas_src>
import jax
import jax.numpy as jnp
import numpy as np
from jax.experimental import pallas as pl
from jax.experimental.pallas import tpu as pltpu

_SQRT1_2 = 0.7071067811865476
_BN_EPS = 1e-5


# ----------------------------------------------------------------------------
# in-kernel GELU (erf-based, matches torch.nn.GELU() default)
# ----------------------------------------------------------------------------
def _erf_approx(x):
    # Abramowitz & Stegun 7.1.26 rational approximation, |err| <= 1.5e-7 vs
    # exact erf.  The divide is done with the EUP approximate reciprocal plus
    # one Newton-Raphson step, keeping it off the saturated VALU slot while
    # staying ~1e-7 accurate.  (Kernel-only: uses pl.reciprocal.)
    a1, a2, a3, a4, a5 = 0.254829592, -0.284496736, 1.421413741, -1.453152027, 1.061405429
    p = 0.3275911
    s = jnp.where(x >= 0.0, 1.0, -1.0)
    ax = jnp.abs(x)
    d = 1.0 + p * ax
    t = pl.reciprocal(d, approx=True)      # EUP slot
    t = t * (2.0 - d * t)                  # one NR refinement
    poly = ((((a5 * t + a4) * t + a3) * t + a2) * t + a1) * t
    return s * (1.0 - poly * jnp.exp(-ax * ax))


def _gelu(x):
    return 0.5 * x * (1.0 + _erf_approx(x * _SQRT1_2))


# ----------------------------------------------------------------------------
# kernel
# ----------------------------------------------------------------------------
def block_kernel(x_ref,
                 v1_ref, c1_ref, v2_ref, c2_ref,
                 w1_ref, b1_ref, w2_ref, b2_ref,
                 o_ref):
    # block layout: x_ref / o_ref = (M, D, TN); TN on lanes, D on sublanes.
    M, D, TN = x_ref.shape
    H2 = v1_ref.shape[1]
    f32 = jnp.float32

    x = x_ref[...].astype(f32)                       # (M, D, TN)

    # ---- ConvFFN2: groups = dmodel -> per-d MLP mixing the M variables ------
    # BatchNorm (eval) is folded into v1/c1 on the host.  The two pointwise
    # convs are fused per hidden index j, so the live intermediate is a single
    # (D, TN) plane plus the (M, D, TN) accumulator (no (H2, D, TN) tensor).
    # Contraction lengths M / H2 are tiny -> VPU broadcast-MACs, unrolled.
    y2 = None
    for j in range(H2):
        hj = v1_ref[0, j] * x[0]                     # (D,1)*(D,TN) -> (D,TN)
        for m in range(1, M):
            hj = hj + v1_ref[m, j] * x[m]
        hj = _gelu(hj + c1_ref[j])                   # (D, TN)
        term = v2_ref[j] * hj                        # (M,D,1)*(D,TN) -> (M,D,TN)
        y2 = term if y2 is None else y2 + term
    y2 = y2 + c2_ref[...]                            # (M, D, TN)

    # ---- ConvFFN1: groups = nvars -> per-m MLP over the D model dims --------
    if len(w1_ref.shape) == 2:
        # Block-diagonal weights (host-built): one MXU matmul with K = M*D
        # instead of M tiny K=D matmuls.  The reshapes are free because
        # D % 8 == 0 (pure leading-dim collapse/split, lanes untouched).
        MF, MD = w1_ref.shape
        y2f = y2.reshape(MD, TN).astype(w1_ref.dtype)
        g = jnp.dot(w1_ref[...], y2f, preferred_element_type=f32)        # (MF, TN)
        g = _gelu(g + b1_ref[...])
        y1 = jnp.dot(w2_ref[...], g.astype(w2_ref.dtype),
                     preferred_element_type=f32)                         # (MD, TN)
        y1 = (y1 + b2_ref[...]).reshape(M, D, TN)
    else:
        # Fallback (D not a multiple of 8): m-batched matmuls on the MXU.
        g = jnp.einsum("mfd,mdn->mfn", w1_ref[...], y2.astype(w1_ref.dtype),
                       preferred_element_type=f32)                       # (M, F, TN)
        g = _gelu(g + b1_ref[...])
        y1 = jnp.einsum("mdf,mfn->mdn", w2_ref[...], g.astype(w2_ref.dtype),
                        preferred_element_type=f32)                      # (M, D, TN)
        y1 = y1 + b2_ref[...]

    # residual (Dropout layers are identity in eval mode); x_ref is re-read so
    # the input's live range does not span the FFN1 matmuls.
    o_ref[...] = (x_ref[...].astype(f32) + y1).astype(o_ref.dtype)


# ----------------------------------------------------------------------------
# host-side helpers
# ----------------------------------------------------------------------------
def _block_diag(w):
    # (M, A, B) -> block-diagonal (M*A, M*B)
    m, a, b = w.shape
    out = jnp.zeros((m * a, m * b), w.dtype)
    for i in range(m):
        out = out.at[i * a:(i + 1) * a, i * b:(i + 1) * b].set(w[i])
    return out


def _padded_vmem_bytes(shape, itemsize):
    # VMEM footprint of one buffer, accounting for (8, 128) tile padding
    # (trailing-1 dims pad to 128 lanes).
    if len(shape) == 1:
        lead, r, c = 1, 1, shape[0]
    else:
        lead = int(np.prod(shape[:-2])) if len(shape) > 2 else 1
        r, c = shape[-2], shape[-1]
    return lead * (-(-r // 8) * 8) * (-(-c // 128) * 128) * itemsize


def _pick_tn(n_pad, b, m, d, itemsize):
    # Largest lane-dense tile that (a) divides the padded length, (b) keeps the
    # double-buffered x/o blocks under a modest budget, and (c) leaves >= 2
    # grid steps so both TensorCores get work on v7x whenever achievable.
    budget = 24 * 1024 * 1024
    cands = [t for t in (2048, 1024, 512, 256, 128)
             if n_pad % t == 0 and 2 * 2 * m * d * t * itemsize <= budget]
    if not cands:
        return 128
    for t in cands:
        if b * (n_pad // t) >= 2:
            return t
    return cands[-1]


def modern_tcn_block(x, params, *, tn=None):
    B, M, D, N = x.shape
    F = params["w1"].shape[1]            # dff
    H2 = params["v1"].shape[1]           # M*dff // D
    f32 = jnp.float32

    # ---- fold eval-mode BatchNorm1d into the first ConvFFN2 weights ---------
    # xn = x*scale + shift  =>  v1' = v1*scale ;  c1' = c1 + shift*sum_m v1
    # TODO(synk): training-mode BN would need a global (B*M, N) reduction per d.
    inv_std = jax.lax.rsqrt(params["var"].astype(f32) + _BN_EPS)          # (D,1)
    scale = params["gamma"].astype(f32) * inv_std
    shift = params["beta"].astype(f32) - params["mean"].astype(f32) * scale
    v1 = params["v1"].astype(f32) * scale[None, None]                     # (M,H2,D,1)
    c1 = params["c1"].astype(f32) + shift[None] * jnp.sum(params["v1"].astype(f32), axis=0)
    v2 = params["v2"].astype(f32)                                         # (H2,M,D,1)
    c2 = params["c2"].astype(f32)                                         # (M,D,1)

    # ---- ConvFFN1 weights: block-diagonal so the grouped conv is one matmul -
    mx_dtype = jnp.bfloat16 if x.dtype == jnp.bfloat16 else f32
    if D % 8 == 0:
        w1 = _block_diag(params["w1"].astype(mx_dtype))                   # (M*F, M*D)
        w2 = _block_diag(params["w2"].astype(mx_dtype))                   # (M*D, M*F)
        b1 = params["b1"].astype(f32).reshape(M * F, 1)
        b2 = params["b2"].astype(f32).reshape(M * D, 1)
    else:
        w1 = params["w1"].astype(mx_dtype)                                # (M, F, D)
        w2 = params["w2"].astype(mx_dtype)                                # (M, D, F)
        b1 = params["b1"].astype(f32)
        b2 = params["b2"].astype(f32)

    # ---- pad N to a multiple of 128 (lane-dense stores), pick TN ------------
    N_pad = -(-N // 128) * 128
    x_in = x if N_pad == N else jnp.pad(x, ((0, 0), (0, 0), (0, 0), (0, N_pad - N)))
    TN = _pick_tn(N_pad, B, M, D, x.dtype.itemsize) if tn is None else tn
    assert N_pad % TN == 0

    def full(shape):
        nd = len(shape)
        return pl.BlockSpec(shape, lambda b, n, _nd=nd: (0,) * _nd)

    weight_args = (v1, c1, v2, c2, w1, b1, w2, b2)
    # NOTE: the 8 constant-index weight operands could be single-buffered via
    # pipeline_mode=pl.Buffered(1) at real ModernTCN sizes; default buffering is
    # kept here because the demo footprint is < 1 MiB.
    in_specs = [pl.BlockSpec((None, M, D, TN), lambda b, n: (b, 0, 0, n))]
    in_specs += [full(w.shape) for w in weight_args]

    # ---- VMEM limit derived from the actual (lane-padded) footprint ---------
    blk = 2 * 2 * M * D * TN * x.dtype.itemsize                           # x + o, 2 bufs
    wts = 2 * sum(_padded_vmem_bytes(w.shape, w.dtype.itemsize) for w in weight_args)
    tmp = (2 * M * D + D + M * F) * TN * 4                                # f32 temporaries
    vmem_limit = int(min(64 << 20, max(16 << 20, 2 * (blk + wts + tmp))))

    flops = 2 * B * N_pad * (M * H2 * D + H2 * M * D + 2 * M * F * D)
    transc = B * N_pad * (H2 * D + M * F)                                 # one exp / gelu elem
    bytes_acc = (2 * int(np.prod(x_in.shape)) * x.dtype.itemsize
                 + sum(int(w.size) * w.dtype.itemsize for w in weight_args))

    out = pl.pallas_call(
        block_kernel,
        out_shape=jax.ShapeDtypeStruct((B, M, D, N_pad), x.dtype),
        grid_spec=pltpu.PrefetchScalarGridSpec(
            num_scalar_prefetch=0,
            grid=(B, N_pad // TN),
            in_specs=in_specs,
            out_specs=pl.BlockSpec((None, M, D, TN), lambda b, n: (b, 0, 0, n)),
        ),
        compiler_params=pltpu.CompilerParams(
            dimension_semantics=("parallel", "parallel"),
            vmem_limit_bytes=vmem_limit),
        cost_estimate=pl.CostEstimate(flops=flops, transcendentals=transc,
                                      bytes_accessed=bytes_acc),
        input_output_aliases={0: 0},
    )(x_in, *weight_args)
    return out if N_pad == N else out[..., :N]


# ----------------------------------------------------------------------------
# pure-JAX reference (exact erf GELU, mirrors the PyTorch forward, eval mode)
# ----------------------------------------------------------------------------
def _gelu_exact(x):
    return 0.5 * x * (1.0 + jax.scipy.special.erf(x * _SQRT1_2))


def block_ref(x, p):
    x = x.astype(jnp.float32)
    inv = jax.lax.rsqrt(p["var"].astype(jnp.float32) + _BN_EPS)           # (D, 1)
    xn = (x - p["mean"]) * (p["gamma"] * inv) + p["beta"]                 # (B, M, D, N)
    # ConvFFN2 (groups = dmodel): mix over M at each d
    h = jnp.einsum("mjd,bmdn->bjdn", p["v1"][..., 0], xn) + p["c1"][None]
    h = _gelu_exact(h)
    y2 = jnp.einsum("jmd,bjdn->bmdn", p["v2"][..., 0], h) + p["c2"][None]
    # ConvFFN1 (groups = nvars): mix over D at each m
    g = jnp.einsum("mfd,bmdn->bmfn", p["w1"], y2) + p["b1"][None]
    g = _gelu_exact(g)
    y1 = jnp.einsum("mdf,bmfn->bmdn", p["w2"], g) + p["b2"][None]
    return x + y1


if __name__ == "__main__":
    # small shapes: B=2, nvars M=4, dmodel D=8, dff=16, seq N=768 (-> TN=256, grid (2,3))
    B, M, D, N = 2, 4, 8, 768
    dff = 16
    assert (M * dff) % D == 0, "grouped conv requires M*dff divisible by D"
    H2 = (M * dff) // D

    f32 = jnp.float32
    keys = jax.random.split(jax.random.PRNGKey(0), 13)
    x = jax.random.normal(keys[0], (B, M, D, N), f32)

    # Deterministic parameters in kernel-friendly layouts; mapping to the
    # PyTorch Conv1d weights of shape (out, in/groups, 1) documented inline.
    params = dict(
        gamma=1.0 + 0.1 * jax.random.normal(keys[1], (D, 1), f32),
        beta=0.1 * jax.random.normal(keys[2], (D, 1), f32),
        mean=0.1 * jax.random.normal(keys[3], (D, 1), f32),
        var=0.5 + jax.random.uniform(keys[4], (D, 1), dtype=f32),
        # ffn2pw1.weight[(d*H2+j), m, 0] == v1[m, j, d, 0]; bias[(d*H2+j)] == c1[j, d, 0]
        v1=0.2 * jax.random.normal(keys[5], (M, H2, D, 1), f32),
        c1=0.1 * jax.random.normal(keys[6], (H2, D, 1), f32),
        # ffn2pw2.weight[(d*M+m), j, 0] == v2[j, m, d, 0]; bias[(d*M+m)] == c2[m, d, 0]
        v2=0.2 * jax.random.normal(keys[7], (H2, M, D, 1), f32),
        c2=0.1 * jax.random.normal(keys[8], (M, D, 1), f32),
        # ffn1pw1.weight[(m*dff+f), d, 0] == w1[m, f, d]; bias[(m*dff+f)] == b1[m, f, 0]
        w1=0.2 * jax.random.normal(keys[9], (M, dff, D), f32),
        b1=0.1 * jax.random.normal(keys[10], (M, dff, 1), f32),
        # ffn1pw2.weight[(m*D+d), f, 0] == w2[m, d, f]; bias[(m*D+d)] == b2[m, d, 0]
        w2=0.2 * jax.random.normal(keys[11], (M, D, dff), f32),
        b2=0.1 * jax.random.normal(keys[12], (M, D, 1), f32),
    )

    ref = block_ref(x, params)                      # computed before the aliased call
    out = jax.block_until_ready(modern_tcn_block(x, params))
    assert out.shape == (B, M, D, N)
    # Tolerance 2e-4: the EUP approx-reciprocal + one NR step in the erf keeps
    # the kernel within ~1e-5 of the exact-erf reference.
    np.testing.assert_allclose(np.asarray(out), np.asarray(ref), atol=2e-4, rtol=2e-4)
    print("KERNEL_OK")
</pallas_src>

<mosaic_0001>
module attributes {stable_mosaic.version = 11 : i64} {
  func.func @block_kernel(%arg0: i32, %arg1: i32, %arg2: memref<1x4x8x256xf32, #tpu.memory_space<vmem>>, %arg3: memref<4x8x8x1xf32, #tpu.memory_space<vmem>>, %arg4: memref<8x8x1xf32, #tpu.memory_space<vmem>>, %arg5: memref<8x4x8x1xf32, #tpu.memory_space<vmem>>, %arg6: memref<4x8x1xf32, #tpu.memory_space<vmem>>, %arg7: memref<64x32xf32, #tpu.memory_space<vmem>>, %arg8: memref<64x1xf32, #tpu.memory_space<vmem>>, %arg9: memref<32x64xf32, #tpu.memory_space<vmem>>, %arg10: memref<32x1xf32, #tpu.memory_space<vmem>>, %arg11: memref<1x4x8x256xf32, #tpu.memory_space<vmem>>) attributes {dimension_semantics = [#tpu.dimension_semantics<parallel>, #tpu.dimension_semantics<parallel>], iteration_bounds = array<i64: 2, 3>, scalar_prefetch = 0 : i64, scratch_operands = 0 : i64, tpu.core_type = #tpu.core_type<tc>, window_params = [{transform_indices = @transform_0, window_bounds = array<i64: 1, 4, 8, 256>}, {pipeline_mode = #tpu.pipeline_mode<synchronous>, transform_indices = @transform_1, window_bounds = array<i64: 4, 8, 8, 1>}, {pipeline_mode = #tpu.pipeline_mode<synchronous>, transform_indices = @transform_2, window_bounds = array<i64: 8, 8, 1>}, {pipeline_mode = #tpu.pipeline_mode<synchronous>, transform_indices = @transform_3, window_bounds = array<i64: 8, 4, 8, 1>}, {pipeline_mode = #tpu.pipeline_mode<synchronous>, transform_indices = @transform_4, window_bounds = array<i64: 4, 8, 1>}, {pipeline_mode = #tpu.pipeline_mode<synchronous>, transform_indices = @transform_5, window_bounds = array<i64: 64, 32>}, {pipeline_mode = #tpu.pipeline_mode<synchronous>, transform_indices = @transform_6, window_bounds = array<i64: 64, 1>}, {pipeline_mode = #tpu.pipeline_mode<synchronous>, transform_indices = @transform_7, window_bounds = array<i64: 32, 64>}, {pipeline_mode = #tpu.pipeline_mode<synchronous>, transform_indices = @transform_8, window_bounds = array<i64: 32, 1>}, {transform_indices = @transform_9, window_bounds = array<i64: 1, 4, 8, 256>}]} {
    %c0 = arith.constant 0 : index
    %c0_0 = arith.constant 0 : index
    %c0_1 = arith.constant 0 : index
    %c0_2 = arith.constant 0 : index
    %0 = vector.load %arg2[%c0, %c0_0, %c0_1, %c0_2] : memref<1x4x8x256xf32, #tpu.memory_space<vmem>>, vector<1x4x8x256xf32>
    %1 = vector.shape_cast %0 : vector<1x4x8x256xf32> to vector<4x8x256xf32>
    %c0_3 = arith.constant 0 : index
    %c0_4 = arith.constant 0 : index
    %c0_5 = arith.constant 0 : index
    %c0_6 = arith.constant 0 : index
    %2 = vector.load %arg3[%c0_3, %c0_4, %c0_5, %c0_6] : memref<4x8x8x1xf32, #tpu.memory_space<vmem>>, vector<1x1x8x1xf32>
    %3 = vector.shape_cast %2 : vector<1x1x8x1xf32> to vector<8x1xf32>
    %4 = vector.extract_strided_slice %1 {offsets = [0, 0, 0], sizes = [1, 8, 256], strides = [1, 1, 1]} : vector<4x8x256xf32> to vector<1x8x256xf32>
    %5 = vector.shape_cast %4 : vector<1x8x256xf32> to vector<8x256xf32>
    %6 = vector.broadcast %3 : vector<8x1xf32> to vector<8x256xf32>
    %7 = arith.mulf %6, %5 : vector<8x256xf32>
    %c1 = arith.constant 1 : index
    %c0_7 = arith.constant 0 : index
    %c0_8 = arith.constant 0 : index
    %c0_9 = arith.constant 0 : index
    %8 = vector.load %arg3[%c1, %c0_7, %c0_8, %c0_9] : memref<4x8x8x1xf32, #tpu.memory_space<vmem>>, vector<1x1x8x1xf32>
    %9 = vector.shape_cast %8 : vector<1x1x8x1xf32> to vector<8x1xf32>
    %10 = vector.extract_strided_slice %1 {offsets = [1, 0, 0], sizes = [1, 8, 256], strides = [1, 1, 1]} : vector<4x8x256xf32> to vector<1x8x256xf32>
    %11 = vector.shape_cast %10 : vector<1x8x256xf32> to vector<8x256xf32>
    %12 = vector.broadcast %9 : vector<8x1xf32> to vector<8x256xf32>
    %13 = arith.mulf %12, %11 : vector<8x256xf32>
    %14 = arith.addf %7, %13 : vector<8x256xf32>
    %c2 = arith.constant 2 : index
    %c0_10 = arith.constant 0 : index
    %c0_11 = arith.constant 0 : index
    %c0_12 = arith.constant 0 : index
    %15 = vector.load %arg3[%c2, %c0_10, %c0_11, %c0_12] : memref<4x8x8x1xf32, #tpu.memory_space<vmem>>, vector<1x1x8x1xf32>
    %16 = vector.shape_cast %15 : vector<1x1x8x1xf32> to vector<8x1xf32>
    %17 = vector.extract_strided_slice %1 {offsets = [2, 0, 0], sizes = [1, 8, 256], strides = [1, 1, 1]} : vector<4x8x256xf32> to vector<1x8x256xf32>
    %18 = vector.shape_cast %17 : vector<1x8x256xf32> to vector<8x256xf32>
    %19 = vector.broadcast %16 : vector<8x1xf32> to vector<8x256xf32>
    %20 = arith.mulf %19, %18 : vector<8x256xf32>
    %21 = arith.addf %14, %20 : vector<8x256xf32>
    %c3 = arith.constant 3 : index
    %c0_13 = arith.constant 0 : index
    %c0_14 = arith.constant 0 : index
    %c0_15 = arith.constant 0 : index
    %22 = vector.load %arg3[%c3, %c0_13, %c0_14, %c0_15] : memref<4x8x8x1xf32, #tpu.memory_space<vmem>>, vector<1x1x8x1xf32>
    %23 = vector.shape_cast %22 : vector<1x1x8x1xf32> to vector<8x1xf32>
    %24 = vector.extract_strided_slice %1 {offsets = [3, 0, 0], sizes = [1, 8, 256], strides = [1, 1, 1]} : vector<4x8x256xf32> to vector<1x8x256xf32>
    %25 = vector.shape_cast %24 : vector<1x8x256xf32> to vector<8x256xf32>
    %26 = vector.broadcast %23 : vector<8x1xf32> to vector<8x256xf32>
    %27 = arith.mulf %26, %25 : vector<8x256xf32>
    %28 = arith.addf %21, %27 : vector<8x256xf32>
    %c0_16 = arith.constant 0 : index
    %c0_17 = arith.constant 0 : index
    %c0_18 = arith.constant 0 : index
    %29 = vector.load %arg4[%c0_16, %c0_17, %c0_18] : memref<8x8x1xf32, #tpu.memory_space<vmem>>, vector<1x8x1xf32>
    %30 = vector.shape_cast %29 : vector<1x8x1xf32> to vector<8x1xf32>
    %31 = vector.broadcast %30 : vector<8x1xf32> to vector<8x256xf32>
    %32 = arith.addf %28, %31 : vector<8x256xf32>
    %cst = arith.constant 5.000000e-01 : f32
    %33 = vector.broadcast %cst : f32 to vector<8x256xf32>
    %34 = arith.mulf %33, %32 : vector<8x256xf32>
    %cst_19 = arith.constant 0.707106769 : f32
    %35 = vector.broadcast %cst_19 : f32 to vector<8x256xf32>
    %36 = arith.mulf %32, %35 : vector<8x256xf32>
    %cst_20 = arith.constant 0.000000e+00 : f32
    %37 = vector.broadcast %cst_20 : f32 to vector<8x256xf32>
    %38 = arith.cmpf oge, %36, %37 : vector<8x256xf32>
    %cst_21 = arith.constant 1.000000e+00 : f32
    %cst_22 = arith.constant -1.000000e+00 : f32
    %39 = vector.broadcast %cst_21 : f32 to vector<8x256xf32>
    %40 = vector.broadcast %cst_22 : f32 to vector<8x256xf32>
    %41 = arith.select %38, %39, %40 : vector<8x256xi1>, vector<8x256xf32>
    %42 = math.absf %36 : vector<8x256xf32>
    %cst_23 = arith.constant 0.327591091 : f32
    %43 = vector.broadcast %cst_23 : f32 to vector<8x256xf32>
    %44 = arith.mulf %43, %42 : vector<8x256xf32>
    %cst_24 = arith.constant 1.000000e+00 : f32
    %45 = vector.broadcast %cst_24 : f32 to vector<8x256xf32>
    %46 = arith.addf %45, %44 : vector<8x256xf32>
    %47 = tpu.reciprocal %46 {approx = true} : vector<8x256xf32> -> vector<8x256xf32>
    %48 = arith.mulf %46, %47 : vector<8x256xf32>
    %cst_25 = arith.constant 2.000000e+00 : f32
    %49 = vector.broadcast %cst_25 : f32 to vector<8x256xf32>
    %50 = arith.subf %49, %48 : vector<8x256xf32>
    %51 = arith.mulf %47, %50 : vector<8x256xf32>
    %cst_26 = arith.constant 1.06140542 : f32
    %52 = vector.broadcast %cst_26 : f32 to vector<8x256xf32>
    %53 = arith.mulf %52, %51 : vector<8x256xf32>
    %cst_27 = arith.constant -1.45315206 : f32
    %54 = vector.broadcast %cst_27 : f32 to vector<8x256xf32>
    %55 = arith.addf %53, %54 : vector<8x256xf32>
    %56 = arith.mulf %55, %51 : vector<8x256xf32>
    %cst_28 = arith.constant 1.42141378 : f32
    %57 = vector.broadcast %cst_28 : f32 to vector<8x256xf32>
    %58 = arith.addf %56, %57 : vector<8x256xf32>
    %59 = arith.mulf %58, %51 : vector<8x256xf32>
    %cst_29 = arith.constant -0.284496725 : f32
    %60 = vector.broadcast %cst_29 : f32 to vector<8x256xf32>
    %61 = arith.addf %59, %60 : vector<8x256xf32>
    %62 = arith.mulf %61, %51 : vector<8x256xf32>
    %cst_30 = arith.constant 0.254829586 : f32
    %63 = vector.broadcast %cst_30 : f32 to vector<8x256xf32>
    %64 = arith.addf %62, %63 : vector<8x256xf32>
    %65 = arith.mulf %64, %51 : vector<8x256xf32>
    %cst_31 = arith.constant 0.000000e+00 : f32
    %66 = vector.broadcast %cst_31 : f32 to vector<8x256xf32>
    %67 = arith.subf %66, %42 : vector<8x256xf32>
    %68 = arith.mulf %67, %42 : vector<8x256xf32>
    %69 = math.exp %68 : vector<8x256xf32>
    %70 = arith.mulf %65, %69 : vector<8x256xf32>
    %cst_32 = arith.constant 1.000000e+00 : f32
    %71 = vector.broadcast %cst_32 : f32 to vector<8x256xf32>
    %72 = arith.subf %71, %70 : vector<8x256xf32>
    %73 = arith.mulf %41, %72 : vector<8x256xf32>
    %cst_33 = arith.constant 1.000000e+00 : f32
    %74 = vector.broadcast %cst_33 : f32 to vector<8x256xf32>
    %75 = arith.addf %74, %73 : vector<8x256xf32>
    %76 = arith.mulf %34, %75 : vector<8x256xf32>
    %c0_34 = arith.constant 0 : index
    %c0_35 = arith.constant 0 : index
    %c0_36 = arith.constant 0 : index
    %c0_37 = arith.constant 0 : index
    %77 = vector.load %arg5[%c0_34, %c0_35, %c0_36, %c0_37] : memref<8x4x8x1xf32, #tpu.memory_space<vmem>>, vector<1x4x8x1xf32>
    %78 = vector.shape_cast %77 : vector<1x4x8x1xf32> to vector<4x8x1xf32>
    %79 = vector.shape_cast %76 : vector<8x256xf32> to vector<1x8x256xf32>
    %80 = vector.broadcast %78 : vector<4x8x1xf32> to vector<4x8x256xf32>
    %81 = vector.broadcast %79 : vector<1x8x256xf32> to vector<4x8x256xf32>
    %82 = arith.mulf %80, %81 : vector<4x8x256xf32>
    %c0_38 = arith.constant 0 : index
    %c1_39 = arith.constant 1 : index
    %c0_40 = arith.constant 0 : index
    %c0_41 = arith.constant 0 : index
    %83 = vector.load %arg3[%c0_38, %c1_39, %c0_40, %c0_41] : memref<4x8x8x1xf32, #tpu.memory_space<vmem>>, vector<1x1x8x1xf32>
    %84 = vector.shape_cast %83 : vector<1x1x8x1xf32> to vector<8x1xf32>
    %85 = vector.extract_strided_slice %1 {offsets = [0, 0, 0], sizes = [1, 8, 256], strides = [1, 1, 1]} : vector<4x8x256xf32> to vector<1x8x256xf32>
    %86 = vector.shape_cast %85 : vector<1x8x256xf32> to vector<8x256xf32>
    %87 = vector.broadcast %84 : vector<8x1xf32> to vector<8x256xf32>
    %88 = arith.mulf %87, %86 : vector<8x256xf32>
    %c1_42 = arith.constant 1 : index
    %c1_43 = arith.constant 1 : index
    %c0_44 = arith.constant 0 : index
    %c0_45 = arith.constant 0 : index
    %89 = vector.load %arg3[%c1_42, %c1_43, %c0_44, %c0_45] : memref<4x8x8x1xf32, #tpu.memory_space<vmem>>, vector<1x1x8x1xf32>
    %90 = vector.shape_cast %89 : vector<1x1x8x1xf32> to vector<8x1xf32>
    %91 = vector.extract_strided_slice %1 {offsets = [1, 0, 0], sizes = [1, 8, 256], strides = [1, 1, 1]} : vector<4x8x256xf32> to vector<1x8x256xf32>
    %92 = vector.shape_cast %91 : vector<1x8x256xf32> to vector<8x256xf32>
    %93 = vector.broadcast %90 : vector<8x1xf32> to vector<8x256xf32>
    %94 = arith.mulf %93, %92 : vector<8x256xf32>
    %95 = arith.addf %88, %94 : vector<8x256xf32>
    %c2_46 = arith.constant 2 : index
    %c1_47 = arith.constant 1 : index
    %c0_48 = arith.constant 0 : index
    %c0_49 = arith.constant 0 : index
    %96 = vector.load %arg3[%c2_46, %c1_47, %c0_48, %c0_49] : memref<4x8x8x1xf32, #tpu.memory_space<vmem>>, vector<1x1x8x1xf32>
    %97 = vector.shape_cast %96 : vector<1x1x8x1xf32> to vector<8x1xf32>
    %98 = vector.extract_strided_slice %1 {offsets = [2, 0, 0], sizes = [1, 8, 256], strides = [1, 1, 1]} : vector<4x8x256xf32> to vector<1x8x256xf32>
    %99 = vector.shape_cast %98 : vector<1x8x256xf32> to vector<8x256xf32>
    %100 = vector.broadcast %97 : vector<8x1xf32> to vector<8x256xf32>
    %101 = arith.mulf %100, %99 : vector<8x256xf32>
    %102 = arith.addf %95, %101 : vector<8x256xf32>
    %c3_50 = arith.constant 3 : index
    %c1_51 = arith.constant 1 : index
    %c0_52 = arith.constant 0 : index
    %c0_53 = arith.constant 0 : index
    %103 = vector.load %arg3[%c3_50, %c1_51, %c0_52, %c0_53] : memref<4x8x8x1xf32, #tpu.memory_space<vmem>>, vector<1x1x8x1xf32>
    %104 = vector.shape_cast %103 : vector<1x1x8x1xf32> to vector<8x1xf32>
    %105 = vector.extract_strided_slice %1 {offsets = [3, 0, 0], sizes = [1, 8, 256], strides = [1, 1, 1]} : vector<4x8x256xf32> to vector<1x8x256xf32>
    %106 = vector.shape_cast %105 : vector<1x8x256xf32> to vector<8x256xf32>
    %107 = vector.broadcast %104 : vector<8x1xf32> to vector<8x256xf32>
    %108 = arith.mulf %107, %106 : vector<8x256xf32>
    %109 = arith.addf %102, %108 : vector<8x256xf32>
    %c1_54 = arith.constant 1 : index
    %c0_55 = arith.constant 0 : index
    %c0_56 = arith.constant 0 : index
    %110 = vector.load %arg4[%c1_54, %c0_55, %c0_56] : memref<8x8x1xf32, #tpu.memory_space<vmem>>, vector<1x8x1xf32>
    %111 = vector.shape_cast %110 : vector<1x8x1xf32> to vector<8x1xf32>
    %112 = vector.broadcast %111 : vector<8x1xf32> to vector<8x256xf32>
    %113 = arith.addf %109, %112 : vector<8x256xf32>
    %cst_57 = arith.constant 5.000000e-01 : f32
    %114 = vector.broadcast %cst_57 : f32 to vector<8x256xf32>
    %115 = arith.mulf %114, %113 : vector<8x256xf32>
    %cst_58 = arith.constant 0.707106769 : f32
    %116 = vector.broadcast %cst_58 : f32 to vector<8x256xf32>
    %117 = arith.mulf %113, %116 : vector<8x256xf32>
    %cst_59 = arith.constant 0.000000e+00 : f32
    %118 = vector.broadcast %cst_59 : f32 to vector<8x256xf32>
    %119 = arith.cmpf oge, %117, %118 : vector<8x256xf32>
    %cst_60 = arith.constant 1.000000e+00 : f32
    %cst_61 = arith.constant -1.000000e+00 : f32
    %120 = vector.broadcast %cst_60 : f32 to vector<8x256xf32>
    %121 = vector.broadcast %cst_61 : f32 to vector<8x256xf32>
    %122 = arith.select %119, %120, %121 : vector<8x256xi1>, vector<8x256xf32>
    %123 = math.absf %117 : vector<8x256xf32>
    %cst_62 = arith.constant 0.327591091 : f32
    %124 = vector.broadcast %cst_62 : f32 to vector<8x256xf32>
    %125 = arith.mulf %124, %123 : vector<8x256xf32>
    %cst_63 = arith.constant 1.000000e+00 : f32
    %126 = vector.broadcast %cst_63 : f32 to vector<8x256xf32>
    %127 = arith.addf %126, %125 : vector<8x256xf32>
    %128 = tpu.reciprocal %127 {approx = true} : vector<8x256xf32> -> vector<8x256xf32>
    %129 = arith.mulf %127, %128 : vector<8x256xf32>
    %cst_64 = arith.constant 2.000000e+00 : f32
    %130 = vector.broadcast %cst_64 : f32 to vector<8x256xf32>
    %131 = arith.subf %130, %129 : vector<8x256xf32>
    %132 = arith.mulf %128, %131 : vector<8x256xf32>
    %cst_65 = arith.constant 1.06140542 : f32
    %133 = vector.broadcast %cst_65 : f32 to vector<8x256xf32>
    %134 = arith.mulf %133, %132 : vector<8x256xf32>
    %cst_66 = arith.constant -1.45315206 : f32
    %135 = vector.broadcast %cst_66 : f32 to vector<8x256xf32>
    %136 = arith.addf %134, %135 : vector<8x256xf32>
    %137 = arith.mulf %136, %132 : vector<8x256xf32>
    %cst_67 = arith.constant 1.42141378 : f32
    %138 = vector.broadcast %cst_67 : f32 to vector<8x256xf32>
    %139 = arith.addf %137, %138 : vector<8x256xf32>
    %140 = arith.mulf %139, %132 : vector<8x256xf32>
    %cst_68 = arith.constant -0.284496725 : f32
    %141 = vector.broadcast %cst_68 : f32 to vector<8x256xf32>
    %142 = arith.addf %140, %141 : vector<8x256xf32>
    %143 = arith.mulf %142, %132 : vector<8x256xf32>
    %cst_69 = arith.constant 0.254829586 : f32
    %144 = vector.broadcast %cst_69 : f32 to vector<8x256xf32>
    %145 = arith.addf %143, %144 : vector<8x256xf32>
    %146 = arith.mulf %145, %132 : vector<8x256xf32>
    %cst_70 = arith.constant 0.000000e+00 : f32
    %147 = vector.broadcast %cst_70 : f32 to vector<8x256xf32>
    %148 = arith.subf %147, %123 : vector<8x256xf32>
    %149 = arith.mulf %148, %123 : vector<8x256xf32>
    %150 = math.exp %149 : vector<8x256xf32>
    %151 = arith.mulf %146, %150 : vector<8x256xf32>
    %cst_71 = arith.constant 1.000000e+00 : f32
    %152 = vector.broadcast %cst_71 : f32 to vector<8x256xf32>
    %153 = arith.subf %152, %151 : vector<8x256xf32>
    %154 = arith.mulf %122, %153 : vector<8x256xf32>
    %cst_72 = arith.constant 1.000000e+00 : f32
    %155 = vector.broadcast %cst_72 : f32 to vector<8x256xf32>
    %156 = arith.addf %155, %154 : vector<8x256xf32>
    %157 = arith.mulf %115, %156 : vector<8x256xf32>
    %c1_73 = arith.constant 1 : index
    %c0_74 = arith.constant 0 : index
    %c0_75 = arith.constant 0 : index
    %c0_76 = arith.constant 0 : index
    %158 = vector.load %arg5[%c1_73, %c0_74, %c0_75, %c0_76] : memref<8x4x8x1xf32, #tpu.memory_space<vmem>>, vector<1x4x8x1xf32>
    %159 = vector.shape_cast %158 : vector<1x4x8x1xf32> to vector<4x8x1xf32>
    %160 = vector.shape_cast %157 : vector<8x256xf32> to vector<1x8x256xf32>
    %161 = vector.broadcast %159 : vector<4x8x1xf32> to vector<4x8x256xf32>
    %162 = vector.broadcast %160 : vector<1x8x256xf32> to vector<4x8x256xf32>
    %163 = arith.mulf %161, %162 : vector<4x8x256xf32>
    %164 = arith.addf %82, %163 : vector<4x8x256xf32>
    %c0_77 = arith.constant 0 : index
    %c2_78 = arith.constant 2 : index
    %c0_79 = arith.constant 0 : index
    %c0_80 = arith.constant 0 : index
    %165 = vector.load %arg3[%c0_77, %c2_78, %c0_79, %c0_80] : memref<4x8x8x1xf32, #tpu.memory_space<vmem>>, vector<1x1x8x1xf32>
    %166 = vector.shape_cast %165 : vector<1x1x8x1xf32> to vector<8x1xf32>
    %167 = vector.extract_strided_slice %1 {offsets = [0, 0, 0], sizes = [1, 8, 256], strides = [1, 1, 1]} : vector<4x8x256xf32> to vector<1x8x256xf32>
    %168 = vector.shape_cast %167 : vector<1x8x256xf32> to vector<8x256xf32>
    %169 = vector.broadcast %166 : vector<8x1xf32> to vector<8x256xf32>
    %170 = arith.mulf %169, %168 : vector<8x256xf32>
    %c1_81 = arith.constant 1 : index
    %c2_82 = arith.constant 2 : index
    %c0_83 = arith.constant 0 : index
    %c0_84 = arith.constant 0 : index
    %171 = vector.load %arg3[%c1_81, %c2_82, %c0_83, %c0_84] : memref<4x8x8x1xf32, #tpu.memory_space<vmem>>, vector<1x1x8x1xf32>
    %172 = vector.shape_cast %171 : vector<1x1x8x1xf32> to vector<8x1xf32>
    %173 = vector.extract_strided_slice %1 {offsets = [1, 0, 0], sizes = [1, 8, 256], strides = [1, 1, 1]} : vector<4x8x256xf32> to vector<1x8x256xf32>
    %174 = vector.shape_cast %173 : vector<1x8x256xf32> to vector<8x256xf32>
    %175 = vector.broadcast %172 : vector<8x1xf32> to vector<8x256xf32>
    %176 = arith.mulf %175, %174 : vector<8x256xf32>
    %177 = arith.addf %170, %176 : vector<8x256xf32>
    %c2_85 = arith.constant 2 : index
    %c2_86 = arith.constant 2 : index
    %c0_87 = arith.constant 0 : index
    %c0_88 = arith.constant 0 : index
    %178 = vector.load %arg3[%c2_85, %c2_86, %c0_87, %c0_88] : memref<4x8x8x1xf32, #tpu.memory_space<vmem>>, vector<1x1x8x1xf32>
    %179 = vector.shape_cast %178 : vector<1x1x8x1xf32> to vector<8x1xf32>
    %180 = vector.extract_strided_slice %1 {offsets = [2, 0, 0], sizes = [1, 8, 256], strides = [1, 1, 1]} : vector<4x8x256xf32> to vector<1x8x256xf32>
    %181 = vector.shape_cast %180 : vector<1x8x256xf32> to vector<8x256xf32>
    %182 = vector.broadcast %179 : vector<8x1xf32> to vector<8x256xf32>
    %183 = arith.mulf %182, %181 : vector<8x256xf32>
    %184 = arith.addf %177, %183 : vector<8x256xf32>
    %c3_89 = arith.constant 3 : index
    %c2_90 = arith.constant 2 : index
    %c0_91 = arith.constant 0 : index
    %c0_92 = arith.constant 0 : index
    %185 = vector.load %arg3[%c3_89, %c2_90, %c0_91, %c0_92] : memref<4x8x8x1xf32, #tpu.memory_space<vmem>>, vector<1x1x8x1xf32>
    %186 = vector.shape_cast %185 : vector<1x1x8x1xf32> to vector<8x1xf32>
    %187 = vector.extract_strided_slice %1 {offsets = [3, 0, 0], sizes = [1, 8, 256], strides = [1, 1, 1]} : vector<4x8x256xf32> to vector<1x8x256xf32>
    %188 = vector.shape_cast %187 : vector<1x8x256xf32> to vector<8x256xf32>
    %189 = vector.broadcast %186 : vector<8x1xf32> to vector<8x256xf32>
    %190 = arith.mulf %189, %188 : vector<8x256xf32>
    %191 = arith.addf %184, %190 : vector<8x256xf32>
    %c2_93 = arith.constant 2 : index
    %c0_94 = arith.constant 0 : index
    %c0_95 = arith.constant 0 : index
    %192 = vector.load %arg4[%c2_93, %c0_94, %c0_95] : memref<8x8x1xf32, #tpu.memory_space<vmem>>, vector<1x8x1xf32>
    %193 = vector.shape_cast %192 : vector<1x8x1xf32> to vector<8x1xf32>
    %194 = vector.broadcast %193 : vector<8x1xf32> to vector<8x256xf32>
    %195 = arith.addf %191, %194 : vector<8x256xf32>
    %cst_96 = arith.constant 5.000000e-01 : f32
    %196 = vector.broadcast %cst_96 : f32 to vector<8x256xf32>
    %197 = arith.mulf %196, %195 : vector<8x256xf32>
    %cst_97 = arith.constant 0.707106769 : f32
    %198 = vector.broadcast %cst_97 : f32 to vector<8x256xf32>
    %199 = arith.mulf %195, %198 : vector<8x256xf32>
    %cst_98 = arith.constant 0.000000e+00 : f32
    %200 = vector.broadcast %cst_98 : f32 to vector<8x256xf32>
    %201 = arith.cmpf oge, %199, %200 : vector<8x256xf32>
    %cst_99 = arith.constant 1.000000e+00 : f32
    %cst_100 = arith.constant -1.000000e+00 : f32
    %202 = vector.broadcast %cst_99 : f32 to vector<8x256xf32>
    %203 = vector.broadcast %cst_100 : f32 to vector<8x256xf32>
    %204 = arith.select %201, %202, %203 : vector<8x256xi1>, vector<8x256xf32>
    %205 = math.absf %199 : vector<8x256xf32>
    %cst_101 = arith.constant 0.327591091 : f32
    %206 = vector.broadcast %cst_101 : f32 to vector<8x256xf32>
    %207 = arith.mulf %206, %205 : vector<8x256xf32>
    %cst_102 = arith.constant 1.000000e+00 : f32
    %208 = vector.broadcast %cst_102 : f32 to vector<8x256xf32>
    %209 = arith.addf %208, %207 : vector<8x256xf32>
    %210 = tpu.reciprocal %209 {approx = true} : vector<8x256xf32> -> vector<8x256xf32>
    %211 = arith.mulf %209, %210 : vector<8x256xf32>
    %cst_103 = arith.constant 2.000000e+00 : f32
    %212 = vector.broadcast %cst_103 : f32 to vector<8x256xf32>
    %213 = arith.subf %212, %211 : vector<8x256xf32>
    %214 = arith.mulf %210, %213 : vector<8x256xf32>
    %cst_104 = arith.constant 1.06140542 : f32
    %215 = vector.broadcast %cst_104 : f32 to vector<8x256xf32>
    %216 = arith.mulf %215, %214 : vector<8x256xf32>
    %cst_105 = arith.constant -1.45315206 : f32
    %217 = vector.broadcast %cst_105 : f32 to vector<8x256xf32>
    %218 = arith.addf %216, %217 : vector<8x256xf32>
    %219 = arith.mulf %218, %214 : vector<8x256xf32>
    %cst_106 = arith.constant 1.42141378 : f32
    %220 = vector.broadcast %cst_106 : f32 to vector<8x256xf32>
    %221 = arith.addf %219, %220 : vector<8x256xf32>
    %222 = arith.mulf %221, %214 : vector<8x256xf32>
    %cst_107 = arith.constant -0.284496725 : f32
    %223 = vector.broadcast %cst_107 : f32 to vector<8x256xf32>
    %224 = arith.addf %222, %223 : vector<8x256xf32>
    %225 = arith.mulf %224, %214 : vector<8x256xf32>
    %cst_108 = arith.constant 0.254829586 : f32
    %226 = vector.broadcast %cst_108 : f32 to vector<8x256xf32>
    %227 = arith.addf %225, %226 : vector<8x256xf32>
    %228 = arith.mulf %227, %214 : vector<8x256xf32>
    %cst_109 = arith.constant 0.000000e+00 : f32
    %229 = vector.broadcast %cst_109 : f32 to vector<8x256xf32>
    %230 = arith.subf %229, %205 : vector<8x256xf32>
    %231 = arith.mulf %230, %205 : vector<8x256xf32>
    %232 = math.exp %231 : vector<8x256xf32>
    %233 = arith.mulf %228, %232 : vector<8x256xf32>
    %cst_110 = arith.constant 1.000000e+00 : f32
    %234 = vector.broadcast %cst_110 : f32 to vector<8x256xf32>
    %235 = arith.subf %234, %233 : vector<8x256xf32>
    %236 = arith.mulf %204, %235 : vector<8x256xf32>
    %cst_111 = arith.constant 1.000000e+00 : f32
    %237 = vector.broadcast %cst_111 : f32 to vector<8x256xf32>
    %238 = arith.addf %237, %236 : vector<8x256xf32>
    %239 = arith.mulf %197, %238 : vector<8x256xf32>
    %c2_112 = arith.constant 2 : index
    %c0_113 = arith.constant 0 : index
    %c0_114 = arith.constant 0 : index
    %c0_115 = arith.constant 0 : index
    %240 = vector.load %arg5[%c2_112, %c0_113, %c0_114, %c0_115] : memref<8x4x8x1xf32, #tpu.memory_space<vmem>>, vector<1x4x8x1xf32>
    %241 = vector.shape_cast %240 : vector<1x4x8x1xf32> to vector<4x8x1xf32>
    %242 = vector.shape_cast %239 : vector<8x256xf32> to vector<1x8x256xf32>
    %243 = vector.broadcast %241 : vector<4x8x1xf32> to vector<4x8x256xf32>
    %244 = vector.broadcast %242 : vector<1x8x256xf32> to vector<4x8x256xf32>
    %245 = arith.mulf %243, %244 : vector<4x8x256xf32>
    %246 = arith.addf %164, %245 : vector<4x8x256xf32>
    %c0_116 = arith.constant 0 : index
    %c3_117 = arith.constant 3 : index
    %c0_118 = arith.constant 0 : index
    %c0_119 = arith.constant 0 : index
    %247 = vector.load %arg3[%c0_116, %c3_117, %c0_118, %c0_119] : memref<4x8x8x1xf32, #tpu.memory_space<vmem>>, vector<1x1x8x1xf32>
    %248 = vector.shape_cast %247 : vector<1x1x8x1xf32> to vector<8x1xf32>
    %249 = vector.extract_strided_slice %1 {offsets = [0, 0, 0], sizes = [1, 8, 256], strides = [1, 1, 1]} : vector<4x8x256xf32> to vector<1x8x256xf32>
    %250 = vector.shape_cast %249 : vector<1x8x256xf32> to vector<8x256xf32>
    %251 = vector.broadcast %248 : vector<8x1xf32> to vector<8x256xf32>
    %252 = arith.mulf %251, %250 : vector<8x256xf32>
    %c1_120 = arith.constant 1 : index
    %c3_121 = arith.constant 3 : index
    %c0_122 = arith.constant 0 : index
    %c0_123 = arith.constant 0 : index
    %253 = vector.load %arg3[%c1_120, %c3_121, %c0_122, %c0_123] : memref<4x8x8x1xf32, #tpu.memory_space<vmem>>, vector<1x1x8x1xf32>
    %254 = vector.shape_cast %253 : vector<1x1x8x1xf32> to vector<8x1xf32>
    %255 = vector.extract_strided_slice %1 {offsets = [1, 0, 0], sizes = [1, 8, 256], strides = [1, 1, 1]} : vector<4x8x256xf32> to vector<1x8x256xf32>
    %256 = vector.shape_cast %255 : vector<1x8x256xf32> to vector<8x256xf32>
    %257 = vector.broadcast %254 : vector<8x1xf32> to vector<8x256xf32>
    %258 = arith.mulf %257, %256 : vector<8x256xf32>
    %259 = arith.addf %252, %258 : vector<8x256xf32>
    %c2_124 = arith.constant 2 : index
    %c3_125 = arith.constant 3 : index
    %c0_126 = arith.constant 0 : index
    %c0_127 = arith.constant 0 : index
    %260 = vector.load %arg3[%c2_124, %c3_125, %c0_126, %c0_127] : memref<4x8x8x1xf32, #tpu.memory_space<vmem>>, vector<1x1x8x1xf32>
    %261 = vector.shape_cast %260 : vector<1x1x8x1xf32> to vector<8x1xf32>
    %262 = vector.extract_strided_slice %1 {offsets = [2, 0, 0], sizes = [1, 8, 256], strides = [1, 1, 1]} : vector<4x8x256xf32> to vector<1x8x256xf32>
    %263 = vector.shape_cast %262 : vector<1x8x256xf32> to vector<8x256xf32>
    %264 = vector.broadcast %261 : vector<8x1xf32> to vector<8x256xf32>
    %265 = arith.mulf %264, %263 : vector<8x256xf32>
    %266 = arith.addf %259, %265 : vector<8x256xf32>
    %c3_128 = arith.constant 3 : index
    %c3_129 = arith.constant 3 : index
    %c0_130 = arith.constant 0 : index
    %c0_131 = arith.constant 0 : index
    %267 = vector.load %arg3[%c3_128, %c3_129, %c0_130, %c0_131] : memref<4x8x8x1xf32, #tpu.memory_space<vmem>>, vector<1x1x8x1xf32>
    %268 = vector.shape_cast %267 : vector<1x1x8x1xf32> to vector<8x1xf32>
    %269 = vector.extract_strided_slice %1 {offsets = [3, 0, 0], sizes = [1, 8, 256], strides = [1, 1, 1]} : vector<4x8x256xf32> to vector<1x8x256xf32>
    %270 = vector.shape_cast %269 : vector<1x8x256xf32> to vector<8x256xf32>
    %271 = vector.broadcast %268 : vector<8x1xf32> to vector<8x256xf32>
    %272 = arith.mulf %271, %270 : vector<8x256xf32>
    %273 = arith.addf %266, %272 : vector<8x256xf32>
    %c3_132 = arith.constant 3 : index
    %c0_133 = arith.constant 0 : index
    %c0_134 = arith.constant 0 : index
    %274 = vector.load %arg4[%c3_132, %c0_133, %c0_134] : memref<8x8x1xf32, #tpu.memory_space<vmem>>, vector<1x8x1xf32>
    %275 = vector.shape_cast %274 : vector<1x8x1xf32> to vector<8x1xf32>
    %276 = vector.broadcast %275 : vector<8x1xf32> to vector<8x256xf32>
    %277 = arith.addf %273, %276 : vector<8x256xf32>
    %cst_135 = arith.constant 5.000000e-01 : f32
    %278 = vector.broadcast %cst_135 : f32 to vector<8x256xf32>
    %279 = arith.mulf %278, %277 : vector<8x256xf32>
    %cst_136 = arith.constant 0.707106769 : f32
    %280 = vector.broadcast %cst_136 : f32 to vector<8x256xf32>
    %281 = arith.mulf %277, %280 : vector<8x256xf32>
    %cst_137 = arith.constant 0.000000e+00 : f32
    %282 = vector.broadcast %cst_137 : f32 to vector<8x256xf32>
    %283 = arith.cmpf oge, %281, %282 : vector<8x256xf32>
    %cst_138 = arith.constant 1.000000e+00 : f32
    %cst_139 = arith.constant -1.000000e+00 : f32
    %284 = vector.broadcast %cst_138 : f32 to vector<8x256xf32>
    %285 = vector.broadcast %cst_139 : f32 to vector<8x256xf32>
    %286 = arith.select %283, %284, %285 : vector<8x256xi1>, vector<8x256xf32>
    %287 = math.absf %281 : vector<8x256xf32>
    %cst_140 = arith.constant 0.327591091 : f32
    %288 = vector.broadcast %cst_140 : f32 to vector<8x256xf32>
    %289 = arith.mulf %288, %287 : vector<8x256xf32>
    %cst_141 = arith.constant 1.000000e+00 : f32
    %290 = vector.broadcast %cst_141 : f32 to vector<8x256xf32>
    %291 = arith.addf %290, %289 : vector<8x256xf32>
    %292 = tpu.reciprocal %291 {approx = true} : vector<8x256xf32> -> vector<8x256xf32>
    %293 = arith.mulf %291, %292 : vector<8x256xf32>
    %cst_142 = arith.constant 2.000000e+00 : f32
    %294 = vector.broadcast %cst_142 : f32 to vector<8x256xf32>
    %295 = arith.subf %294, %293 : vector<8x256xf32>
    %296 = arith.mulf %292, %295 : vector<8x256xf32>
    %cst_143 = arith.constant 1.06140542 : f32
    %297 = vector.broadcast %cst_143 : f32 to vector<8x256xf32>
    %298 = arith.mulf %297, %296 : vector<8x256xf32>
    %cst_144 = arith.constant -1.45315206 : f32
    %299 = vector.broadcast %cst_144 : f32 to vector<8x256xf32>
    %300 = arith.addf %298, %299 : vector<8x256xf32>
    %301 = arith.mulf %300, %296 : vector<8x256xf32>
    %cst_145 = arith.constant 1.42141378 : f32
    %302 = vector.broadcast %cst_145 : f32 to vector<8x256xf32>
    %303 = arith.addf %301, %302 : vector<8x256xf32>
    %304 = arith.mulf %303, %296 : vector<8x256xf32>
    %cst_146 = arith.constant -0.284496725 : f32
    %305 = vector.broadcast %cst_146 : f32 to vector<8x256xf32>
    %306 = arith.addf %304, %305 : vector<8x256xf32>
    %307 = arith.mulf %306, %296 : vector<8x256xf32>
    %cst_147 = arith.constant 0.254829586 : f32
    %308 = vector.broadcast %cst_147 : f32 to vector<8x256xf32>
    %309 = arith.addf %307, %308 : vector<8x256xf32>
    %310 = arith.mulf %309, %296 : vector<8x256xf32>
    %cst_148 = arith.constant 0.000000e+00 : f32
    %311 = vector.broadcast %cst_148 : f32 to vector<8x256xf32>
    %312 = arith.subf %311, %287 : vector<8x256xf32>
    %313 = arith.mulf %312, %287 : vector<8x256xf32>
    %314 = math.exp %313 : vector<8x256xf32>
    %315 = arith.mulf %310, %314 : vector<8x256xf32>
    %cst_149 = arith.constant 1.000000e+00 : f32
    %316 = vector.broadcast %cst_149 : f32 to vector<8x256xf32>
    %317 = arith.subf %316, %315 : vector<8x256xf32>
    %318 = arith.mulf %286, %317 : vector<8x256xf32>
    %cst_150 = arith.constant 1.000000e+00 : f32
    %319 = vector.broadcast %cst_150 : f32 to vector<8x256xf32>
    %320 = arith.addf %319, %318 : vector<8x256xf32>
    %321 = arith.mulf %279, %320 : vector<8x256xf32>
    %c3_151 = arith.constant 3 : index
    %c0_152 = arith.constant 0 : index
    %c0_153 = arith.constant 0 : index
    %c0_154 = arith.constant 0 : index
    %322 = vector.load %arg5[%c3_151, %c0_152, %c0_153, %c0_154] : memref<8x4x8x1xf32, #tpu.memory_space<vmem>>, vector<1x4x8x1xf32>
    %323 = vector.shape_cast %322 : vector<1x4x8x1xf32> to vector<4x8x1xf32>
    %324 = vector.shape_cast %321 : vector<8x256xf32> to vector<1x8x256xf32>
    %325 = vector.broadcast %323 : vector<4x8x1xf32> to vector<4x8x256xf32>
    %326 = vector.broadcast %324 : vector<1x8x256xf32> to vector<4x8x256xf32>
    %327 = arith.mulf %325, %326 : vector<4x8x256xf32>
    %328 = arith.addf %246, %327 : vector<4x8x256xf32>
    %c0_155 = arith.constant 0 : index
    %c4 = arith.constant 4 : index
    %c0_156 = arith.constant 0 : index
    %c0_157 = arith.constant 0 : index
    %329 = vector.load %arg3[%c0_155, %c4, %c0_156, %c0_157] : memref<4x8x8x1xf32, #tpu.memory_space<vmem>>, vector<1x1x8x1xf32>
    %330 = vector.shape_cast %329 : vector<1x1x8x1xf32> to vector<8x1xf32>
    %331 = vector.extract_strided_slice %1 {offsets = [0, 0, 0], sizes = [1, 8, 256], strides = [1, 1, 1]} : vector<4x8x256xf32> to vector<1x8x256xf32>
    %332 = vector.shape_cast %331 : vector<1x8x256xf32> to vector<8x256xf32>
    %333 = vector.broadcast %330 : vector<8x1xf32> to vector<8x256xf32>
    %334 = arith.mulf %333, %332 : vector<8x256xf32>
    %c1_158 = arith.constant 1 : index
    %c4_159 = arith.constant 4 : index
    %c0_160 = arith.constant 0 : index
    %c0_161 = arith.constant 0 : index
    %335 = vector.load %arg3[%c1_158, %c4_159, %c0_160, %c0_161] : memref<4x8x8x1xf32, #tpu.memory_space<vmem>>, vector<1x1x8x1xf32>
    %336 = vector.shape_cast %335 : vector<1x1x8x1xf32> to vector<8x1xf32>
    %337 = vector.extract_strided_slice %1 {offsets = [1, 0, 0], sizes = [1, 8, 256], strides = [1, 1, 1]} : vector<4x8x256xf32> to vector<1x8x256xf32>
    %338 = vector.shape_cast %337 : vector<1x8x256xf32> to vector<8x256xf32>
    %339 = vector.broadcast %336 : vector<8x1xf32> to vector<8x256xf32>
    %340 = arith.mulf %339, %338 : vector<8x256xf32>
    %341 = arith.addf %334, %340 : vector<8x256xf32>
    %c2_162 = arith.constant 2 : index
    %c4_163 = arith.constant 4 : index
    %c0_164 = arith.constant 0 : index
    %c0_165 = arith.constant 0 : index
    %342 = vector.load %arg3[%c2_162, %c4_163, %c0_164, %c0_165] : memref<4x8x8x1xf32, #tpu.memory_space<vmem>>, vector<1x1x8x1xf32>
    %343 = vector.shape_cast %342 : vector<1x1x8x1xf32> to vector<8x1xf32>
    %344 = vector.extract_strided_slice %1 {offsets = [2, 0, 0], sizes = [1, 8, 256], strides = [1, 1, 1]} : vector<4x8x256xf32> to vector<1x8x256xf32>
    %345 = vector.shape_cast %344 : vector<1x8x256xf32> to vector<8x256xf32>
    %346 = vector.broadcast %343 : vector<8x1xf32> to vector<8x256xf32>
    %347 = arith.mulf %346, %345 : vector<8x256xf32>
    %348 = arith.addf %341, %347 : vector<8x256xf32>
    %c3_166 = arith.constant 3 : index
    %c4_167 = arith.constant 4 : index
    %c0_168 = arith.constant 0 : index
    %c0_169 = arith.constant 0 : index
    %349 = vector.load %arg3[%c3_166, %c4_167, %c0_168, %c0_169] : memref<4x8x8x1xf32, #tpu.memory_space<vmem>>, vector<1x1x8x1xf32>
    %350 = vector.shape_cast %349 : vector<1x1x8x1xf32> to vector<8x1xf32>
    %351 = vector.extract_strided_slice %1 {offsets = [3, 0, 0], sizes = [1, 8, 256], strides = [1, 1, 1]} : vector<4x8x256xf32> to vector<1x8x256xf32>
    %352 = vector.shape_cast %351 : vector<1x8x256xf32> to vector<8x256xf32>
    %353 = vector.broadcast %350 : vector<8x1xf32> to vector<8x256xf32>
    %354 = arith.mulf %353, %352 : vector<8x256xf32>
    %355 = arith.addf %348, %354 : vector<8x256xf32>
    %c4_170 = arith.constant 4 : index
    %c0_171 = arith.constant 0 : index
    %c0_172 = arith.constant 0 : index
    %356 = vector.load %arg4[%c4_170, %c0_171, %c0_172] : memref<8x8x1xf32, #tpu.memory_space<vmem>>, vector<1x8x1xf32>
    %357 = vector.shape_cast %356 : vector<1x8x1xf32> to vector<8x1xf32>
    %358 = vector.broadcast %357 : vector<8x1xf32> to vector<8x256xf32>
    %359 = arith.addf %355, %358 : vector<8x256xf32>
    %cst_173 = arith.constant 5.000000e-01 : f32
    %360 = vector.broadcast %cst_173 : f32 to vector<8x256xf32>
    %361 = arith.mulf %360, %359 : vector<8x256xf32>
    %cst_174 = arith.constant 0.707106769 : f32
    %362 = vector.broadcast %cst_174 : f32 to vector<8x256xf32>
    %363 = arith.mulf %359, %362 : vector<8x256xf32>
    %cst_175 = arith.constant 0.000000e+00 : f32
    %364 = vector.broadcast %cst_175 : f32 to vector<8x256xf32>
    %365 = arith.cmpf oge, %363, %364 : vector<8x256xf32>
    %cst_176 = arith.constant 1.000000e+00 : f32
    %cst_177 = arith.constant -1.000000e+00 : f32
    %366 = vector.broadcast %cst_176 : f32 to vector<8x256xf32>
    %367 = vector.broadcast %cst_177 : f32 to vector<8x256xf32>
    %368 = arith.select %365, %366, %367 : vector<8x256xi1>, vector<8x256xf32>
    %369 = math.absf %363 : vector<8x256xf32>
    %cst_178 = arith.constant 0.327591091 : f32
    %370 = vector.broadcast %cst_178 : f32 to vector<8x256xf32>
    %371 = arith.mulf %370, %369 : vector<8x256xf32>
    %cst_179 = arith.constant 1.000000e+00 : f32
    %372 = vector.broadcast %cst_179 : f32 to vector<8x256xf32>
    %373 = arith.addf %372, %371 : vector<8x256xf32>
    %374 = tpu.reciprocal %373 {approx = true} : vector<8x256xf32> -> vector<8x256xf32>
    %375 = arith.mulf %373, %374 : vector<8x256xf32>
    %cst_180 = arith.constant 2.000000e+00 : f32
    %376 = vector.broadcast %cst_180 : f32 to vector<8x256xf32>
    %377 = arith.subf %376, %375 : vector<8x256xf32>
    %378 = arith.mulf %374, %377 : vector<8x256xf32>
    %cst_181 = arith.constant 1.06140542 : f32
    %379 = vector.broadcast %cst_181 : f32 to vector<8x256xf32>
    %380 = arith.mulf %379, %378 : vector<8x256xf32>
    %cst_182 = arith.constant -1.45315206 : f32
    %381 = vector.broadcast %cst_182 : f32 to vector<8x256xf32>
    %382 = arith.addf %380, %381 : vector<8x256xf32>
    %383 = arith.mulf %382, %378 : vector<8x256xf32>
    %cst_183 = arith.constant 1.42141378 : f32
    %384 = vector.broadcast %cst_183 : f32 to vector<8x256xf32>
    %385 = arith.addf %383, %384 : vector<8x256xf32>
    %386 = arith.mulf %385, %378 : vector<8x256xf32>
    %cst_184 = arith.constant -0.284496725 : f32
    %387 = vector.broadcast %cst_184 : f32 to vector<8x256xf32>
    %388 = arith.addf %386, %387 : vector<8x256xf32>
    %389 = arith.mulf %388, %378 : vector<8x256xf32>
    %cst_185 = arith.constant 0.254829586 : f32
    %390 = vector.broadcast %cst_185 : f32 to vector<8x256xf32>
    %391 = arith.addf %389, %390 : vector<8x256xf32>
    %392 = arith.mulf %391, %378 : vector<8x256xf32>
    %cst_186 = arith.constant 0.000000e+00 : f32
    %393 = vector.broadcast %cst_186 : f32 to vector<8x256xf32>
    %394 = arith.subf %393, %369 : vector<8x256xf32>
    %395 = arith.mulf %394, %369 : vector<8x256xf32>
    %396 = math.exp %395 : vector<8x256xf32>
    %397 = arith.mulf %392, %396 : vector<8x256xf32>
    %cst_187 = arith.constant 1.000000e+00 : f32
    %398 = vector.broadcast %cst_187 : f32 to vector<8x256xf32>
    %399 = arith.subf %398, %397 : vector<8x256xf32>
    %400 = arith.mulf %368, %399 : vector<8x256xf32>
    %cst_188 = arith.constant 1.000000e+00 : f32
    %401 = vector.broadcast %cst_188 : f32 to vector<8x256xf32>
    %402 = arith.addf %401, %400 : vector<8x256xf32>
    %403 = arith.mulf %361, %402 : vector<8x256xf32>
    %c4_189 = arith.constant 4 : index
    %c0_190 = arith.constant 0 : index
    %c0_191 = arith.constant 0 : index
    %c0_192 = arith.constant 0 : index
    %404 = vector.load %arg5[%c4_189, %c0_190, %c0_191, %c0_192] : memref<8x4x8x1xf32, #tpu.memory_space<vmem>>, vector<1x4x8x1xf32>
    %405 = vector.shape_cast %404 : vector<1x4x8x1xf32> to vector<4x8x1xf32>
    %406 = vector.shape_cast %403 : vector<8x256xf32> to vector<1x8x256xf32>
    %407 = vector.broadcast %405 : vector<4x8x1xf32> to vector<4x8x256xf32>
    %408 = vector.broadcast %406 : vector<1x8x256xf32> to vector<4x8x256xf32>
    %409 = arith.mulf %407, %408 : vector<4x8x256xf32>
    %410 = arith.addf %328, %409 : vector<4x8x256xf32>
    %c0_193 = arith.constant 0 : index
    %c5 = arith.constant 5 : index
    %c0_194 = arith.constant 0 : index
    %c0_195 = arith.constant 0 : index
    %411 = vector.load %arg3[%c0_193, %c5, %c0_194, %c0_195] : memref<4x8x8x1xf32, #tpu.memory_space<vmem>>, vector<1x1x8x1xf32>
    %412 = vector.shape_cast %411 : vector<1x1x8x1xf32> to vector<8x1xf32>
    %413 = vector.extract_strided_slice %1 {offsets = [0, 0, 0], sizes = [1, 8, 256], strides = [1, 1, 1]} : vector<4x8x256xf32> to vector<1x8x256xf32>
    %414 = vector.shape_cast %413 : vector<1x8x256xf32> to vector<8x256xf32>
    %415 = vector.broadcast %412 : vector<8x1xf32> to vector<8x256xf32>
    %416 = arith.mulf %415, %414 : vector<8x256xf32>
    %c1_196 = arith.constant 1 : index
    %c5_197 = arith.constant 5 : index
    %c0_198 = arith.constant 0 : index
    %c0_199 = arith.constant 0 : index
    %417 = vector.load %arg3[%c1_196, %c5_197, %c0_198, %c0_199] : memref<4x8x8x1xf32, #tpu.memory_space<vmem>>, vector<1x1x8x1xf32>
    %418 = vector.shape_cast %417 : vector<1x1x8x1xf32> to vector<8x1xf32>
    %419 = vector.extract_strided_slice %1 {offsets = [1, 0, 0], sizes = [1, 8, 256], strides = [1, 1, 1]} : vector<4x8x256xf32> to vector<1x8x256xf32>
    %420 = vector.shape_cast %419 : vector<1x8x256xf32> to vector<8x256xf32>
    %421 = vector.broadcast %418 : vector<8x1xf32> to vector<8x256xf32>
    %422 = arith.mulf %421, %420 : vector<8x256xf32>
    %423 = arith.addf %416, %422 : vector<8x256xf32>
    %c2_200 = arith.constant 2 : index
    %c5_201 = arith.constant 5 : index
    %c0_202 = arith.constant 0 : index
    %c0_203 = arith.constant 0 : index
    %424 = vector.load %arg3[%c2_200, %c5_201, %c0_202, %c0_203] : memref<4x8x8x1xf32, #tpu.memory_space<vmem>>, vector<1x1x8x1xf32>
    %425 = vector.shape_cast %424 : vector<1x1x8x1xf32> to vector<8x1xf32>
    %426 = vector.extract_strided_slice %1 {offsets = [2, 0, 0], sizes = [1, 8, 256], strides = [1, 1, 1]} : vector<4x8x256xf32> to vector<1x8x256xf32>
    %427 = vector.shape_cast %426 : vector<1x8x256xf32> to vector<8x256xf32>
    %428 = vector.broadcast %425 : vector<8x1xf32> to vector<8x256xf32>
    %429 = arith.mulf %428, %427 : vector<8x256xf32>
    %430 = arith.addf %423, %429 : vector<8x256xf32>
    %c3_204 = arith.constant 3 : index
    %c5_205 = arith.constant 5 : index
    %c0_206 = arith.constant 0 : index
    %c0_207 = arith.constant 0 : index
    %431 = vector.load %arg3[%c3_204, %c5_205, %c0_206, %c0_207] : memref<4x8x8x1xf32, #tpu.memory_space<vmem>>, vector<1x1x8x1xf32>
    %432 = vector.shape_cast %431 : vector<1x1x8x1xf32> to vector<8x1xf32>
    %433 = vector.extract_strided_slice %1 {offsets = [3, 0, 0], sizes = [1, 8, 256], strides = [1, 1, 1]} : vector<4x8x256xf32> to vector<1x8x256xf32>
    %434 = vector.shape_cast %433 : vector<1x8x256xf32> to vector<8x256xf32>
    %435 = vector.broadcast %432 : vector<8x1xf32> to vector<8x256xf32>
    %436 = arith.mulf %435, %434 : vector<8x256xf32>
    %437 = arith.addf %430, %436 : vector<8x256xf32>
    %c5_208 = arith.constant 5 : index
    %c0_209 = arith.constant 0 : index
    %c0_210 = arith.constant 0 : index
    %438 = vector.load %arg4[%c5_208, %c0_209, %c0_210] : memref<8x8x1xf32, #tpu.memory_space<vmem>>, vector<1x8x1xf32>
    %439 = vector.shape_cast %438 : vector<1x8x1xf32> to vector<8x1xf32>
    %440 = vector.broadcast %439 : vector<8x1xf32> to vector<8x256xf32>
    %441 = arith.addf %437, %440 : vector<8x256xf32>
    %cst_211 = arith.constant 5.000000e-01 : f32
    %442 = vector.broadcast %cst_211 : f32 to vector<8x256xf32>
    %443 = arith.mulf %442, %441 : vector<8x256xf32>
    %cst_212 = arith.constant 0.707106769 : f32
    %444 = vector.broadcast %cst_212 : f32 to vector<8x256xf32>
    %445 = arith.mulf %441, %444 : vector<8x256xf32>
    %cst_213 = arith.constant 0.000000e+00 : f32
    %446 = vector.broadcast %cst_213 : f32 to vector<8x256xf32>
    %447 = arith.cmpf oge, %445, %446 : vector<8x256xf32>
    %cst_214 = arith.constant 1.000000e+00 : f32
    %cst_215 = arith.constant -1.000000e+00 : f32
    %448 = vector.broadcast %cst_214 : f32 to vector<8x256xf32>
    %449 = vector.broadcast %cst_215 : f32 to vector<8x256xf32>
    %450 = arith.select %447, %448, %449 : vector<8x256xi1>, vector<8x256xf32>
    %451 = math.absf %445 : vector<8x256xf32>
    %cst_216 = arith.constant 0.327591091 : f32
    %452 = vector.broadcast %cst_216 : f32 to vector<8x256xf32>
    %453 = arith.mulf %452, %451 : vector<8x256xf32>
    %cst_217 = arith.constant 1.000000e+00 : f32
    %454 = vector.broadcast %cst_217 : f32 to vector<8x256xf32>
    %455 = arith.addf %454, %453 : vector<8x256xf32>
    %456 = tpu.reciprocal %455 {approx = true} : vector<8x256xf32> -> vector<8x256xf32>
    %457 = arith.mulf %455, %456 : vector<8x256xf32>
    %cst_218 = arith.constant 2.000000e+00 : f32
    %458 = vector.broadcast %cst_218 : f32 to vector<8x256xf32>
    %459 = arith.subf %458, %457 : vector<8x256xf32>
    %460 = arith.mulf %456, %459 : vector<8x256xf32>
    %cst_219 = arith.constant 1.06140542 : f32
    %461 = vector.broadcast %cst_219 : f32 to vector<8x256xf32>
    %462 = arith.mulf %461, %460 : vector<8x256xf32>
    %cst_220 = arith.constant -1.45315206 : f32
    %463 = vector.broadcast %cst_220 : f32 to vector<8x256xf32>
    %464 = arith.addf %462, %463 : vector<8x256xf32>
    %465 = arith.mulf %464, %460 : vector<8x256xf32>
    %cst_221 = arith.constant 1.42141378 : f32
    %466 = vector.broadcast %cst_221 : f32 to vector<8x256xf32>
    %467 = arith.addf %465, %466 : vector<8x256xf32>
    %468 = arith.mulf %467, %460 : vector<8x256xf32>
    %cst_222 = arith.constant -0.284496725 : f32
    %469 = vector.broadcast %cst_222 : f32 to vector<8x256xf32>
    %470 = arith.addf %468, %469 : vector<8x256xf32>
    %471 = arith.mulf %470, %460 : vector<8x256xf32>
    %cst_223 = arith.constant 0.254829586 : f32
    %472 = vector.broadcast %cst_223 : f32 to vector<8x256xf32>
    %473 = arith.addf %471, %472 : vector<8x256xf32>
    %474 = arith.mulf %473, %460 : vector<8x256xf32>
    %cst_224 = arith.constant 0.000000e+00 : f32
    %475 = vector.broadcast %cst_224 : f32 to vector<8x256xf32>
    %476 = arith.subf %475, %451 : vector<8x256xf32>
    %477 = arith.mulf %476, %451 : vector<8x256xf32>
    %478 = math.exp %477 : vector<8x256xf32>
    %479 = arith.mulf %474, %478 : vector<8x256xf32>
    %cst_225 = arith.constant 1.000000e+00 : f32
    %480 = vector.broadcast %cst_225 : f32 to vector<8x256xf32>
    %481 = arith.subf %480, %479 : vector<8x256xf32>
    %482 = arith.mulf %450, %481 : vector<8x256xf32>
    %cst_226 = arith.constant 1.000000e+00 : f32
    %483 = vector.broadcast %cst_226 : f32 to vector<8x256xf32>
    %484 = arith.addf %483, %482 : vector<8x256xf32>
    %485 = arith.mulf %443, %484 : vector<8x256xf32>
    %c5_227 = arith.constant 5 : index
    %c0_228 = arith.constant 0 : index
    %c0_229 = arith.constant 0 : index
    %c0_230 = arith.constant 0 : index
    %486 = vector.load %arg5[%c5_227, %c0_228, %c0_229, %c0_230] : memref<8x4x8x1xf32, #tpu.memory_space<vmem>>, vector<1x4x8x1xf32>
    %487 = vector.shape_cast %486 : vector<1x4x8x1xf32> to vector<4x8x1xf32>
    %488 = vector.shape_cast %485 : vector<8x256xf32> to vector<1x8x256xf32>
    %489 = vector.broadcast %487 : vector<4x8x1xf32> to vector<4x8x256xf32>
    %490 = vector.broadcast %488 : vector<1x8x256xf32> to vector<4x8x256xf32>
    %491 = arith.mulf %489, %490 : vector<4x8x256xf32>
    %492 = arith.addf %410, %491 : vector<4x8x256xf32>
    %c0_231 = arith.constant 0 : index
    %c6 = arith.constant 6 : index
    %c0_232 = arith.constant 0 : index
    %c0_233 = arith.constant 0 : index
    %493 = vector.load %arg3[%c0_231, %c6, %c0_232, %c0_233] : memref<4x8x8x1xf32, #tpu.memory_space<vmem>>, vector<1x1x8x1xf32>
    %494 = vector.shape_cast %493 : vector<1x1x8x1xf32> to vector<8x1xf32>
    %495 = vector.extract_strided_slice %1 {offsets = [0, 0, 0], sizes = [1, 8, 256], strides = [1, 1, 1]} : vector<4x8x256xf32> to vector<1x8x256xf32>
    %496 = vector.shape_cast %495 : vector<1x8x256xf32> to vector<8x256xf32>
    %497 = vector.broadcast %494 : vector<8x1xf32> to vector<8x256xf32>
    %498 = arith.mulf %497, %496 : vector<8x256xf32>
    %c1_234 = arith.constant 1 : index
    %c6_235 = arith.constant 6 : index
    %c0_236 = arith.constant 0 : index
    %c0_237 = arith.constant 0 : index
    %499 = vector.load %arg3[%c1_234, %c6_235, %c0_236, %c0_237] : memref<4x8x8x1xf32, #tpu.memory_space<vmem>>, vector<1x1x8x1xf32>
    %500 = vector.shape_cast %499 : vector<1x1x8x1xf32> to vector<8x1xf32>
    %501 = vector.extract_strided_slice %1 {offsets = [1, 0, 0], sizes = [1, 8, 256], strides = [1, 1, 1]} : vector<4x8x256xf32> to vector<1x8x256xf32>
    %502 = vector.shape_cast %501 : vector<1x8x256xf32> to vector<8x256xf32>
    %503 = vector.broadcast %500 : vector<8x1xf32> to vector<8x256xf32>
    %504 = arith.mulf %503, %502 : vector<8x256xf32>
    %505 = arith.addf %498, %504 : vector<8x256xf32>
    %c2_238 = arith.constant 2 : index
    %c6_239 = arith.constant 6 : index
    %c0_240 = arith.constant 0 : index
    %c0_241 = arith.constant 0 : index
    %506 = vector.load %arg3[%c2_238, %c6_239, %c0_240, %c0_241] : memref<4x8x8x1xf32, #tpu.memory_space<vmem>>, vector<1x1x8x1xf32>
    %507 = vector.shape_cast %506 : vector<1x1x8x1xf32> to vector<8x1xf32>
    %508 = vector.extract_strided_slice %1 {offsets = [2, 0, 0], sizes = [1, 8, 256], strides = [1, 1, 1]} : vector<4x8x256xf32> to vector<1x8x256xf32>
    %509 = vector.shape_cast %508 : vector<1x8x256xf32> to vector<8x256xf32>
    %510 = vector.broadcast %507 : vector<8x1xf32> to vector<8x256xf32>
    %511 = arith.mulf %510, %509 : vector<8x256xf32>
    %512 = arith.addf %505, %511 : vector<8x256xf32>
    %c3_242 = arith.constant 3 : index
    %c6_243 = arith.constant 6 : index
    %c0_244 = arith.constant 0 : index
    %c0_245 = arith.constant 0 : index
    %513 = vector.load %arg3[%c3_242, %c6_243, %c0_244, %c0_245] : memref<4x8x8x1xf32, #tpu.memory_space<vmem>>, vector<1x1x8x1xf32>
    %514 = vector.shape_cast %513 : vector<1x1x8x1xf32> to vector<8x1xf32>
    %515 = vector.extract_strided_slice %1 {offsets = [3, 0, 0], sizes = [1, 8, 256], strides = [1, 1, 1]} : vector<4x8x256xf32> to vector<1x8x256xf32>
    %516 = vector.shape_cast %515 : vector<1x8x256xf32> to vector<8x256xf32>
    %517 = vector.broadcast %514 : vector<8x1xf32> to vector<8x256xf32>
    %518 = arith.mulf %517, %516 : vector<8x256xf32>
    %519 = arith.addf %512, %518 : vector<8x256xf32>
    %c6_246 = arith.constant 6 : index
    %c0_247 = arith.constant 0 : index
    %c0_248 = arith.constant 0 : index
    %520 = vector.load %arg4[%c6_246, %c0_247, %c0_248] : memref<8x8x1xf32, #tpu.memory_space<vmem>>, vector<1x8x1xf32>
    %521 = vector.shape_cast %520 : vector<1x8x1xf32> to vector<8x1xf32>
    %522 = vector.broadcast %521 : vector<8x1xf32> to vector<8x256xf32>
    %523 = arith.addf %519, %522 : vector<8x256xf32>
    %cst_249 = arith.constant 5.000000e-01 : f32
    %524 = vector.broadcast %cst_249 : f32 to vector<8x256xf32>
    %525 = arith.mulf %524, %523 : vector<8x256xf32>
    %cst_250 = arith.constant 0.707106769 : f32
    %526 = vector.broadcast %cst_250 : f32 to vector<8x256xf32>
    %527 = arith.mulf %523, %526 : vector<8x256xf32>
    %cst_251 = arith.constant 0.000000e+00 : f32
    %528 = vector.broadcast %cst_251 : f32 to vector<8x256xf32>
    %529 = arith.cmpf oge, %527, %528 : vector<8x256xf32>
    %cst_252 = arith.constant 1.000000e+00 : f32
    %cst_253 = arith.constant -1.000000e+00 : f32
    %530 = vector.broadcast %cst_252 : f32 to vector<8x256xf32>
    %531 = vector.broadcast %cst_253 : f32 to vector<8x256xf32>
    %532 = arith.select %529, %530, %531 : vector<8x256xi1>, vector<8x256xf32>
    %533 = math.absf %527 : vector<8x256xf32>
    %cst_254 = arith.constant 0.327591091 : f32
    %534 = vector.broadcast %cst_254 : f32 to vector<8x256xf32>
    %535 = arith.mulf %534, %533 : vector<8x256xf32>
    %cst_255 = arith.constant 1.000000e+00 : f32
    %536 = vector.broadcast %cst_255 : f32 to vector<8x256xf32>
    %537 = arith.addf %536, %535 : vector<8x256xf32>
    %538 = tpu.reciprocal %537 {approx = true} : vector<8x256xf32> -> vector<8x256xf32>
    %539 = arith.mulf %537, %538 : vector<8x256xf32>
    %cst_256 = arith.constant 2.000000e+00 : f32
    %540 = vector.broadcast %cst_256 : f32 to vector<8x256xf32>
    %541 = arith.subf %540, %539 : vector<8x256xf32>
    %542 = arith.mulf %538, %541 : vector<8x256xf32>
    %cst_257 = arith.constant 1.06140542 : f32
    %543 = vector.broadcast %cst_257 : f32 to vector<8x256xf32>
    %544 = arith.mulf %543, %542 : vector<8x256xf32>
    %cst_258 = arith.constant -1.45315206 : f32
    %545 = vector.broadcast %cst_258 : f32 to vector<8x256xf32>
    %546 = arith.addf %544, %545 : vector<8x256xf32>
    %547 = arith.mulf %546, %542 : vector<8x256xf32>
    %cst_259 = arith.constant 1.42141378 : f32
    %548 = vector.broadcast %cst_259 : f32 to vector<8x256xf32>
    %549 = arith.addf %547, %548 : vector<8x256xf32>
    %550 = arith.mulf %549, %542 : vector<8x256xf32>
    %cst_260 = arith.constant -0.284496725 : f32
    %551 = vector.broadcast %cst_260 : f32 to vector<8x256xf32>
    %552 = arith.addf %550, %551 : vector<8x256xf32>
    %553 = arith.mulf %552, %542 : vector<8x256xf32>
    %cst_261 = arith.constant 0.254829586 : f32
    %554 = vector.broadcast %cst_261 : f32 to vector<8x256xf32>
    %555 = arith.addf %553, %554 : vector<8x256xf32>
    %556 = arith.mulf %555, %542 : vector<8x256xf32>
    %cst_262 = arith.constant 0.000000e+00 : f32
    %557 = vector.broadcast %cst_262 : f32 to vector<8x256xf32>
    %558 = arith.subf %557, %533 : vector<8x256xf32>
    %559 = arith.mulf %558, %533 : vector<8x256xf32>
    %560 = math.exp %559 : vector<8x256xf32>
    %561 = arith.mulf %556, %560 : vector<8x256xf32>
    %cst_263 = arith.constant 1.000000e+00 : f32
    %562 = vector.broadcast %cst_263 : f32 to vector<8x256xf32>
    %563 = arith.subf %562, %561 : vector<8x256xf32>
    %564 = arith.mulf %532, %563 : vector<8x256xf32>
    %cst_264 = arith.constant 1.000000e+00 : f32
    %565 = vector.broadcast %cst_264 : f32 to vector<8x256xf32>
    %566 = arith.addf %565, %564 : vector<8x256xf32>
    %567 = arith.mulf %525, %566 : vector<8x256xf32>
    %c6_265 = arith.constant 6 : index
    %c0_266 = arith.constant 0 : index
    %c0_267 = arith.constant 0 : index
    %c0_268 = arith.constant 0 : index
    %568 = vector.load %arg5[%c6_265, %c0_266, %c0_267, %c0_268] : memref<8x4x8x1xf32, #tpu.memory_space<vmem>>, vector<1x4x8x1xf32>
    %569 = vector.shape_cast %568 : vector<1x4x8x1xf32> to vector<4x8x1xf32>
    %570 = vector.shape_cast %567 : vector<8x256xf32> to vector<1x8x256xf32>
    %571 = vector.broadcast %569 : vector<4x8x1xf32> to vector<4x8x256xf32>
    %572 = vector.broadcast %570 : vector<1x8x256xf32> to vector<4x8x256xf32>
    %573 = arith.mulf %571, %572 : vector<4x8x256xf32>
    %574 = arith.addf %492, %573 : vector<4x8x256xf32>
    %c0_269 = arith.constant 0 : index
    %c7 = arith.constant 7 : index
    %c0_270 = arith.constant 0 : index
    %c0_271 = arith.constant 0 : index
    %575 = vector.load %arg3[%c0_269, %c7, %c0_270, %c0_271] : memref<4x8x8x1xf32, #tpu.memory_space<vmem>>, vector<1x1x8x1xf32>
    %576 = vector.shape_cast %575 : vector<1x1x8x1xf32> to vector<8x1xf32>
    %577 = vector.extract_strided_slice %1 {offsets = [0, 0, 0], sizes = [1, 8, 256], strides = [1, 1, 1]} : vector<4x8x256xf32> to vector<1x8x256xf32>
    %578 = vector.shape_cast %577 : vector<1x8x256xf32> to vector<8x256xf32>
    %579 = vector.broadcast %576 : vector<8x1xf32> to vector<8x256xf32>
    %580 = arith.mulf %579, %578 : vector<8x256xf32>
    %c1_272 = arith.constant 1 : index
    %c7_273 = arith.constant 7 : index
    %c0_274 = arith.constant 0 : index
    %c0_275 = arith.constant 0 : index
    %581 = vector.load %arg3[%c1_272, %c7_273, %c0_274, %c0_275] : memref<4x8x8x1xf32, #tpu.memory_space<vmem>>, vector<1x1x8x1xf32>
    %582 = vector.shape_cast %581 : vector<1x1x8x1xf32> to vector<8x1xf32>
    %583 = vector.extract_strided_slice %1 {offsets = [1, 0, 0], sizes = [1, 8, 256], strides = [1, 1, 1]} : vector<4x8x256xf32> to vector<1x8x256xf32>
    %584 = vector.shape_cast %583 : vector<1x8x256xf32> to vector<8x256xf32>
    %585 = vector.broadcast %582 : vector<8x1xf32> to vector<8x256xf32>
    %586 = arith.mulf %585, %584 : vector<8x256xf32>
    %587 = arith.addf %580, %586 : vector<8x256xf32>
    %c2_276 = arith.constant 2 : index
    %c7_277 = arith.constant 7 : index
    %c0_278 = arith.constant 0 : index
    %c0_279 = arith.constant 0 : index
    %588 = vector.load %arg3[%c2_276, %c7_277, %c0_278, %c0_279] : memref<4x8x8x1xf32, #tpu.memory_space<vmem>>, vector<1x1x8x1xf32>
    %589 = vector.shape_cast %588 : vector<1x1x8x1xf32> to vector<8x1xf32>
    %590 = vector.extract_strided_slice %1 {offsets = [2, 0, 0], sizes = [1, 8, 256], strides = [1, 1, 1]} : vector<4x8x256xf32> to vector<1x8x256xf32>
    %591 = vector.shape_cast %590 : vector<1x8x256xf32> to vector<8x256xf32>
    %592 = vector.broadcast %589 : vector<8x1xf32> to vector<8x256xf32>
    %593 = arith.mulf %592, %591 : vector<8x256xf32>
    %594 = arith.addf %587, %593 : vector<8x256xf32>
    %c3_280 = arith.constant 3 : index
    %c7_281 = arith.constant 7 : index
    %c0_282 = arith.constant 0 : index
    %c0_283 = arith.constant 0 : index
    %595 = vector.load %arg3[%c3_280, %c7_281, %c0_282, %c0_283] : memref<4x8x8x1xf32, #tpu.memory_space<vmem>>, vector<1x1x8x1xf32>
    %596 = vector.shape_cast %595 : vector<1x1x8x1xf32> to vector<8x1xf32>
    %597 = vector.extract_strided_slice %1 {offsets = [3, 0, 0], sizes = [1, 8, 256], strides = [1, 1, 1]} : vector<4x8x256xf32> to vector<1x8x256xf32>
    %598 = vector.shape_cast %597 : vector<1x8x256xf32> to vector<8x256xf32>
    %599 = vector.broadcast %596 : vector<8x1xf32> to vector<8x256xf32>
    %600 = arith.mulf %599, %598 : vector<8x256xf32>
    %601 = arith.addf %594, %600 : vector<8x256xf32>
    %c7_284 = arith.constant 7 : index
    %c0_285 = arith.constant 0 : index
    %c0_286 = arith.constant 0 : index
    %602 = vector.load %arg4[%c7_284, %c0_285, %c0_286] : memref<8x8x1xf32, #tpu.memory_space<vmem>>, vector<1x8x1xf32>
    %603 = vector.shape_cast %602 : vector<1x8x1xf32> to vector<8x1xf32>
    %604 = vector.broadcast %603 : vector<8x1xf32> to vector<8x256xf32>
    %605 = arith.addf %601, %604 : vector<8x256xf32>
    %cst_287 = arith.constant 5.000000e-01 : f32
    %606 = vector.broadcast %cst_287 : f32 to vector<8x256xf32>
    %607 = arith.mulf %606, %605 : vector<8x256xf32>
    %cst_288 = arith.constant 0.707106769 : f32
    %608 = vector.broadcast %cst_288 : f32 to vector<8x256xf32>
    %609 = arith.mulf %605, %608 : vector<8x256xf32>
    %cst_289 = arith.constant 0.000000e+00 : f32
    %610 = vector.broadcast %cst_289 : f32 to vector<8x256xf32>
    %611 = arith.cmpf oge, %609, %610 : vector<8x256xf32>
    %cst_290 = arith.constant 1.000000e+00 : f32
    %cst_291 = arith.constant -1.000000e+00 : f32
    %612 = vector.broadcast %cst_290 : f32 to vector<8x256xf32>
    %613 = vector.broadcast %cst_291 : f32 to vector<8x256xf32>
    %614 = arith.select %611, %612, %613 : vector<8x256xi1>, vector<8x256xf32>
    %615 = math.absf %609 : vector<8x256xf32>
    %cst_292 = arith.constant 0.327591091 : f32
    %616 = vector.broadcast %cst_292 : f32 to vector<8x256xf32>
    %617 = arith.mulf %616, %615 : vector<8x256xf32>
    %cst_293 = arith.constant 1.000000e+00 : f32
    %618 = vector.broadcast %cst_293 : f32 to vector<8x256xf32>
    %619 = arith.addf %618, %617 : vector<8x256xf32>
    %620 = tpu.reciprocal %619 {approx = true} : vector<8x256xf32> -> vector<8x256xf32>
    %621 = arith.mulf %619, %620 : vector<8x256xf32>
    %cst_294 = arith.constant 2.000000e+00 : f32
    %622 = vector.broadcast %cst_294 : f32 to vector<8x256xf32>
    %623 = arith.subf %622, %621 : vector<8x256xf32>
    %624 = arith.mulf %620, %623 : vector<8x256xf32>
    %cst_295 = arith.constant 1.06140542 : f32
    %625 = vector.broadcast %cst_295 : f32 to vector<8x256xf32>
    %626 = arith.mulf %625, %624 : vector<8x256xf32>
    %cst_296 = arith.constant -1.45315206 : f32
    %627 = vector.broadcast %cst_296 : f32 to vector<8x256xf32>
    %628 = arith.addf %626, %627 : vector<8x256xf32>
    %629 = arith.mulf %628, %624 : vector<8x256xf32>
    %cst_297 = arith.constant 1.42141378 : f32
    %630 = vector.broadcast %cst_297 : f32 to vector<8x256xf32>
    %631 = arith.addf %629, %630 : vector<8x256xf32>
    %632 = arith.mulf %631, %624 : vector<8x256xf32>
    %cst_298 = arith.constant -0.284496725 : f32
    %633 = vector.broadcast %cst_298 : f32 to vector<8x256xf32>
    %634 = arith.addf %632, %633 : vector<8x256xf32>
    %635 = arith.mulf %634, %624 : vector<8x256xf32>
    %cst_299 = arith.constant 0.254829586 : f32
    %636 = vector.broadcast %cst_299 : f32 to vector<8x256xf32>
    %637 = arith.addf %635, %636 : vector<8x256xf32>
    %638 = arith.mulf %637, %624 : vector<8x256xf32>
    %cst_300 = arith.constant 0.000000e+00 : f32
    %639 = vector.broadcast %cst_300 : f32 to vector<8x256xf32>
    %640 = arith.subf %639, %615 : vector<8x256xf32>
    %641 = arith.mulf %640, %615 : vector<8x256xf32>
    %642 = math.exp %641 : vector<8x256xf32>
    %643 = arith.mulf %638, %642 : vector<8x256xf32>
    %cst_301 = arith.constant 1.000000e+00 : f32
    %644 = vector.broadcast %cst_301 : f32 to vector<8x256xf32>
    %645 = arith.subf %644, %643 : vector<8x256xf32>
    %646 = arith.mulf %614, %645 : vector<8x256xf32>
    %cst_302 = arith.constant 1.000000e+00 : f32
    %647 = vector.broadcast %cst_302 : f32 to vector<8x256xf32>
    %648 = arith.addf %647, %646 : vector<8x256xf32>
    %649 = arith.mulf %607, %648 : vector<8x256xf32>
    %c7_303 = arith.constant 7 : index
    %c0_304 = arith.constant 0 : index
    %c0_305 = arith.constant 0 : index
    %c0_306 = arith.constant 0 : index
    %650 = vector.load %arg5[%c7_303, %c0_304, %c0_305, %c0_306] : memref<8x4x8x1xf32, #tpu.memory_space<vmem>>, vector<1x4x8x1xf32>
    %651 = vector.shape_cast %650 : vector<1x4x8x1xf32> to vector<4x8x1xf32>
    %652 = vector.shape_cast %649 : vector<8x256xf32> to vector<1x8x256xf32>
    %653 = vector.broadcast %651 : vector<4x8x1xf32> to vector<4x8x256xf32>
    %654 = vector.broadcast %652 : vector<1x8x256xf32> to vector<4x8x256xf32>
    %655 = arith.mulf %653, %654 : vector<4x8x256xf32>
    %656 = arith.addf %574, %655 : vector<4x8x256xf32>
    %c0_307 = arith.constant 0 : index
    %c0_308 = arith.constant 0 : index
    %c0_309 = arith.constant 0 : index
    %657 = vector.load %arg6[%c0_307, %c0_308, %c0_309] : memref<4x8x1xf32, #tpu.memory_space<vmem>>, vector<4x8x1xf32>
    %658 = vector.broadcast %657 : vector<4x8x1xf32> to vector<4x8x256xf32>
    %659 = arith.addf %656, %658 : vector<4x8x256xf32>
    %660 = vector.shape_cast %659 : vector<4x8x256xf32> to vector<32x256xf32>
    %c0_310 = arith.constant 0 : index
    %c0_311 = arith.constant 0 : index
    %661 = vector.load %arg7[%c0_310, %c0_311] : memref<64x32xf32, #tpu.memory_space<vmem>>, vector<64x32xf32>
    %cst_312 = arith.constant dense<0.000000e+00> : vector<64x256xf32>
    %662 = tpu.matmul %661, %660, %cst_312 {dimension_numbers = #tpu.dot_dimension_numbers<[1], [0], [0], [1], [0, 0, 1, 1], [], []>} : vector<64x32xf32>, vector<32x256xf32>, vector<64x256xf32> -> vector<64x256xf32>
    %c0_313 = arith.constant 0 : index
    %c0_314 = arith.constant 0 : index
    %663 = vector.load %arg8[%c0_313, %c0_314] : memref<64x1xf32, #tpu.memory_space<vmem>>, vector<64x1xf32>
    %664 = vector.broadcast %663 : vector<64x1xf32> to vector<64x256xf32>
    %665 = arith.addf %662, %664 : vector<64x256xf32>
    %cst_315 = arith.constant 5.000000e-01 : f32
    %666 = vector.broadcast %cst_315 : f32 to vector<64x256xf32>
    %667 = arith.mulf %666, %665 : vector<64x256xf32>
    %cst_316 = arith.constant 0.707106769 : f32
    %668 = vector.broadcast %cst_316 : f32 to vector<64x256xf32>
    %669 = arith.mulf %665, %668 : vector<64x256xf32>
    %cst_317 = arith.constant 0.000000e+00 : f32
    %670 = vector.broadcast %cst_317 : f32 to vector<64x256xf32>
    %671 = arith.cmpf oge, %669, %670 : vector<64x256xf32>
    %cst_318 = arith.constant 1.000000e+00 : f32
    %cst_319 = arith.constant -1.000000e+00 : f32
    %672 = vector.broadcast %cst_318 : f32 to vector<64x256xf32>
    %673 = vector.broadcast %cst_319 : f32 to vector<64x256xf32>
    %674 = arith.select %671, %672, %673 : vector<64x256xi1>, vector<64x256xf32>
    %675 = math.absf %669 : vector<64x256xf32>
    %cst_320 = arith.constant 0.327591091 : f32
    %676 = vector.broadcast %cst_320 : f32 to vector<64x256xf32>
    %677 = arith.mulf %676, %675 : vector<64x256xf32>
    %cst_321 = arith.constant 1.000000e+00 : f32
    %678 = vector.broadcast %cst_321 : f32 to vector<64x256xf32>
    %679 = arith.addf %678, %677 : vector<64x256xf32>
    %680 = tpu.reciprocal %679 {approx = true} : vector<64x256xf32> -> vector<64x256xf32>
    %681 = arith.mulf %679, %680 : vector<64x256xf32>
    %cst_322 = arith.constant 2.000000e+00 : f32
    %682 = vector.broadcast %cst_322 : f32 to vector<64x256xf32>
    %683 = arith.subf %682, %681 : vector<64x256xf32>
    %684 = arith.mulf %680, %683 : vector<64x256xf32>
    %cst_323 = arith.constant 1.06140542 : f32
    %685 = vector.broadcast %cst_323 : f32 to vector<64x256xf32>
    %686 = arith.mulf %685, %684 : vector<64x256xf32>
    %cst_324 = arith.constant -1.45315206 : f32
    %687 = vector.broadcast %cst_324 : f32 to vector<64x256xf32>
    %688 = arith.addf %686, %687 : vector<64x256xf32>
    %689 = arith.mulf %688, %684 : vector<64x256xf32>
    %cst_325 = arith.constant 1.42141378 : f32
    %690 = vector.broadcast %cst_325 : f32 to vector<64x256xf32>
    %691 = arith.addf %689, %690 : vector<64x256xf32>
    %692 = arith.mulf %691, %684 : vector<64x256xf32>
    %cst_326 = arith.constant -0.284496725 : f32
    %693 = vector.broadcast %cst_326 : f32 to vector<64x256xf32>
    %694 = arith.addf %692, %693 : vector<64x256xf32>
    %695 = arith.mulf %694, %684 : vector<64x256xf32>
    %cst_327 = arith.constant 0.254829586 : f32
    %696 = vector.broadcast %cst_327 : f32 to vector<64x256xf32>
    %697 = arith.addf %695, %696 : vector<64x256xf32>
    %698 = arith.mulf %697, %684 : vector<64x256xf32>
    %cst_328 = arith.constant 0.000000e+00 : f32
    %699 = vector.broadcast %cst_328 : f32 to vector<64x256xf32>
    %700 = arith.subf %699, %675 : vector<64x256xf32>
    %701 = arith.mulf %700, %675 : vector<64x256xf32>
    %702 = math.exp %701 : vector<64x256xf32>
    %703 = arith.mulf %698, %702 : vector<64x256xf32>
    %cst_329 = arith.constant 1.000000e+00 : f32
    %704 = vector.broadcast %cst_329 : f32 to vector<64x256xf32>
    %705 = arith.subf %704, %703 : vector<64x256xf32>
    %706 = arith.mulf %674, %705 : vector<64x256xf32>
    %cst_330 = arith.constant 1.000000e+00 : f32
    %707 = vector.broadcast %cst_330 : f32 to vector<64x256xf32>
    %708 = arith.addf %707, %706 : vector<64x256xf32>
    %709 = arith.mulf %667, %708 : vector<64x256xf32>
    %c0_331 = arith.constant 0 : index
    %c0_332 = arith.constant 0 : index
    %710 = vector.load %arg9[%c0_331, %c0_332] : memref<32x64xf32, #tpu.memory_space<vmem>>, vector<32x64xf32>
    %cst_333 = arith.constant dense<0.000000e+00> : vector<32x256xf32>
    %711 = tpu.matmul %710, %709, %cst_333 {dimension_numbers = #tpu.dot_dimension_numbers<[1], [0], [0], [1], [0, 0, 1, 1], [], []>} : vector<32x64xf32>, vector<64x256xf32>, vector<32x256xf32> -> vector<32x256xf32>
    %c0_334 = arith.constant 0 : index
    %c0_335 = arith.constant 0 : index
    %712 = vector.load %arg10[%c0_334, %c0_335] : memref<32x1xf32, #tpu.memory_space<vmem>>, vector<32x1xf32>
    %713 = vector.broadcast %712 : vector<32x1xf32> to vector<32x256xf32>
    %714 = arith.addf %711, %713 : vector<32x256xf32>
    %715 = vector.shape_cast %714 : vector<32x256xf32> to vector<4x8x256xf32>
    %c0_336 = arith.constant 0 : index
    %c0_337 = arith.constant 0 : index
    %c0_338 = arith.constant 0 : index
    %c0_339 = arith.constant 0 : index
    %716 = vector.load %arg2[%c0_336, %c0_337, %c0_338, %c0_339] : memref<1x4x8x256xf32, #tpu.memory_space<vmem>>, vector<1x4x8x256xf32>
    %717 = vector.shape_cast %716 : vector<1x4x8x256xf32> to vector<4x8x256xf32>
    %718 = arith.addf %717, %715 : vector<4x8x256xf32>
    %c0_340 = arith.constant 0 : index
    %c0_341 = arith.constant 0 : index
    %c0_342 = arith.constant 0 : index
    %c0_343 = arith.constant 0 : index
    %719 = vector.load %arg11[%c0_340, %c0_341, %c0_342, %c0_343] : memref<1x4x8x256xf32, #tpu.memory_space<vmem>>, vector<1x4x8x256xf32>
    %720 = vector.shape_cast %719 : vector<1x4x8x256xf32> to vector<4x8x256xf32>
    %721 = vector.shape_cast %718 : vector<4x8x256xf32> to vector<1x4x8x256xf32>
    tpu.vector_store %arg11[%c0_340, %c0_341, %c0_342, %c0_343], %721 {strides = array<i32>} : memref<1x4x8x256xf32, #tpu.memory_space<vmem>>, vector<1x4x8x256xf32>,
    return
  }
  func.func @transform_0(%arg0: i32, %arg1: i32) -> (i32, i32, i32, i32) {
    %c0_i32 = arith.constant 0 : i32
    %c0_i32_0 = arith.constant 0 : i32
    %c0_i32_1 = arith.constant 0 : i32
    return %arg0, %c0_i32, %c0_i32_0, %arg1 : i32, i32, i32, i32
  }
  func.func @transform_1(%arg0: i32, %arg1: i32) -> (i32, i32, i32, i32) {
    %c0_i32 = arith.constant 0 : i32
    %c0_i32_0 = arith.constant 0 : i32
    %c0_i32_1 = arith.constant 0 : i32
    %c0_i32_2 = arith.constant 0 : i32
    %c0_i32_3 = arith.constant 0 : i32
    return %c0_i32, %c0_i32_0, %c0_i32_1, %c0_i32_2 : i32, i32, i32, i32
  }
  func.func @transform_2(%arg0: i32, %arg1: i32) -> (i32, i32, i32) {
    %c0_i32 = arith.constant 0 : i32
    %c0_i32_0 = arith.constant 0 : i32
    %c0_i32_1 = arith.constant 0 : i32
    %c0_i32_2 = arith.constant 0 : i32
    return %c0_i32, %c0_i32_0, %c0_i32_1 : i32, i32, i32
  }
  func.func @transform_3(%arg0: i32, %arg1: i32) -> (i32, i32, i32, i32) {
    %c0_i32 = arith.constant 0 : i32
    %c0_i32_0 = arith.constant 0 : i32
    %c0_i32_1 = arith.constant 0 : i32
    %c0_i32_2 = arith.constant 0 : i32
    %c0_i32_3 = arith.constant 0 : i32
    return %c0_i32, %c0_i32_0, %c0_i32_1, %c0_i32_2 : i32, i32, i32, i32
  }
  func.func @transform_4(%arg0: i32, %arg1: i32) -> (i32, i32, i32) {
    %c0_i32 = arith.constant 0 : i32
    %c0_i32_0 = arith.constant 0 : i32
    %c0_i32_1 = arith.constant 0 : i32
    %c0_i32_2 = arith.constant 0 : i32
    return %c0_i32, %c0_i32_0, %c0_i32_1 : i32, i32, i32
  }
  func.func @transform_5(%arg0: i32, %arg1: i32) -> (i32, i32) {
    %c0_i32 = arith.constant 0 : i32
    %c0_i32_0 = arith.constant 0 : i32
    %c0_i32_1 = arith.constant 0 : i32
    return %c0_i32, %c0_i32_0 : i32, i32
  }
  func.func @transform_6(%arg0: i32, %arg1: i32) -> (i32, i32) {
    %c0_i32 = arith.constant 0 : i32
    %c0_i32_0 = arith.constant 0 : i32
    %c0_i32_1 = arith.constant 0 : i32
    return %c0_i32, %c0_i32_0 : i32, i32
  }
  func.func @transform_7(%arg0: i32, %arg1: i32) -> (i32, i32) {
    %c0_i32 = arith.constant 0 : i32
    %c0_i32_0 = arith.constant 0 : i32
    %c0_i32_1 = arith.constant 0 : i32
    return %c0_i32, %c0_i32_0 : i32, i32
  }
  func.func @transform_8(%arg0: i32, %arg1: i32) -> (i32, i32) {
    %c0_i32 = arith.constant 0 : i32
    %c0_i32_0 = arith.constant 0 : i32
    %c0_i32_1 = arith.constant 0 : i32
    return %c0_i32, %c0_i32_0 : i32, i32
  }
  func.func @transform_9(%arg0: i32, %arg1: i32) -> (i32, i32, i32, i32) {
    %c0_i32 = arith.constant 0 : i32
    %c0_i32_0 = arith.constant 0 : i32
    %c0_i32_1 = arith.constant 0 : i32
    return %arg0, %c0_i32, %c0_i32_0, %arg1 : i32, i32, i32, i32
  }
}

</mosaic_0001>

<llo_original>
// kernel: tpu_custom_call.1
$region0: #{tpu_custom_call.1}
  #allocation0 [shape = 'u32[]', space=smem, size = 0x4, offset = 0x4, fixed_abs, tag = 'smem constant byte address 0x4 - core index']
  #allocation1 [shape = 'u32[144,128]{1,0:T(1,128)}', space=vmem, size = 0x12000, scoped, tag = 'internal scratch']
  %s0 = inlined_call_operand.hbm [shape: f32[2,4,8,768], index: 0, kind: input, shape index: {}, may-alias: {0,9}]
  %s1 = inlined_call_operand.vmem [shape: f32[4,8,8,1], index: 1, kind: input, shape index: {}]
  %s2 = inlined_call_operand.vmem [shape: f32[8,8,1], index: 2, kind: input, shape index: {}]
  %s3 = inlined_call_operand.vmem [shape: f32[8,4,8,1], index: 3, kind: input, shape index: {}]
  %s4 = inlined_call_operand.vmem [shape: f32[4,8,1], index: 4, kind: input, shape index: {}]
  %s5 = inlined_call_operand.vmem [shape: f32[64,32], index: 5, kind: input, shape index: {}]
  %s6 = inlined_call_operand.vmem [shape: f32[64,1], index: 6, kind: input, shape index: {}]
  %s7 = inlined_call_operand.vmem [shape: f32[32,64], index: 7, kind: input, shape index: {}]
  %s8 = inlined_call_operand.vmem [shape: f32[32,1], index: 8, kind: input, shape index: {}]
  %s9 = inlined_call_operand.hbm [shape: f32[2,4,8,768], index: 9, kind: output, shape index: {}, may-alias: {0,9}]
  %s10 = sld [smem:[#allocation0]]
  $region73: #{tpu_custom_call.1} parent=0
    _
  %s12 = ssub.s32 1, %s10
  %s13 = scalar_select 0, %s12, %s10
  $region1: #{tpu_custom_call.1} parent=0
    #allocation2 [shape = 'u8[65536]{0}', space=vmem, size = 0x10000, scoped, tag = 'input window, operand 0']
    #allocation3 [shape = 's32[2]{0}', space=sflag, size = 0x8, scoped, tag = 'scoped memory for tpu_custom_call.1']
    #allocation4 [shape = 's32[2]{0}', space=sflag, size = 0x8, scoped, tag = 'scoped memory for tpu_custom_call.1']
    #allocation5 [shape = 'u8[65536]{0}', space=vmem, size = 0x10000, scoped, tag = 'output window, operand 0']
    %14 = vsyncpa [#allocation3], 0
    %s15 = scalar_lea.sflag [#allocation3], 1
    %16 = vsyncpa %s15, 0
    %17 = vsyncpa [#allocation4], 0
    %s18 = scalar_lea.sflag [#allocation4], 1
    %19 = vsyncpa %s18, 0
    loop: start=0, step=1, limit=8
    $region2: #{tpu_custom_call.1} parent=1 // loop_pre_header
      _
    $region3: #{tpu_custom_call.1} parent=1 // loop_header
      %s21 = sphi 0, %s25
      %p22 = scmp.ge.s32.totalorder %s21, 8
      %s28 = sphi 0, %s40
      %s29 = sphi 0, %s36
      %s30 = sphi 0, %s28
      %s31 = sphi 0, %s29
      %s32 = sphi 0, %s30
      %s33 = sphi 0, %s31
      %s45 = sphi 0, %s47
      %s48 = sphi 0, %s45
      %s49 = sphi 0, %s48
      %s65 = sphi 0, %s49
      %s69 = sphi 0, %s69
      %s71 = sphi 0, %s69
      %s72 = sphi 0, %s71
      %s86 = sphi 0, %s72
      %s90 = sphi 0, %s90
      %s92 = sphi 0, %s90
      %s93 = sphi 0, %s92
      %s107 = sphi 0, %s93
      %s111 = sphi 0, %s111
      %s113 = sphi 0, %s111
      %s114 = sphi 0, %s113
      %s128 = sphi 0, %s114
      %s132 = sphi 0, %s132
      %s134 = sphi 0, %s132
      %s135 = sphi 0, %s134
      %s149 = sphi 0, %s135
      %s153 = sphi 0, %s153
      %s155 = sphi 0, %s153
      %s156 = sphi 0, %s155
      %s170 = sphi 0, %s156
      %s174 = sphi 0, %s174
      %s176 = sphi 0, %s174
      %s177 = sphi 0, %s176
      %s191 = sphi 0, %s177
      %s195 = sphi 0, %s195
      %s197 = sphi 0, %s195
      %s198 = sphi 0, %s197
      %s212 = sphi 0, %s198
      %s216 = sphi 0, %s216
      %s218 = sphi 0, %s216
      %s219 = sphi 0, %s218
      %s233 = sphi 0, %s219
      %s241 = sphi 0, %s243
      %s244 = sphi 0, %s241
      %s245 = sphi 0, %s244
      %s261 = sphi 0, %s245
    $region4: #{tpu_custom_call.1} parent=1 // loop_header_branch
      %24 = sbr.rel (%p22) target = $region8
    $region5: #{tpu_custom_call.1} parent=1 // loop_body
      %s26 = ssub.s32 %s21, 1
      %s27 = ssub.s32 %s21, 2
      %s34 = sadd.s32 1, %s29
      %p35 = scmp.ge.s32.totalorder %s34, 3
      %s36 = scalar_select %p35, 0, %s34
      %s37 = sadd.s32 1, %s28
      %s38 = scalar_select %p35, %s37, %s28
      %p39 = scmp.ge.s32.totalorder %s38, 2
      %s40 = scalar_select %p39, 0, %s38
      %s41 = ssub.s32 %s28, %s40
      %s42 = ssub.s32 %s29, %s36
      %s43 = sor.u32 %s41, %s42
      %p44 = scmp.eq.s32.totalorder %s43, 0
      %s46 = sadd.s32 %s45, 1
      %s47 = scalar_select %p44, %s45, %s46
      %p50 = pneg %p44
      %p51 = scmp.eq.s32.totalorder %s21, 5
      %p52 = por %p50, %p51
      %p53 = scmp.ne.s32.totalorder %s45, %s48
      %p54 = scmp.eq.s32.totalorder %s21, 0
      %p55 = por %p53, %p54
      %p56 = scmp.ne.s32.totalorder %s45, %s48
      %p57 = scmp.eq.s32.totalorder %s26, 5
      %p58 = por %p56, %p57
      %p59 = scmp.ne.s32.totalorder %s48, %s49
      %p60 = scmp.eq.s32.totalorder %s26, 0
      %p61 = por %p59, %p60
      %p62 = scmp.ne.s32.totalorder %s48, %s49
      %p63 = scmp.eq.s32.totalorder %s27, 5
      %p64 = por %p62, %p63
      %p66 = scmp.ne.s32.totalorder %s49, %s65
      %p67 = scmp.eq.s32.totalorder %s27, 0
      %p68 = por %p66, %p67
      %s70 = sadd.s32 %s69, 1
      %p73 = scmp.eq.s32.totalorder %s21, 5
      %p74 = scmp.ne.s32.totalorder %s69, %s71
      %p75 = scmp.eq.s32.totalorder %s21, 0
      %p76 = por %p74, %p75
      %p77 = scmp.ne.s32.totalorder %s69, %s71
      %p78 = scmp.eq.s32.totalorder %s26, 5
      %p79 = por %p77, %p78
      %p80 = scmp.ne.s32.totalorder %s71, %s72
      %p81 = scmp.eq.s32.totalorder %s26, 0
      %p82 = por %p80, %p81
      %p83 = scmp.ne.s32.totalorder %s71, %s72
      %p84 = scmp.eq.s32.totalorder %s27, 5
      %p85 = por %p83, %p84
      %p87 = scmp.ne.s32.totalorder %s72, %s86
      %p88 = scmp.eq.s32.totalorder %s27, 0
      %p89 = por %p87, %p88
      %s91 = sadd.s32 %s90, 1
      %p94 = scmp.eq.s32.totalorder %s21, 5
      %p95 = scmp.ne.s32.totalorder %s90, %s92
      %p96 = scmp.eq.s32.totalorder %s21, 0
      %p97 = por %p95, %p96
      %p98 = scmp.ne.s32.totalorder %s90, %s92
      %p99 = scmp.eq.s32.totalorder %s26, 5
      %p100 = por %p98, %p99
      %p101 = scmp.ne.s32.totalorder %s92, %s93
      %p102 = scmp.eq.s32.totalorder %s26, 0
      %p103 = por %p101, %p102
      %p104 = scmp.ne.s32.totalorder %s92, %s93
      %p105 = scmp.eq.s32.totalorder %s27, 5
      %p106 = por %p104, %p105
      %p108 = scmp.ne.s32.totalorder %s93, %s107
      %p109 = scmp.eq.s32.totalorder %s27, 0
      %p110 = por %p108, %p109
      %s112 = sadd.s32 %s111, 1
      %p115 = scmp.eq.s32.totalorder %s21, 5
      %p116 = scmp.ne.s32.totalorder %s111, %s113
      %p117 = scmp.eq.s32.totalorder %s21, 0
      %p118 = por %p116, %p117
      %p119 = scmp.ne.s32.totalorder %s111, %s113
      %p120 = scmp.eq.s32.totalorder %s26, 5
      %p121 = por %p119, %p120
      %p122 = scmp.ne.s32.totalorder %s113, %s114
      %p123 = scmp.eq.s32.totalorder %s26, 0
      %p124 = por %p122, %p123
      %p125 = scmp.ne.s32.totalorder %s113, %s114
      %p126 = scmp.eq.s32.totalorder %s27, 5
      %p127 = por %p125, %p126
      %p129 = scmp.ne.s32.totalorder %s114, %s128
      %p130 = scmp.eq.s32.totalorder %s27, 0
      %p131 = por %p129, %p130
      %s133 = sadd.s32 %s132, 1
      %p136 = scmp.eq.s32.totalorder %s21, 5
      %p137 = scmp.ne.s32.totalorder %s132, %s134
      %p138 = scmp.eq.s32.totalorder %s21, 0
      %p139 = por %p137, %p138
      %p140 = scmp.ne.s32.totalorder %s132, %s134
      %p141 = scmp.eq.s32.totalorder %s26, 5
      %p142 = por %p140, %p141
      %p143 = scmp.ne.s32.totalorder %s134, %s135
      %p144 = scmp.eq.s32.totalorder %s26, 0
      %p145 = por %p143, %p144
      %p146 = scmp.ne.s32.totalorder %s134, %s135
      %p147 = scmp.eq.s32.totalorder %s27, 5
      %p148 = por %p146, %p147
      %p150 = scmp.ne.s32.totalorder %s135, %s149
      %p151 = scmp.eq.s32.totalorder %s27, 0
      %p152 = por %p150, %p151
      %s154 = sadd.s32 %s153, 1
      %p157 = scmp.eq.s32.totalorder %s21, 5
      %p158 = scmp.ne.s32.totalorder %s153, %s155
      %p159 = scmp.eq.s32.totalorder %s21, 0
      %p160 = por %p158, %p159
      %p161 = scmp.ne.s32.totalorder %s153, %s155
      %p162 = scmp.eq.s32.totalorder %s26, 5
      %p163 = por %p161, %p162
      %p164 = scmp.ne.s32.totalorder %s155, %s156
      %p165 = scmp.eq.s32.totalorder %s26, 0
      %p166 = por %p164, %p165
      %p167 = scmp.ne.s32.totalorder %s155, %s156
      %p168 = scmp.eq.s32.totalorder %s27, 5
      %p169 = por %p167, %p168
      %p171 = scmp.ne.s32.totalorder %s156, %s170
      %p172 = scmp.eq.s32.totalorder %s27, 0
      %p173 = por %p171, %p172
      %s175 = sadd.s32 %s174, 1
      %p178 = scmp.eq.s32.totalorder %s21, 5
      %p179 = scmp.ne.s32.totalorder %s174, %s176
      %p180 = scmp.eq.s32.totalorder %s21, 0
      %p181 = por %p179, %p180
      %p182 = scmp.ne.s32.totalorder %s174, %s176
      %p183 = scmp.eq.s32.totalorder %s26, 5
      %p184 = por %p182, %p183
      %p185 = scmp.ne.s32.totalorder %s176, %s177
      %p186 = scmp.eq.s32.totalorder %s26, 0
      %p187 = por %p185, %p186
      %p188 = scmp.ne.s32.totalorder %s176, %s177
      %p189 = scmp.eq.s32.totalorder %s27, 5
      %p190 = por %p188, %p189
      %p192 = scmp.ne.s32.totalorder %s177, %s191
      %p193 = scmp.eq.s32.totalorder %s27, 0
      %p194 = por %p192, %p193
      %s196 = sadd.s32 %s195, 1
      %p199 = scmp.eq.s32.totalorder %s21, 5
      %p200 = scmp.ne.s32.totalorder %s195, %s197
      %p201 = scmp.eq.s32.totalorder %s21, 0
      %p202 = por %p200, %p201
      %p203 = scmp.ne.s32.totalorder %s195, %s197
      %p204 = scmp.eq.s32.totalorder %s26, 5
      %p205 = por %p203, %p204
      %p206 = scmp.ne.s32.totalorder %s197, %s198
      %p207 = scmp.eq.s32.totalorder %s26, 0
      %p208 = por %p206, %p207
      %p209 = scmp.ne.s32.totalorder %s197, %s198
      %p210 = scmp.eq.s32.totalorder %s27, 5
      %p211 = por %p209, %p210
      %p213 = scmp.ne.s32.totalorder %s198, %s212
      %p214 = scmp.eq.s32.totalorder %s27, 0
      %p215 = por %p213, %p214
      %s217 = sadd.s32 %s216, 1
      %p220 = scmp.eq.s32.totalorder %s21, 5
      %p221 = scmp.ne.s32.totalorder %s216, %s218
      %p222 = scmp.eq.s32.totalorder %s21, 0
      %p223 = por %p221, %p222
      %p224 = scmp.ne.s32.totalorder %s216, %s218
      %p225 = scmp.eq.s32.totalorder %s26, 5
      %p226 = por %p224, %p225
      %p227 = scmp.ne.s32.totalorder %s218, %s219
      %p228 = scmp.eq.s32.totalorder %s26, 0
      %p229 = por %p227, %p228
      %p230 = scmp.ne.s32.totalorder %s218, %s219
      %p231 = scmp.eq.s32.totalorder %s27, 5
      %p232 = por %p230, %p231
      %p234 = scmp.ne.s32.totalorder %s219, %s233
      %p235 = scmp.eq.s32.totalorder %s27, 0
      %p236 = por %p234, %p235
      %s237 = ssub.s32 %s28, %s40
      %s238 = ssub.s32 %s29, %s36
      %s239 = sor.u32 %s237, %s238
      %p240 = scmp.eq.s32.totalorder %s239, 0
      %s242 = sadd.s32 %s241, 1
      %s243 = scalar_select %p240, %s241, %s242
      %p246 = pneg %p240
      %p247 = scmp.eq.s32.totalorder %s21, 5
      %p248 = por %p246, %p247
      %p249 = scmp.ne.s32.totalorder %s241, %s244
      %p250 = scmp.eq.s32.totalorder %s21, 0
      %p251 = por %p249, %p250
      %p252 = scmp.ne.s32.totalorder %s241, %s244
      %p253 = scmp.eq.s32.totalorder %s26, 5
      %p254 = por %p252, %p253
      %p255 = scmp.ne.s32.totalorder %s244, %s245
      %p256 = scmp.eq.s32.totalorder %s26, 0
      %p257 = por %p255, %p256
      %p258 = scmp.ne.s32.totalorder %s244, %s245
      %p259 = scmp.eq.s32.totalorder %s27, 5
      %p260 = por %p258, %p259
      %p262 = scmp.ne.s32.totalorder %s245, %s261
      %p263 = scmp.eq.s32.totalorder %s27, 0
      %p264 = por %p262, %p263
      %p265 = scmp.le.s32.totalorder 1, %s21
      %p266 = scmp.lt.s32.totalorder %s21, 7
      %p267 = pnand %p265, %p266
      %p268 = pneg %p267
      // Predicated region
      $region9: #{tpu_custom_call.1} parent=5 // pred_check
        _
      $region10: #{tpu_custom_call.1} parent=5 // pred_check_branch
        %270 = sbr.rel (%p267) target = $region12
      $region11: #{tpu_custom_call.1} parent=5 // pred_region
        %s271 = ssub.s32 %s21, 1
        // Predicated region
        $region13: #{tpu_custom_call.1} parent=11 // pred_check
          %p272 = pneg %p82
        $region14: #{tpu_custom_call.1} parent=11 // pred_check_branch
          %274 = sbr.rel (%p272) target = $region16
        $region15: #{tpu_custom_call.1} parent=11 // pred_region
          _
        $region16: #{tpu_custom_call.1} parent=11 // pred_fallthru
          _
        // Predicated region
        $region17: #{tpu_custom_call.1} parent=11 // pred_check
          %p275 = pneg %p103
        $region18: #{tpu_custom_call.1} parent=11 // pred_check_branch
          %277 = sbr.rel (%p275) target = $region20
        $region19: #{tpu_custom_call.1} parent=11 // pred_region
          _
        $region20: #{tpu_custom_call.1} parent=11 // pred_fallthru
          _
        // Predicated region
        $region21: #{tpu_custom_call.1} parent=11 // pred_check
          %p278 = pneg %p124
        $region22: #{tpu_custom_call.1} parent=11 // pred_check_branch
          %280 = sbr.rel (%p278) target = $region24
        $region23: #{tpu_custom_call.1} parent=11 // pred_region
          _
        $region24: #{tpu_custom_call.1} parent=11 // pred_fallthru
          _
        // Predicated region
        $region25: #{tpu_custom_call.1} parent=11 // pred_check
          %p281 = pneg %p145
        $region26: #{tpu_custom_call.1} parent=11 // pred_check_branch
          %283 = sbr.rel (%p281) target = $region28
        $region27: #{tpu_custom_call.1} parent=11 // pred_region
          _
        $region28: #{tpu_custom_call.1} parent=11 // pred_fallthru
          _
        // Predicated region
        $region29: #{tpu_custom_call.1} parent=11 // pred_check
          %p284 = pneg %p166
        $region30: #{tpu_custom_call.1} parent=11 // pred_check_branch
          %286 = sbr.rel (%p284) target = $region32
        $region31: #{tpu_custom_call.1} parent=11 // pred_region
          _
        $region32: #{tpu_custom_call.1} parent=11 // pred_fallthru
          _
        // Predicated region
        $region33: #{tpu_custom_call.1} parent=11 // pred_check
          %p287 = pneg %p187
        $region34: #{tpu_custom_call.1} parent=11 // pred_check_branch
          %289 = sbr.rel (%p287) target = $region36
        $region35: #{tpu_custom_call.1} parent=11 // pred_region
          _
        $region36: #{tpu_custom_call.1} parent=11 // pred_fallthru
          _
        // Predicated region
        $region37: #{tpu_custom_call.1} parent=11 // pred_check
          %p290 = pneg %p208
        $region38: #{tpu_custom_call.1} parent=11 // pred_check_branch
          %292 = sbr.rel (%p290) target = $region40
        $region39: #{tpu_custom_call.1} parent=11 // pred_region
          _
        $region40: #{tpu_custom_call.1} parent=11 // pred_fallthru
          _
        // Predicated region
        $region41: #{tpu_custom_call.1} parent=11 // pred_check
          %p293 = pneg %p229
        $region42: #{tpu_custom_call.1} parent=11 // pred_check_branch
          %295 = sbr.rel (%p293) target = $region44
        $region43: #{tpu_custom_call.1} parent=11 // pred_region
          _
        $region44: #{tpu_custom_call.1} parent=11 // pred_fallthru
          _
      $region12: #{tpu_custom_call.1} parent=5 // pred_fallthru
        _
      %p296 = scmp.lt.s32.totalorder %s21, 6
      // Predicated region
      $region45: #{tpu_custom_call.1} parent=5 // pred_check
        %p297 = pneg %p296
      $region46: #{tpu_custom_call.1} parent=5 // pred_check_branch
        %299 = sbr.rel (%p297) target = $region48
      $region47: #{tpu_custom_call.1} parent=5 // pred_region
        // Predicated region
        $region49: #{tpu_custom_call.1} parent=47 // pred_check
          %p300 = pneg %p55
        $region50: #{tpu_custom_call.1} parent=47 // pred_check_branch
          %302 = sbr.rel (%p300) target = $region52
        $region51: #{tpu_custom_call.1} parent=47 // pred_region
          %s303 = sand.u32 %s45, 1
          %s304 = scalar_lea.sflag [#allocation3], %s303
          %s305 = sand.u32 %s45, 1
          %s306 = smul.addr %s305, 64
          %s307 = scalar_lea.vmem [#allocation2], %s306
          %s308 = smul.u32 2, %s29
          %s310 = ssub.s32 1024, 1024
          %311 = vsyncadd %s304, %s310
          %s312 = smul.addr %s28, 24
          %s313 = sadd.s32 %s308, %s312
          %s314 = smul.addr %s313, 128
          %s315 = scalar_lea.hbm %s0, %s314
          %s316 = sshll.u32 %s307, 4
          %s317 = int_to_ptr.vmem [resolvable:$true] %s316
          %322 = dma.hbm_to_vmem [thread:$0]  %s315, 1024, %s317, %s304, 768, 256, 16
        $region52: #{tpu_custom_call.1} parent=47 // pred_fallthru
          _
      $region48: #{tpu_custom_call.1} parent=5 // pred_fallthru
        _
      %p323 = scmp.le.s32.totalorder 1, %s21
      %p324 = scmp.lt.s32.totalorder %s21, 7
      %p325 = pnand %p323, %p324
      %p326 = pneg %p325
      // Predicated region
      $region53: #{tpu_custom_call.1} parent=5 // pred_check
        _
      $region54: #{tpu_custom_call.1} parent=5 // pred_check_branch
        %328 = sbr.rel (%p325) target = $region56
      $region55: #{tpu_custom_call.1} parent=5 // pred_region
        %s329 = ssub.s32 %s21, 1
        %s330 = sand.u32 %s48, 1
        %s331 = scalar_lea.sflag [#allocation3], %s330
        %s332 = sand.u32 %s48, 1
        %s333 = smul.addr %s332, 64
        %s334 = scalar_lea.vmem [#allocation2], %s333
        // Predicated region
        $region57: #{tpu_custom_call.1} parent=55 // pred_check
          %p335 = pneg %p61
        $region58: #{tpu_custom_call.1} parent=55 // pred_check_branch
          %337 = sbr.rel (%p335) target = $region60
        $region59: #{tpu_custom_call.1} parent=55 // pred_region
          %338 = dma.done %s331, 1024
        $region60: #{tpu_custom_call.1} parent=55 // pred_fallthru
          _
        %s339 = sand.u32 %s48, 1
        %s340 = scalar_lea.sflag [#allocation3], %s339
        %s341 = sand.u32 %s48, 1
        %s342 = smul.addr %s341, 64
        %s343 = scalar_lea.vmem [#allocation2], %s342
        %p344 = pneg %p61
        %p345 = pneg %p58
        %p346 = pneg %p82
        %p347 = pneg %p79
        %p348 = pneg %p103
        %p349 = pneg %p100
        %p350 = pneg %p124
        %p351 = pneg %p121
        %p352 = pneg %p145
        %p353 = pneg %p142
        %p354 = pneg %p166
        %p355 = pneg %p163
        %p356 = pneg %p187
        %p357 = pneg %p184
        %p358 = pneg %p208
        %p359 = pneg %p205
        %p360 = pneg %p229
        %p361 = pneg %p226
        %p362 = pneg %p257
        %p363 = pneg %p254
        %s364 = sand.u32 %s244, 1
        %s365 = scalar_lea.sflag [#allocation4], %s364
        %s366 = sand.u32 %s244, 1
        %s367 = smul.addr %s366, 64
        %s368 = scalar_lea.vmem [#allocation5], %s367
        %s369 = smul.u32 2, %s31
        %s370 = smul.u32 2, %s31
        %v371 = vld [vmem:[%s334] sm:$0xff]
        %v372 = vld [vmem:[%s334 + $0x8] sm:$0xff]
        %v373 = vld [vmem:[%s334 + $0x10] sm:$0xff]
        %v374 = vld [vmem:[%s334 + $0x18] sm:$0xff]
        %v375 = vld [vmem:[%s334 + $0x20] sm:$0xff]
        %v376 = vld [vmem:[%s334 + $0x28] sm:$0xff]
        %v377 = vld [vmem:[%s334 + $0x30] sm:$0xff]
        %v378 = vld [vmem:[%s334 + $0x38] sm:$0xff]
        %v379 = vld [vmem:[%s1] sm:$0xff]
        %381 = vset.pattern.permute.xlu0 0
        %382 = vperm.xlu0 %381, %v379
        %v383 = vpop.permute.xlu0 %382
        %v385 = vmul.f32 %v383, %v371
        %v386 = vmul.f32 %v383, %v372
        %s387 = scalar_lea.vmem %s1, 64
        %v388 = vld [vmem:[%s387] sm:$0xff]
        %390 = vset.pattern.permute.xlu0 0
        %391 = vperm.xlu0 %390, %v388
        %v392 = vpop.permute.xlu0 %391
        %v394 = vmul.f32 %v392, %v373
        %v395 = vmul.f32 %v392, %v374
        %v396 = vadd.f32 %v385, %v394
        %v397 = vadd.f32 %v386, %v395
        %s398 = scalar_lea.vmem %s1, 128
        %v399 = vld [vmem:[%s398] sm:$0xff]
        %401 = vset.pattern.permute.xlu0 0
        %402 = vperm.xlu0 %401, %v399
        %v403 = vpop.permute.xlu0 %402
        %v405 = vmul.f32 %v403, %v375
        %v406 = vmul.f32 %v403, %v376
        %v407 = vadd.f32 %v396, %v405
        %v408 = vadd.f32 %v397, %v406
        %s409 = scalar_lea.vmem %s1, 192
        %v410 = vld [vmem:[%s409] sm:$0xff]
        %412 = vset.pattern.permute.xlu0 0
        %413 = vperm.xlu0 %412, %v410
        %v414 = vpop.permute.xlu0 %413
        %v416 = vmul.f32 %v414, %v377
        %v417 = vmul.f32 %v414, %v378
        %v418 = vadd.f32 %v407, %v416
        %v419 = vadd.f32 %v408, %v417
        %v420 = vld [vmem:[%s2] sm:$0xff]
        %422 = vset.pattern.permute.xlu0 0
        %423 = vperm.xlu0 %422, %v420
        %v424 = vpop.permute.xlu0 %423
        %v426 = vadd.f32 %v418, %v424
        %v427 = vadd.f32 %v419, %v424
        %v428 = vmul.f32 %v426, 0.5
        %v429 = vmul.f32 %v427, 0.5
        %v430 = vmul.f32 %v426, 0.70710677
        %v431 = vmul.f32 %v427, 0.70710677
        %vm432 = vcmp.ge.f32.partialorder %v430, 0.0
        %vm433 = vcmp.ge.f32.partialorder %v431, 0.0
        %v434 = vsel %vm432, 1.0, -1.0
        %v435 = vsel %vm433, 1.0, -1.0
        %v436 = vand.u32 2147483647, %v430
        %v437 = vand.u32 2147483647, %v431
        %v438 = vmul.f32 %v436, 0.3275911
        %v439 = vmul.f32 %v437, 0.3275911
        %v440 = vadd.f32 %v438, 1.0
        %v441 = vadd.f32 %v439, 1.0
        %v442 = vrcp.pop %v440
        %v443 = vrcp.pop %v441
        %v444 = vmul.f32 %v440, %v442
        %v445 = vmul.f32 %v441, %v443
        %v446 = vsub.f32 2.0, %v444
        %v447 = vsub.f32 2.0, %v445
        %v448 = vmul.f32 %v442, %v446
        %v449 = vmul.f32 %v443, %v447
        %v450 = vmul.f32 %v448, 1.0614054
        %v451 = vmul.f32 %v449, 1.0614054
        %v452 = vadd.f32 %v450, -1.4531521
        %v453 = vadd.f32 %v451, -1.4531521
        %v454 = vmul.f32 %v452, %v448
        %v455 = vmul.f32 %v453, %v449
        %v456 = vadd.f32 %v454, 1.4214138
        %v457 = vadd.f32 %v455, 1.4214138
        %v458 = vmul.f32 %v456, %v448
        %v459 = vmul.f32 %v457, %v449
        %v460 = vadd.f32 %v458, -0.28449672
        %v461 = vadd.f32 %v459, -0.28449672
        %v462 = vmul.f32 %v460, %v448
        %v463 = vmul.f32 %v461, %v449
        %v464 = vadd.f32 %v462, 0.2548296
        %v465 = vadd.f32 %v463, 0.2548296
        %v466 = vmul.f32 %v464, %v448
        %v467 = vmul.f32 %v465, %v449
        %v468 = vsub.f32 0.0, %v436
        %v469 = vsub.f32 0.0, %v437
        %v470 = vmul.f32 %v468, %v436
        %v471 = vmul.f32 %v469, %v437
        %v472 = vmul.f32 %v470, 1.442695
        %v473 = vpow.pop %v472
        %v474 = vmul.f32 %v471, 1.442695
        %v475 = vpow.pop %v474
        %v476 = vmul.f32 %v466, %v473
        %v477 = vmul.f32 %v467, %v475
        %v478 = vsub.f32 1.0, %v476
        %v479 = vsub.f32 1.0, %v477
        %v480 = vmul.f32 %v434, %v478
        %v481 = vmul.f32 %v435, %v479
        %v482 = vadd.f32 %v480, 1.0
        %v483 = vadd.f32 %v481, 1.0
        %v484 = vmul.f32 %v428, %v482
        %v485 = vmul.f32 %v429, %v483
        %v486 = vld [vmem:[%s3] sm:$0xff]
        %v487 = vld [vmem:[%s3 + $0x8] sm:$0xff]
        %v488 = vld [vmem:[%s3 + $0x10] sm:$0xff]
        %v489 = vld [vmem:[%s3 + $0x18] sm:$0xff]
        %491 = vset.pattern.permute.xlu0 0
        %492 = vperm.xlu0 %491, %v486
        %v493 = vpop.permute.xlu0 %492
        %496 = vset.pattern.permute.xlu0 0
        %497 = vperm.xlu0 %496, %v487
        %v498 = vpop.permute.xlu0 %497
        %501 = vset.pattern.permute.xlu0 0
        %502 = vperm.xlu0 %501, %v488
        %v503 = vpop.permute.xlu0 %502
        %506 = vset.pattern.permute.xlu0 0
        %507 = vperm.xlu0 %506, %v489
        %v508 = vpop.permute.xlu0 %507
        %v510 = vmul.f32 %v493, %v484
        %v511 = vmul.f32 %v493, %v485
        %v512 = vmul.f32 %v498, %v484
        %v513 = vmul.f32 %v498, %v485
        %v514 = vmul.f32 %v503, %v484
        %v515 = vmul.f32 %v503, %v485
        %v516 = vmul.f32 %v508, %v484
        %v517 = vmul.f32 %v508, %v485
        %s518 = scalar_lea.vmem %s1, 8
        %v519 = vld [vmem:[%s518] sm:$0xff]
        %521 = vset.pattern.permute.xlu0 0
        %522 = vperm.xlu0 %521, %v519
        %v523 = vpop.permute.xlu0 %522
        %v525 = vmul.f32 %v523, %v371
        %v526 = vmul.f32 %v523, %v372
        %s527 = scalar_lea.vmem %s1, 72
        %v528 = vld [vmem:[%s527] sm:$0xff]
        %530 = vset.pattern.permute.xlu0 0
        %531 = vperm.xlu0 %530, %v528
        %v532 = vpop.permute.xlu0 %531
        %v534 = vmul.f32 %v532, %v373
        %v535 = vmul.f32 %v532, %v374
        %v536 = vadd.f32 %v525, %v534
        %v537 = vadd.f32 %v526, %v535
        %s538 = scalar_lea.vmem %s1, 136
        %v539 = vld [vmem:[%s538] sm:$0xff]
        %541 = vset.pattern.permute.xlu0 0
        %542 = vperm.xlu0 %541, %v539
        %v543 = vpop.permute.xlu0 %542
        %v545 = vmul.f32 %v543, %v375
        %v546 = vmul.f32 %v543, %v376
        %v547 = vadd.f32 %v536, %v545
        %v548 = vadd.f32 %v537, %v546
        %s549 = scalar_lea.vmem %s1, 200
        %v550 = vld [vmem:[%s549] sm:$0xff]
        %552 = vset.pattern.permute.xlu0 0
        %553 = vperm.xlu0 %552, %v550
        %v554 = vpop.permute.xlu0 %553
        %v556 = vmul.f32 %v554, %v377
        %v557 = vmul.f32 %v554, %v378
        %v558 = vadd.f32 %v547, %v556
        %v559 = vadd.f32 %v548, %v557
        %s560 = scalar_lea.vmem %s2, 8
        %v561 = vld [vmem:[%s560] sm:$0xff]
        %563 = vset.pattern.permute.xlu0 0
        %564 = vperm.xlu0 %563, %v561
        %v565 = vpop.permute.xlu0 %564
        %v567 = vadd.f32 %v558, %v565
        %v568 = vadd.f32 %v559, %v565
        %v569 = vmul.f32 %v567, 0.5
        %v570 = vmul.f32 %v568, 0.5
        %v571 = vmul.f32 %v567, 0.70710677
        %v572 = vmul.f32 %v568, 0.70710677
        %vm573 = vcmp.ge.f32.partialorder %v571, 0.0
        %vm574 = vcmp.ge.f32.partialorder %v572, 0.0
        %v575 = vsel %vm573, 1.0, -1.0
        %v576 = vsel %vm574, 1.0, -1.0
        %v577 = vand.u32 2147483647, %v571
        %v578 = vand.u32 2147483647, %v572
        %v579 = vmul.f32 %v577, 0.3275911
        %v580 = vmul.f32 %v578, 0.3275911
        %v581 = vadd.f32 %v579, 1.0
        %v582 = vadd.f32 %v580, 1.0
        %v583 = vrcp.pop %v581
        %v584 = vrcp.pop %v582
        %v585 = vmul.f32 %v581, %v583
        %v586 = vmul.f32 %v582, %v584
        %v587 = vsub.f32 2.0, %v585
        %v588 = vsub.f32 2.0, %v586
        %v589 = vmul.f32 %v583, %v587
        %v590 = vmul.f32 %v584, %v588
        %v591 = vmul.f32 %v589, 1.0614054
        %v592 = vmul.f32 %v590, 1.0614054
        %v593 = vadd.f32 %v591, -1.4531521
        %v594 = vadd.f32 %v592, -1.4531521
        %v595 = vmul.f32 %v593, %v589
        %v596 = vmul.f32 %v594, %v590
        %v597 = vadd.f32 %v595, 1.4214138
        %v598 = vadd.f32 %v596, 1.4214138
        %v599 = vmul.f32 %v597, %v589
        %v600 = vmul.f32 %v598, %v590
        %v601 = vadd.f32 %v599, -0.28449672
        %v602 = vadd.f32 %v600, -0.28449672
        %v603 = vmul.f32 %v601, %v589
        %v604 = vmul.f32 %v602, %v590
        %v605 = vadd.f32 %v603, 0.2548296
        %v606 = vadd.f32 %v604, 0.2548296
        %v607 = vmul.f32 %v605, %v589
        %v608 = vmul.f32 %v606, %v590
        %v609 = vsub.f32 0.0, %v577
        %v610 = vsub.f32 0.0, %v578
        %v611 = vmul.f32 %v609, %v577
        %v612 = vmul.f32 %v610, %v578
        %v613 = vmul.f32 %v611, 1.442695
        %v614 = vpow.pop %v613
        %v615 = vmul.f32 %v612, 1.442695
        %v616 = vpow.pop %v615
        %v617 = vmul.f32 %v607, %v614
        %v618 = vmul.f32 %v608, %v616
        %v619 = vsub.f32 1.0, %v617
        %v620 = vsub.f32 1.0, %v618
        %v621 = vmul.f32 %v575, %v619
        %v622 = vmul.f32 %v576, %v620
        %v623 = vadd.f32 %v621, 1.0
        %v624 = vadd.f32 %v622, 1.0
        %v625 = vmul.f32 %v569, %v623
        %v626 = vmul.f32 %v570, %v624
        %s627 = scalar_lea.vmem %s3, 32
        %v628 = vld [vmem:[%s627] sm:$0xff]
        %v629 = vld [vmem:[%s627 + $0x8] sm:$0xff]
        %v630 = vld [vmem:[%s627 + $0x10] sm:$0xff]
        %v631 = vld [vmem:[%s627 + $0x18] sm:$0xff]
        %633 = vset.pattern.permute.xlu0 0
        %634 = vperm.xlu0 %633, %v628
        %v635 = vpop.permute.xlu0 %634
        %638 = vset.pattern.permute.xlu0 0
        %639 = vperm.xlu0 %638, %v629
        %v640 = vpop.permute.xlu0 %639
        %643 = vset.pattern.permute.xlu0 0
        %644 = vperm.xlu0 %643, %v630
        %v645 = vpop.permute.xlu0 %644
        %648 = vset.pattern.permute.xlu0 0
        %649 = vperm.xlu0 %648, %v631
        %v650 = vpop.permute.xlu0 %649
        %v652 = vmul.f32 %v635, %v625
        %v653 = vmul.f32 %v635, %v626
        %v654 = vmul.f32 %v640, %v625
        %v655 = vmul.f32 %v640, %v626
        %v656 = vmul.f32 %v645, %v625
        %v657 = vmul.f32 %v645, %v626
        %v658 = vmul.f32 %v650, %v625
        %v659 = vmul.f32 %v650, %v626
        %v660 = vadd.f32 %v510, %v652
        %v661 = vadd.f32 %v511, %v653
        %v662 = vadd.f32 %v512, %v654
        %v663 = vadd.f32 %v513, %v655
        %v664 = vadd.f32 %v514, %v656
        %v665 = vadd.f32 %v515, %v657
        %v666 = vadd.f32 %v516, %v658
        %v667 = vadd.f32 %v517, %v659
        %s668 = scalar_lea.vmem %s1, 16
        %v669 = vld [vmem:[%s668] sm:$0xff]
        %671 = vset.pattern.permute.xlu0 0
        %672 = vperm.xlu0 %671, %v669
        %v673 = vpop.permute.xlu0 %672
        %v675 = vmul.f32 %v673, %v371
        %v676 = vmul.f32 %v673, %v372
        %s677 = scalar_lea.vmem %s1, 80
        %v678 = vld [vmem:[%s677] sm:$0xff]
        %680 = vset.pattern.permute.xlu0 0
        %681 = vperm.xlu0 %680, %v678
        %v682 = vpop.permute.xlu0 %681
        %v684 = vmul.f32 %v682, %v373
        %v685 = vmul.f32 %v682, %v374
        %v686 = vadd.f32 %v675, %v684
        %v687 = vadd.f32 %v676, %v685
        %s688 = scalar_lea.vmem %s1, 144
        %v689 = vld [vmem:[%s688] sm:$0xff]
        %691 = vset.pattern.permute.xlu0 0
        %692 = vperm.xlu0 %691, %v689
        %v693 = vpop.permute.xlu0 %692
        %v695 = vmul.f32 %v693, %v375
        %v696 = vmul.f32 %v693, %v376
        %v697 = vadd.f32 %v686, %v695
        %v698 = vadd.f32 %v687, %v696
        %s699 = scalar_lea.vmem %s1, 208
        %v700 = vld [vmem:[%s699] sm:$0xff]
        %702 = vset.pattern.permute.xlu0 0
        %703 = vperm.xlu0 %702, %v700
        %v704 = vpop.permute.xlu0 %703
        %v706 = vmul.f32 %v704, %v377
        %v707 = vmul.f32 %v704, %v378
        %v708 = vadd.f32 %v697, %v706
        %v709 = vadd.f32 %v698, %v707
        %s710 = scalar_lea.vmem %s2, 16
        %v711 = vld [vmem:[%s710] sm:$0xff]
        %713 = vset.pattern.permute.xlu0 0
        %714 = vperm.xlu0 %713, %v711
        %v715 = vpop.permute.xlu0 %714
        %v717 = vadd.f32 %v708, %v715
        %v718 = vadd.f32 %v709, %v715
        %v719 = vmul.f32 %v717, 0.5
        %v720 = vmul.f32 %v718, 0.5
        %v721 = vmul.f32 %v717, 0.70710677
        %v722 = vmul.f32 %v718, 0.70710677
        %vm723 = vcmp.ge.f32.partialorder %v721, 0.0
        %vm724 = vcmp.ge.f32.partialorder %v722, 0.0
        %v725 = vsel %vm723, 1.0, -1.0
        %v726 = vsel %vm724, 1.0, -1.0
        %v727 = vand.u32 2147483647, %v721
        %v728 = vand.u32 2147483647, %v722
        %v729 = vmul.f32 %v727, 0.3275911
        %v730 = vmul.f32 %v728, 0.3275911
        %v731 = vadd.f32 %v729, 1.0
        %v732 = vadd.f32 %v730, 1.0
        %v733 = vrcp.pop %v731
        %v734 = vrcp.pop %v732
        %v735 = vmul.f32 %v731, %v733
        %v736 = vmul.f32 %v732, %v734
        %v737 = vsub.f32 2.0, %v735
        %v738 = vsub.f32 2.0, %v736
        %v739 = vmul.f32 %v733, %v737
        %v740 = vmul.f32 %v734, %v738
        %v741 = vmul.f32 %v739, 1.0614054
        %v742 = vmul.f32 %v740, 1.0614054
        %v743 = vadd.f32 %v741, -1.4531521
        %v744 = vadd.f32 %v742, -1.4531521
        %v745 = vmul.f32 %v743, %v739
        %v746 = vmul.f32 %v744, %v740
        %v747 = vadd.f32 %v745, 1.4214138
        %v748 = vadd.f32 %v746, 1.4214138
        %v749 = vmul.f32 %v747, %v739
        %v750 = vmul.f32 %v748, %v740
        %v751 = vadd.f32 %v749, -0.28449672
        %v752 = vadd.f32 %v750, -0.28449672
        %v753 = vmul.f32 %v751, %v739
        %v754 = vmul.f32 %v752, %v740
        %v755 = vadd.f32 %v753, 0.2548296
        %v756 = vadd.f32 %v754, 0.2548296
        %v757 = vmul.f32 %v755, %v739
        %v758 = vmul.f32 %v756, %v740
        %v759 = vsub.f32 0.0, %v727
        %v760 = vsub.f32 0.0, %v728
        %v761 = vmul.f32 %v759, %v727
        %v762 = vmul.f32 %v760, %v728
        %v763 = vmul.f32 %v761, 1.442695
        %v764 = vpow.pop %v763
        %v765 = vmul.f32 %v762, 1.442695
        %v766 = vpow.pop %v765
        %v767 = vmul.f32 %v757, %v764
        %v768 = vmul.f32 %v758, %v766
        %v769 = vsub.f32 1.0, %v767
        %v770 = vsub.f32 1.0, %v768
        %v771 = vmul.f32 %v725, %v769
        %v772 = vmul.f32 %v726, %v770
        %v773 = vadd.f32 %v771, 1.0
        %v774 = vadd.f32 %v772, 1.0
        %v775 = vmul.f32 %v719, %v773
        %v776 = vmul.f32 %v720, %v774
        %s777 = scalar_lea.vmem %s3, 64
        %v778 = vld [vmem:[%s777] sm:$0xff]
        %v779 = vld [vmem:[%s777 + $0x8] sm:$0xff]
        %v780 = vld [vmem:[%s777 + $0x10] sm:$0xff]
        %v781 = vld [vmem:[%s777 + $0x18] sm:$0xff]
        %783 = vset.pattern.permute.xlu0 0
        %784 = vperm.xlu0 %783, %v778
        %v785 = vpop.permute.xlu0 %784
        %788 = vset.pattern.permute.xlu0 0
        %789 = vperm.xlu0 %788, %v779
        %v790 = vpop.permute.xlu0 %789
        %793 = vset.pattern.permute.xlu0 0
        %794 = vperm.xlu0 %793, %v780
        %v795 = vpop.permute.xlu0 %794
        %798 = vset.pattern.permute.xlu0 0
        %799 = vperm.xlu0 %798, %v781
        %v800 = vpop.permute.xlu0 %799
        %v802 = vmul.f32 %v785, %v775
        %v803 = vmul.f32 %v785, %v776
        %v804 = vmul.f32 %v790, %v775
        %v805 = vmul.f32 %v790, %v776
        %v806 = vmul.f32 %v795, %v775
        %v807 = vmul.f32 %v795, %v776
        %v808 = vmul.f32 %v800, %v775
        %v809 = vmul.f32 %v800, %v776
        %v810 = vadd.f32 %v660, %v802
        %v811 = vadd.f32 %v661, %v803
        %v812 = vadd.f32 %v662, %v804
        %v813 = vadd.f32 %v663, %v805
        %v814 = vadd.f32 %v664, %v806
        %v815 = vadd.f32 %v665, %v807
        %v816 = vadd.f32 %v666, %v808
        %v817 = vadd.f32 %v667, %v809
        %s818 = scalar_lea.vmem %s1, 24
        %v819 = vld [vmem:[%s818] sm:$0xff]
        %821 = vset.pattern.permute.xlu0 0
        %822 = vperm.xlu0 %821, %v819
        %v823 = vpop.permute.xlu0 %822
        %v825 = vmul.f32 %v823, %v371
        %v826 = vmul.f32 %v823, %v372
        %s827 = scalar_lea.vmem %s1, 88
        %v828 = vld [vmem:[%s827] sm:$0xff]
        %830 = vset.pattern.permute.xlu0 0
        %831 = vperm.xlu0 %830, %v828
        %v832 = vpop.permute.xlu0 %831
        %v834 = vmul.f32 %v832, %v373
        %v835 = vmul.f32 %v832, %v374
        %v836 = vadd.f32 %v825, %v834
        %v837 = vadd.f32 %v826, %v835
        %s838 = scalar_lea.vmem %s1, 152
        %v839 = vld [vmem:[%s838] sm:$0xff]
        %841 = vset.pattern.permute.xlu0 0
        %842 = vperm.xlu0 %841, %v839
        %v843 = vpop.permute.xlu0 %842
        %v845 = vmul.f32 %v843, %v375
        %v846 = vmul.f32 %v843, %v376
        %v847 = vadd.f32 %v836, %v845
        %v848 = vadd.f32 %v837, %v846
        %s849 = scalar_lea.vmem %s1, 216
        %v850 = vld [vmem:[%s849] sm:$0xff]
        %852 = vset.pattern.permute.xlu0 0
        %853 = vperm.xlu0 %852, %v850
        %v854 = vpop.permute.xlu0 %853
        %v856 = vmul.f32 %v854, %v377
        %v857 = vmul.f32 %v854, %v378
        %v858 = vadd.f32 %v847, %v856
        %v859 = vadd.f32 %v848, %v857
        %s860 = scalar_lea.vmem %s2, 24
        %v861 = vld [vmem:[%s860] sm:$0xff]
        %863 = vset.pattern.permute.xlu0 0
        %864 = vperm.xlu0 %863, %v861
        %v865 = vpop.permute.xlu0 %864
        %v867 = vadd.f32 %v858, %v865
        %v868 = vadd.f32 %v859, %v865
        %v869 = vmul.f32 %v867, 0.5
        %v870 = vmul.f32 %v868, 0.5
        %v871 = vmul.f32 %v867, 0.70710677
        %v872 = vmul.f32 %v868, 0.70710677
        %vm873 = vcmp.ge.f32.partialorder %v871, 0.0
        %vm874 = vcmp.ge.f32.partialorder %v872, 0.0
        %v875 = vsel %vm873, 1.0, -1.0
        %v876 = vsel %vm874, 1.0, -1.0
        %v877 = vand.u32 2147483647, %v871
        %v878 = vand.u32 2147483647, %v872
        %v879 = vmul.f32 %v877, 0.3275911
        %v880 = vmul.f32 %v878, 0.3275911
        %v881 = vadd.f32 %v879, 1.0
        %v882 = vadd.f32 %v880, 1.0
        %v883 = vrcp.pop %v881
        %v884 = vrcp.pop %v882
        %v885 = vmul.f32 %v881, %v883
        %v886 = vmul.f32 %v882, %v884
        %v887 = vsub.f32 2.0, %v885
        %v888 = vsub.f32 2.0, %v886
        %v889 = vmul.f32 %v883, %v887
        %v890 = vmul.f32 %v884, %v888
        %v891 = vmul.f32 %v889, 1.0614054
        %v892 = vmul.f32 %v890, 1.0614054
        %v893 = vadd.f32 %v891, -1.4531521
        %v894 = vadd.f32 %v892, -1.4531521
        %v895 = vmul.f32 %v893, %v889
        %v896 = vmul.f32 %v894, %v890
        %v897 = vadd.f32 %v895, 1.4214138
        %v898 = vadd.f32 %v896, 1.4214138
        %v899 = vmul.f32 %v897, %v889
        %v900 = vmul.f32 %v898, %v890
        %v901 = vadd.f32 %v899, -0.28449672
        %v902 = vadd.f32 %v900, -0.28449672
        %v903 = vmul.f32 %v901, %v889
        %v904 = vmul.f32 %v902, %v890
        %v905 = vadd.f32 %v903, 0.2548296
        %v906 = vadd.f32 %v904, 0.2548296
        %v907 = vmul.f32 %v905, %v889
        %v908 = vmul.f32 %v906, %v890
        %v909 = vsub.f32 0.0, %v877
        %v910 = vsub.f32 0.0, %v878
        %v911 = vmul.f32 %v909, %v877
        %v912 = vmul.f32 %v910, %v878
        %v913 = vmul.f32 %v911, 1.442695
        %v914 = vpow.pop %v913
        %v915 = vmul.f32 %v912, 1.442695
        %v916 = vpow.pop %v915
        %v917 = vmul.f32 %v907, %v914
        %v918 = vmul.f32 %v908, %v916
        %v919 = vsub.f32 1.0, %v917
        %v920 = vsub.f32 1.0, %v918
        %v921 = vmul.f32 %v875, %v919
        %v922 = vmul.f32 %v876, %v920
        %v923 = vadd.f32 %v921, 1.0
        %v924 = vadd.f32 %v922, 1.0
        %v925 = vmul.f32 %v869, %v923
        %v926 = vmul.f32 %v870, %v924
        %s927 = scalar_lea.vmem %s3, 96
        %v928 = vld [vmem:[%s927] sm:$0xff]
        %v929 = vld [vmem:[%s927 + $0x8] sm:$0xff]
        %v930 = vld [vmem:[%s927 + $0x10] sm:$0xff]
        %v931 = vld [vmem:[%s927 + $0x18] sm:$0xff]
        %933 = vset.pattern.permute.xlu0 0
        %934 = vperm.xlu0 %933, %v928
        %v935 = vpop.permute.xlu0 %934
        %938 = vset.pattern.permute.xlu0 0
        %939 = vperm.xlu0 %938, %v929
        %v940 = vpop.permute.xlu0 %939
        %943 = vset.pattern.permute.xlu0 0
        %944 = vperm.xlu0 %943, %v930
        %v945 = vpop.permute.xlu0 %944
        %948 = vset.pattern.permute.xlu0 0
        %949 = vperm.xlu0 %948, %v931
        %v950 = vpop.permute.xlu0 %949
        %v952 = vmul.f32 %v935, %v925
        %v953 = vmul.f32 %v935, %v926
        %v954 = vmul.f32 %v940, %v925
        %v955 = vmul.f32 %v940, %v926
        %v956 = vmul.f32 %v945, %v925
        %v957 = vmul.f32 %v945, %v926
        %v958 = vmul.f32 %v950, %v925
        %v959 = vmul.f32 %v950, %v926
        %v960 = vadd.f32 %v810, %v952
        %v961 = vadd.f32 %v811, %v953
        %v962 = vadd.f32 %v812, %v954
        %v963 = vadd.f32 %v813, %v955
        %v964 = vadd.f32 %v814, %v956
        %v965 = vadd.f32 %v815, %v957
        %v966 = vadd.f32 %v816, %v958
        %v967 = vadd.f32 %v817, %v959
        %s968 = scalar_lea.vmem %s1, 32
        %v969 = vld [vmem:[%s968] sm:$0xff]
        %971 = vset.pattern.permute.xlu0 0
        %972 = vperm.xlu0 %971, %v969
        %v973 = vpop.permute.xlu0 %972
        %v975 = vmul.f32 %v973, %v371
        %v976 = vmul.f32 %v973, %v372
        %s977 = scalar_lea.vmem %s1, 96
        %v978 = vld [vmem:[%s977] sm:$0xff]
        %980 = vset.pattern.permute.xlu0 0
        %981 = vperm.xlu0 %980, %v978
        %v982 = vpop.permute.xlu0 %981
        %v984 = vmul.f32 %v982, %v373
        %v985 = vmul.f32 %v982, %v374
        %v986 = vadd.f32 %v975, %v984
        %v987 = vadd.f32 %v976, %v985
        %s988 = scalar_lea.vmem %s1, 160
        %v989 = vld [vmem:[%s988] sm:$0xff]
        %991 = vset.pattern.permute.xlu0 0
        %992 = vperm.xlu0 %991, %v989
        %v993 = vpop.permute.xlu0 %992
        %v995 = vmul.f32 %v993, %v375
        %v996 = vmul.f32 %v993, %v376
        %v997 = vadd.f32 %v986, %v995
        %v998 = vadd.f32 %v987, %v996
        %s999 = scalar_lea.vmem %s1, 224
        %v1000 = vld [vmem:[%s999] sm:$0xff]
        %1002 = vset.pattern.permute.xlu0 0
        %1003 = vperm.xlu0 %1002, %v1000
        %v1004 = vpop.permute.xlu0 %1003
        %v1006 = vmul.f32 %v1004, %v377
        %v1007 = vmul.f32 %v1004, %v378
        %v1008 = vadd.f32 %v997, %v1006
        %v1009 = vadd.f32 %v998, %v1007
        %s1010 = scalar_lea.vmem %s2, 32
        %v1011 = vld [vmem:[%s1010] sm:$0xff]
        %1013 = vset.pattern.permute.xlu0 0
        %1014 = vperm.xlu0 %1013, %v1011
        %v1015 = vpop.permute.xlu0 %1014
        %v1017 = vadd.f32 %v1008, %v1015
        %v1018 = vadd.f32 %v1009, %v1015
        %v1019 = vmul.f32 %v1017, 0.5
        %v1020 = vmul.f32 %v1018, 0.5
        %v1021 = vmul.f32 %v1017, 0.70710677
        %v1022 = vmul.f32 %v1018, 0.70710677
        %vm1023 = vcmp.ge.f32.partialorder %v1021, 0.0
        %vm1024 = vcmp.ge.f32.partialorder %v1022, 0.0
        %v1025 = vsel %vm1023, 1.0, -1.0
        %v1026 = vsel %vm1024, 1.0, -1.0
        %v1027 = vand.u32 2147483647, %v1021
        %v1028 = vand.u32 2147483647, %v1022
        %v1029 = vmul.f32 %v1027, 0.3275911
        %v1030 = vmul.f32 %v1028, 0.3275911
        %v1031 = vadd.f32 %v1029, 1.0
        %v1032 = vadd.f32 %v1030, 1.0
        %v1033 = vrcp.pop %v1031
        %v1034 = vrcp.pop %v1032
        %v1035 = vmul.f32 %v1031, %v1033
        %v1036 = vmul.f32 %v1032, %v1034
        %v1037 = vsub.f32 2.0, %v1035
        %v1038 = vsub.f32 2.0, %v1036
        %v1039 = vmul.f32 %v1033, %v1037
        %v1040 = vmul.f32 %v1034, %v1038
        %v1041 = vmul.f32 %v1039, 1.0614054
        %v1042 = vmul.f32 %v1040, 1.0614054
        %v1043 = vadd.f32 %v1041, -1.4531521
        %v1044 = vadd.f32 %v1042, -1.4531521
        %v1045 = vmul.f32 %v1043, %v1039
        %v1046 = vmul.f32 %v1044, %v1040
        %v1047 = vadd.f32 %v1045, 1.4214138
        %v1048 = vadd.f32 %v1046, 1.4214138
        %v1049 = vmul.f32 %v1047, %v1039
        %v1050 = vmul.f32 %v1048, %v1040
        %v1051 = vadd.f32 %v1049, -0.28449672
        %v1052 = vadd.f32 %v1050, -0.28449672
        %v1053 = vmul.f32 %v1051, %v1039
        %v1054 = vmul.f32 %v1052, %v1040
        %v1055 = vadd.f32 %v1053, 0.2548296
        %v1056 = vadd.f32 %v1054, 0.2548296
        %v1057 = vmul.f32 %v1055, %v1039
        %v1058 = vmul.f32 %v1056, %v1040
        %v1059 = vsub.f32 0.0, %v1027
        %v1060 = vsub.f32 0.0, %v1028
        %v1061 = vmul.f32 %v1059, %v1027
        %v1062 = vmul.f32 %v1060, %v1028
        %v1063 = vmul.f32 %v1061, 1.442695
        %v1064 = vpow.pop %v1063
        %v1065 = vmul.f32 %v1062, 1.442695
        %v1066 = vpow.pop %v1065
        %v1067 = vmul.f32 %v1057, %v1064
        %v1068 = vmul.f32 %v1058, %v1066
        %v1069 = vsub.f32 1.0, %v1067
        %v1070 = vsub.f32 1.0, %v1068
        %v1071 = vmul.f32 %v1025, %v1069
        %v1072 = vmul.f32 %v1026, %v1070
        %v1073 = vadd.f32 %v1071, 1.0
        %v1074 = vadd.f32 %v1072, 1.0
        %v1075 = vmul.f32 %v1019, %v1073
        %v1076 = vmul.f32 %v1020, %v1074
        %s1077 = scalar_lea.vmem %s3, 128
        %v1078 = vld [vmem:[%s1077] sm:$0xff]
        %v1079 = vld [vmem:[%s1077 + $0x8] sm:$0xff]
        %v1080 = vld [vmem:[%s1077 + $0x10] sm:$0xff]
        %v1081 = vld [vmem:[%s1077 + $0x18] sm:$0xff]
        %1083 = vset.pattern.permute.xlu0 0
        %1084 = vperm.xlu0 %1083, %v1078
        %v1085 = vpop.permute.xlu0 %1084
        %1088 = vset.pattern.permute.xlu0 0
        %1089 = vperm.xlu0 %1088, %v1079
        %v1090 = vpop.permute.xlu0 %1089
        %1093 = vset.pattern.permute.xlu0 0
        %1094 = vperm.xlu0 %1093, %v1080
        %v1095 = vpop.permute.xlu0 %1094
        %1098 = vset.pattern.permute.xlu0 0
        %1099 = vperm.xlu0 %1098, %v1081
        %v1100 = vpop.permute.xlu0 %1099
        %v1102 = vmul.f32 %v1085, %v1075
        %v1103 = vmul.f32 %v1085, %v1076
        %v1104 = vmul.f32 %v1090, %v1075
        %v1105 = vmul.f32 %v1090, %v1076
        %v1106 = vmul.f32 %v1095, %v1075
        %v1107 = vmul.f32 %v1095, %v1076
        %v1108 = vmul.f32 %v1100, %v1075
        %v1109 = vmul.f32 %v1100, %v1076
        %v1110 = vadd.f32 %v960, %v1102
        %v1111 = vadd.f32 %v961, %v1103
        %v1112 = vadd.f32 %v962, %v1104
        %v1113 = vadd.f32 %v963, %v1105
        %v1114 = vadd.f32 %v964, %v1106
        %v1115 = vadd.f32 %v965, %v1107
        %v1116 = vadd.f32 %v966, %v1108
        %v1117 = vadd.f32 %v967, %v1109
        %s1118 = scalar_lea.vmem %s1, 40
        %v1119 = vld [vmem:[%s1118] sm:$0xff]
        %1121 = vset.pattern.permute.xlu0 0
        %1122 = vperm.xlu0 %1121, %v1119
        %v1123 = vpop.permute.xlu0 %1122
        %v1125 = vmul.f32 %v1123, %v371
        %v1126 = vmul.f32 %v1123, %v372
        %s1127 = scalar_lea.vmem %s1, 104
        %v1128 = vld [vmem:[%s1127] sm:$0xff]
        %1130 = vset.pattern.permute.xlu0 0
        %1131 = vperm.xlu0 %1130, %v1128
        %v1132 = vpop.permute.xlu0 %1131
        %v1134 = vmul.f32 %v1132, %v373
        %v1135 = vmul.f32 %v1132, %v374
        %v1136 = vadd.f32 %v1125, %v1134
        %v1137 = vadd.f32 %v1126, %v1135
        %s1138 = scalar_lea.vmem %s1, 168
        %v1139 = vld [vmem:[%s1138] sm:$0xff]
        %1141 = vset.pattern.permute.xlu0 0
        %1142 = vperm.xlu0 %1141, %v1139
        %v1143 = vpop.permute.xlu0 %1142
        %v1145 = vmul.f32 %v1143, %v375
        %v1146 = vmul.f32 %v1143, %v376
        %v1147 = vadd.f32 %v1136, %v1145
        %v1148 = vadd.f32 %v1137, %v1146
        %s1149 = scalar_lea.vmem %s1, 232
        %v1150 = vld [vmem:[%s1149] sm:$0xff]
        %1152 = vset.pattern.permute.xlu0 0
        %1153 = vperm.xlu0 %1152, %v1150
        %v1154 = vpop.permute.xlu0 %1153
        %v1156 = vmul.f32 %v1154, %v377
        %v1157 = vmul.f32 %v1154, %v378
        %v1158 = vadd.f32 %v1147, %v1156
        %v1159 = vadd.f32 %v1148, %v1157
        %s1160 = scalar_lea.vmem %s2, 40
        %v1161 = vld [vmem:[%s1160] sm:$0xff]
        %1163 = vset.pattern.permute.xlu0 0
        %1164 = vperm.xlu0 %1163, %v1161
        %v1165 = vpop.permute.xlu0 %1164
        %v1167 = vadd.f32 %v1158, %v1165
        %v1168 = vadd.f32 %v1159, %v1165
        %v1169 = vmul.f32 %v1167, 0.5
        %v1170 = vmul.f32 %v1168, 0.5
        %v1171 = vmul.f32 %v1167, 0.70710677
        %v1172 = vmul.f32 %v1168, 0.70710677
        %vm1173 = vcmp.ge.f32.partialorder %v1171, 0.0
        %vm1174 = vcmp.ge.f32.partialorder %v1172, 0.0
        %v1175 = vsel %vm1173, 1.0, -1.0
        %v1176 = vsel %vm1174, 1.0, -1.0
        %v1177 = vand.u32 2147483647, %v1171
        %v1178 = vand.u32 2147483647, %v1172
        %v1179 = vmul.f32 %v1177, 0.3275911
        %v1180 = vmul.f32 %v1178, 0.3275911
        %v1181 = vadd.f32 %v1179, 1.0
        %v1182 = vadd.f32 %v1180, 1.0
        %v1183 = vrcp.pop %v1181
        %v1184 = vrcp.pop %v1182
        %v1185 = vmul.f32 %v1181, %v1183
        %v1186 = vmul.f32 %v1182, %v1184
        %v1187 = vsub.f32 2.0, %v1185
        %v1188 = vsub.f32 2.0, %v1186
        %v1189 = vmul.f32 %v1183, %v1187
        %v1190 = vmul.f32 %v1184, %v1188
        %v1191 = vmul.f32 %v1189, 1.0614054
        %v1192 = vmul.f32 %v1190, 1.0614054
        %v1193 = vadd.f32 %v1191, -1.4531521
        %v1194 = vadd.f32 %v1192, -1.4531521
        %v1195 = vmul.f32 %v1193, %v1189
        %v1196 = vmul.f32 %v1194, %v1190
        %v1197 = vadd.f32 %v1195, 1.4214138
        %v1198 = vadd.f32 %v1196, 1.4214138
        %v1199 = vmul.f32 %v1197, %v1189
        %v1200 = vmul.f32 %v1198, %v1190
        %v1201 = vadd.f32 %v1199, -0.28449672
        %v1202 = vadd.f32 %v1200, -0.28449672
        %v1203 = vmul.f32 %v1201, %v1189
        %v1204 = vmul.f32 %v1202, %v1190
        %v1205 = vadd.f32 %v1203, 0.2548296
        %v1206 = vadd.f32 %v1204, 0.2548296
        %v1207 = vmul.f32 %v1205, %v1189
        %v1208 = vmul.f32 %v1206, %v1190
        %v1209 = vsub.f32 0.0, %v1177
        %v1210 = vsub.f32 0.0, %v1178
        %v1211 = vmul.f32 %v1209, %v1177
        %v1212 = vmul.f32 %v1210, %v1178
        %v1213 = vmul.f32 %v1211, 1.442695
        %v1214 = vpow.pop %v1213
        %v1215 = vmul.f32 %v1212, 1.442695
        %v1216 = vpow.pop %v1215
        %v1217 = vmul.f32 %v1207, %v1214
        %v1218 = vmul.f32 %v1208, %v1216
        %v1219 = vsub.f32 1.0, %v1217
        %v1220 = vsub.f32 1.0, %v1218
        %v1221 = vmul.f32 %v1175, %v1219
        %v1222 = vmul.f32 %v1176, %v1220
        %v1223 = vadd.f32 %v1221, 1.0
        %v1224 = vadd.f32 %v1222, 1.0
        %v1225 = vmul.f32 %v1169, %v1223
        %v1226 = vmul.f32 %v1170, %v1224
        %s1227 = scalar_lea.vmem %s3, 160
        %v1228 = vld [vmem:[%s1227] sm:$0xff]
        %v1229 = vld [vmem:[%s1227 + $0x8] sm:$0xff]
        %v1230 = vld [vmem:[%s1227 + $0x10] sm:$0xff]
        %v1231 = vld [vmem:[%s1227 + $0x18] sm:$0xff]
        %1233 = vset.pattern.permute.xlu0 0
        %1234 = vperm.xlu0 %1233, %v1228
        %v1235 = vpop.permute.xlu0 %1234
        %1238 = vset.pattern.permute.xlu0 0
        %1239 = vperm.xlu0 %1238, %v1229
        %v1240 = vpop.permute.xlu0 %1239
        %1243 = vset.pattern.permute.xlu0 0
        %1244 = vperm.xlu0 %1243, %v1230
        %v1245 = vpop.permute.xlu0 %1244
        %1248 = vset.pattern.permute.xlu0 0
        %1249 = vperm.xlu0 %1248, %v1231
        %v1250 = vpop.permute.xlu0 %1249
        %v1252 = vmul.f32 %v1235, %v1225
        %v1253 = vmul.f32 %v1235, %v1226
        %v1254 = vmul.f32 %v1240, %v1225
        %v1255 = vmul.f32 %v1240, %v1226
        %v1256 = vmul.f32 %v1245, %v1225
        %v1257 = vmul.f32 %v1245, %v1226
        %v1258 = vmul.f32 %v1250, %v1225
        %v1259 = vmul.f32 %v1250, %v1226
        %v1260 = vadd.f32 %v1110, %v1252
        %v1261 = vadd.f32 %v1111, %v1253
        %v1262 = vadd.f32 %v1112, %v1254
        %v1263 = vadd.f32 %v1113, %v1255
        %v1264 = vadd.f32 %v1114, %v1256
        %v1265 = vadd.f32 %v1115, %v1257
        %v1266 = vadd.f32 %v1116, %v1258
        %v1267 = vadd.f32 %v1117, %v1259
        %s1268 = scalar_lea.vmem %s1, 48
        %v1269 = vld [vmem:[%s1268] sm:$0xff]
        %1271 = vset.pattern.permute.xlu0 0
        %1272 = vperm.xlu0 %1271, %v1269
        %v1273 = vpop.permute.xlu0 %1272
        %v1275 = vmul.f32 %v1273, %v371
        %v1276 = vmul.f32 %v1273, %v372
        %s1277 = scalar_lea.vmem %s1, 112
        %v1278 = vld [vmem:[%s1277] sm:$0xff]
        %1280 = vset.pattern.permute.xlu0 0
        %1281 = vperm.xlu0 %1280, %v1278
        %v1282 = vpop.permute.xlu0 %1281
        %v1284 = vmul.f32 %v1282, %v373
        %v1285 = vmul.f32 %v1282, %v374
        %v1286 = vadd.f32 %v1275, %v1284
        %v1287 = vadd.f32 %v1276, %v1285
        %s1288 = scalar_lea.vmem %s1, 176
        %v1289 = vld [vmem:[%s1288] sm:$0xff]
        %1291 = vset.pattern.permute.xlu0 0
        %1292 = vperm.xlu0 %1291, %v1289
        %v1293 = vpop.permute.xlu0 %1292
        %v1295 = vmul.f32 %v1293, %v375
        %v1296 = vmul.f32 %v1293, %v376
        %v1297 = vadd.f32 %v1286, %v1295
        %v1298 = vadd.f32 %v1287, %v1296
        %s1299 = scalar_lea.vmem %s1, 240
        %v1300 = vld [vmem:[%s1299] sm:$0xff]
        %1302 = vset.pattern.permute.xlu0 0
        %1303 = vperm.xlu0 %1302, %v1300
        %v1304 = vpop.permute.xlu0 %1303
        %v1306 = vmul.f32 %v1304, %v377
        %v1307 = vmul.f32 %v1304, %v378
        %v1308 = vadd.f32 %v1297, %v1306
        %v1309 = vadd.f32 %v1298, %v1307
        %s1310 = scalar_lea.vmem %s2, 48
        %v1311 = vld [vmem:[%s1310] sm:$0xff]
        %1313 = vset.pattern.permute.xlu0 0
        %1314 = vperm.xlu0 %1313, %v1311
        %v1315 = vpop.permute.xlu0 %1314
        %v1317 = vadd.f32 %v1308, %v1315
        %v1318 = vadd.f32 %v1309, %v1315
        %v1319 = vmul.f32 %v1317, 0.5
        %v1320 = vmul.f32 %v1318, 0.5
        %v1321 = vmul.f32 %v1317, 0.70710677
        %v1322 = vmul.f32 %v1318, 0.70710677
        %vm1323 = vcmp.ge.f32.partialorder %v1321, 0.0
        %vm1324 = vcmp.ge.f32.partialorder %v1322, 0.0
        %v1325 = vsel %vm1323, 1.0, -1.0
        %v1326 = vsel %vm1324, 1.0, -1.0
        %v1327 = vand.u32 2147483647, %v1321
        %v1328 = vand.u32 2147483647, %v1322
        %v1329 = vmul.f32 %v1327, 0.3275911
        %v1330 = vmul.f32 %v1328, 0.3275911
        %v1331 = vadd.f32 %v1329, 1.0
        %v1332 = vadd.f32 %v1330, 1.0
        %v1333 = vrcp.pop %v1331
        %v1334 = vrcp.pop %v1332
        %v1335 = vmul.f32 %v1331, %v1333
        %v1336 = vmul.f32 %v1332, %v1334
        %v1337 = vsub.f32 2.0, %v1335
        %v1338 = vsub.f32 2.0, %v1336
        %v1339 = vmul.f32 %v1333, %v1337
        %v1340 = vmul.f32 %v1334, %v1338
        %v1341 = vmul.f32 %v1339, 1.0614054
        %v1342 = vmul.f32 %v1340, 1.0614054
        %v1343 = vadd.f32 %v1341, -1.4531521
        %v1344 = vadd.f32 %v1342, -1.4531521
        %v1345 = vmul.f32 %v1343, %v1339
        %v1346 = vmul.f32 %v1344, %v1340
        %v1347 = vadd.f32 %v1345, 1.4214138
        %v1348 = vadd.f32 %v1346, 1.4214138
        %v1349 = vmul.f32 %v1347, %v1339
        %v1350 = vmul.f32 %v1348, %v1340
        %v1351 = vadd.f32 %v1349, -0.28449672
        %v1352 = vadd.f32 %v1350, -0.28449672
        %v1353 = vmul.f32 %v1351, %v1339
        %v1354 = vmul.f32 %v1352, %v1340
        %v1355 = vadd.f32 %v1353, 0.2548296
        %v1356 = vadd.f32 %v1354, 0.2548296
        %v1357 = vmul.f32 %v1355, %v1339
        %v1358 = vmul.f32 %v1356, %v1340
        %v1359 = vsub.f32 0.0, %v1327
        %v1360 = vsub.f32 0.0, %v1328
        %v1361 = vmul.f32 %v1359, %v1327
        %v1362 = vmul.f32 %v1360, %v1328
        %v1363 = vmul.f32 %v1361, 1.442695
        %v1364 = vpow.pop %v1363
        %v1365 = vmul.f32 %v1362, 1.442695
        %v1366 = vpow.pop %v1365
        %v1367 = vmul.f32 %v1357, %v1364
        %v1368 = vmul.f32 %v1358, %v1366
        %v1369 = vsub.f32 1.0, %v1367
        %v1370 = vsub.f32 1.0, %v1368
        %v1371 = vmul.f32 %v1325, %v1369
        %v1372 = vmul.f32 %v1326, %v1370
        %v1373 = vadd.f32 %v1371, 1.0
        %v1374 = vadd.f32 %v1372, 1.0
        %v1375 = vmul.f32 %v1319, %v1373
        %v1376 = vmul.f32 %v1320, %v1374
        %s1377 = scalar_lea.vmem %s3, 192
        %v1378 = vld [vmem:[%s1377] sm:$0xff]
        %v1379 = vld [vmem:[%s1377 + $0x8] sm:$0xff]
        %v1380 = vld [vmem:[%s1377 + $0x10] sm:$0xff]
        %v1381 = vld [vmem:[%s1377 + $0x18] sm:$0xff]
        %1383 = vset.pattern.permute.xlu0 0
        %1384 = vperm.xlu0 %1383, %v1378
        %v1385 = vpop.permute.xlu0 %1384
        %1388 = vset.pattern.permute.xlu0 0
        %1389 = vperm.xlu0 %1388, %v1379
        %v1390 = vpop.permute.xlu0 %1389
        %1393 = vset.pattern.permute.xlu0 0
        %1394 = vperm.xlu0 %1393, %v1380
        %v1395 = vpop.permute.xlu0 %1394
        %1398 = vset.pattern.permute.xlu0 0
        %1399 = vperm.xlu0 %1398, %v1381
        %v1400 = vpop.permute.xlu0 %1399
        %v1402 = vmul.f32 %v1385, %v1375
        %v1403 = vmul.f32 %v1385, %v1376
        %v1404 = vmul.f32 %v1390, %v1375
        %v1405 = vmul.f32 %v1390, %v1376
        %v1406 = vmul.f32 %v1395, %v1375
        %v1407 = vmul.f32 %v1395, %v1376
        %v1408 = vmul.f32 %v1400, %v1375
        %v1409 = vmul.f32 %v1400, %v1376
        %v1410 = vadd.f32 %v1260, %v1402
        %v1411 = vadd.f32 %v1261, %v1403
        %v1412 = vadd.f32 %v1262, %v1404
        %v1413 = vadd.f32 %v1263, %v1405
        %v1414 = vadd.f32 %v1264, %v1406
        %v1415 = vadd.f32 %v1265, %v1407
        %v1416 = vadd.f32 %v1266, %v1408
        %v1417 = vadd.f32 %v1267, %v1409
        %s1418 = scalar_lea.vmem %s1, 56
        %v1419 = vld [vmem:[%s1418] sm:$0xff]
        %1421 = vset.pattern.permute.xlu0 0
        %1422 = vperm.xlu0 %1421, %v1419
        %v1423 = vpop.permute.xlu0 %1422
        %v1425 = vmul.f32 %v1423, %v371
        %v1426 = vmul.f32 %v1423, %v372
        %s1427 = scalar_lea.vmem %s1, 120
        %v1428 = vld [vmem:[%s1427] sm:$0xff]
        %1430 = vset.pattern.permute.xlu0 0
        %1431 = vperm.xlu0 %1430, %v1428
        %v1432 = vpop.permute.xlu0 %1431
        %v1434 = vmul.f32 %v1432, %v373
        %v1435 = vmul.f32 %v1432, %v374
        %v1436 = vadd.f32 %v1425, %v1434
        %v1437 = vadd.f32 %v1426, %v1435
        %s1438 = scalar_lea.vmem %s1, 184
        %v1439 = vld [vmem:[%s1438] sm:$0xff]
        %1441 = vset.pattern.permute.xlu0 0
        %1442 = vperm.xlu0 %1441, %v1439
        %v1443 = vpop.permute.xlu0 %1442
        %v1445 = vmul.f32 %v1443, %v375
        %v1446 = vmul.f32 %v1443, %v376
        %v1447 = vadd.f32 %v1436, %v1445
        %v1448 = vadd.f32 %v1437, %v1446
        %s1449 = scalar_lea.vmem %s1, 248
        %v1450 = vld [vmem:[%s1449] sm:$0xff]
        %1452 = vset.pattern.permute.xlu0 0
        %1453 = vperm.xlu0 %1452, %v1450
        %v1454 = vpop.permute.xlu0 %1453
        %v1456 = vmul.f32 %v1454, %v377
        %v1457 = vmul.f32 %v1454, %v378
        %v1458 = vadd.f32 %v1447, %v1456
        %v1459 = vadd.f32 %v1448, %v1457
        %s1460 = scalar_lea.vmem %s2, 56
        %v1461 = vld [vmem:[%s1460] sm:$0xff]
        %1463 = vset.pattern.permute.xlu0 0
        %1464 = vperm.xlu0 %1463, %v1461
        %v1465 = vpop.permute.xlu0 %1464
        %v1467 = vadd.f32 %v1458, %v1465
        %v1468 = vadd.f32 %v1459, %v1465
        %v1469 = vmul.f32 %v1467, 0.5
        %v1470 = vmul.f32 %v1468, 0.5
        %v1471 = vmul.f32 %v1467, 0.70710677
        %v1472 = vmul.f32 %v1468, 0.70710677
        %vm1473 = vcmp.ge.f32.partialorder %v1471, 0.0
        %vm1474 = vcmp.ge.f32.partialorder %v1472, 0.0
        %v1475 = vsel %vm1473, 1.0, -1.0
        %v1476 = vsel %vm1474, 1.0, -1.0
        %v1477 = vand.u32 2147483647, %v1471
        %v1478 = vand.u32 2147483647, %v1472
        %v1479 = vmul.f32 %v1477, 0.3275911
        %v1480 = vmul.f32 %v1478, 0.3275911
        %v1481 = vadd.f32 %v1479, 1.0
        %v1482 = vadd.f32 %v1480, 1.0
        %v1483 = vrcp.pop %v1481
        %v1484 = vrcp.pop %v1482
        %v1485 = vmul.f32 %v1481, %v1483
        %v1486 = vmul.f32 %v1482, %v1484
        %v1487 = vsub.f32 2.0, %v1485
        %v1488 = vsub.f32 2.0, %v1486
        %v1489 = vmul.f32 %v1483, %v1487
        %v1490 = vmul.f32 %v1484, %v1488
        %v1491 = vmul.f32 %v1489, 1.0614054
        %v1492 = vmul.f32 %v1490, 1.0614054
        %v1493 = vadd.f32 %v1491, -1.4531521
        %v1494 = vadd.f32 %v1492, -1.4531521
        %v1495 = vmul.f32 %v1493, %v1489
        %v1496 = vmul.f32 %v1494, %v1490
        %v1497 = vadd.f32 %v1495, 1.4214138
        %v1498 = vadd.f32 %v1496, 1.4214138
        %v1499 = vmul.f32 %v1497, %v1489
        %v1500 = vmul.f32 %v1498, %v1490
        %v1501 = vadd.f32 %v1499, -0.28449672
        %v1502 = vadd.f32 %v1500, -0.28449672
        %v1503 = vmul.f32 %v1501, %v1489
        %v1504 = vmul.f32 %v1502, %v1490
        %v1505 = vadd.f32 %v1503, 0.2548296
        %v1506 = vadd.f32 %v1504, 0.2548296
        %v1507 = vmul.f32 %v1505, %v1489
        %v1508 = vmul.f32 %v1506, %v1490
        %v1509 = vsub.f32 0.0, %v1477
        %v1510 = vsub.f32 0.0, %v1478
        %v1511 = vmul.f32 %v1509, %v1477
        %v1512 = vmul.f32 %v1510, %v1478
        %v1513 = vmul.f32 %v1511, 1.442695
        %v1514 = vpow.pop %v1513
        %v1515 = vmul.f32 %v1512, 1.442695
        %v1516 = vpow.pop %v1515
        %v1517 = vmul.f32 %v1507, %v1514
        %v1518 = vmul.f32 %v1508, %v1516
        %v1519 = vsub.f32 1.0, %v1517
        %v1520 = vsub.f32 1.0, %v1518
        %v1521 = vmul.f32 %v1475, %v1519
        %v1522 = vmul.f32 %v1476, %v1520
        %v1523 = vadd.f32 %v1521, 1.0
        %v1524 = vadd.f32 %v1522, 1.0
        %v1525 = vmul.f32 %v1469, %v1523
        %v1526 = vmul.f32 %v1470, %v1524
        %s1527 = scalar_lea.vmem %s3, 224
        %v1528 = vld [vmem:[%s1527] sm:$0xff]
        %v1529 = vld [vmem:[%s1527 + $0x8] sm:$0xff]
        %v1530 = vld [vmem:[%s1527 + $0x10] sm:$0xff]
        %v1531 = vld [vmem:[%s1527 + $0x18] sm:$0xff]
        %1533 = vset.pattern.permute.xlu0 0
        %1534 = vperm.xlu0 %1533, %v1528
        %v1535 = vpop.permute.xlu0 %1534
        %1538 = vset.pattern.permute.xlu0 0
        %1539 = vperm.xlu0 %1538, %v1529
        %v1540 = vpop.permute.xlu0 %1539
        %1543 = vset.pattern.permute.xlu0 0
        %1544 = vperm.xlu0 %1543, %v1530
        %v1545 = vpop.permute.xlu0 %1544
        %1548 = vset.pattern.permute.xlu0 0
        %1549 = vperm.xlu0 %1548, %v1531
        %v1550 = vpop.permute.xlu0 %1549
        %v1552 = vmul.f32 %v1535, %v1525
        %v1553 = vmul.f32 %v1535, %v1526
        %v1554 = vmul.f32 %v1540, %v1525
        %v1555 = vmul.f32 %v1540, %v1526
        %v1556 = vmul.f32 %v1545, %v1525
        %v1557 = vmul.f32 %v1545, %v1526
        %v1558 = vmul.f32 %v1550, %v1525
        %v1559 = vmul.f32 %v1550, %v1526
        %v1560 = vadd.f32 %v1410, %v1552
        %v1561 = vadd.f32 %v1411, %v1553
        %v1562 = vadd.f32 %v1412, %v1554
        %v1563 = vadd.f32 %v1413, %v1555
        %v1564 = vadd.f32 %v1414, %v1556
        %v1565 = vadd.f32 %v1415, %v1557
        %v1566 = vadd.f32 %v1416, %v1558
        %v1567 = vadd.f32 %v1417, %v1559
        %v1568 = vld [vmem:[%s4] sm:$0xff]
        %v1569 = vld [vmem:[%s4 + $0x8] sm:$0xff]
        %v1570 = vld [vmem:[%s4 + $0x10] sm:$0xff]
        %v1571 = vld [vmem:[%s4 + $0x18] sm:$0xff]
        %1573 = vset.pattern.permute.xlu0 0
        %1574 = vperm.xlu0 %1573, %v1568
        %v1575 = vpop.permute.xlu0 %1574
        %1578 = vset.pattern.permute.xlu0 0
        %1579 = vperm.xlu0 %1578, %v1569
        %v1580 = vpop.permute.xlu0 %1579
        %1583 = vset.pattern.permute.xlu0 0
        %1584 = vperm.xlu0 %1583, %v1570
        %v1585 = vpop.permute.xlu0 %1584
        %1588 = vset.pattern.permute.xlu0 0
        %1589 = vperm.xlu0 %1588, %v1571
        %v1590 = vpop.permute.xlu0 %1589
        %v1592 = vadd.f32 %v1560, %v1575
        %v1593 = vadd.f32 %v1561, %v1575
        %v1594 = vadd.f32 %v1562, %v1580
        %v1595 = vadd.f32 %v1563, %v1580
        %v1596 = vadd.f32 %v1564, %v1585
        %v1597 = vadd.f32 %v1565, %v1585
        %v1598 = vadd.f32 %v1566, %v1590
        %v1599 = vadd.f32 %v1567, %v1590
        %v1600 = vld [vmem:[%s5] sm:$0xff]
        %v1601 = vld [vmem:[%s5 + $0x8] sm:$0xff]
        %v1602 = vld [vmem:[%s5 + $0x10] sm:$0xff]
        %v1603 = vld [vmem:[%s5 + $0x18] sm:$0xff]
        %v1604 = vld [vmem:[%s5 + $0x20] sm:$0xff]
        %v1605 = vld [vmem:[%s5 + $0x28] sm:$0xff]
        %v1606 = vld [vmem:[%s5 + $0x30] sm:$0xff]
        %v1607 = vld [vmem:[%s5 + $0x38] sm:$0xff]
        %v1608 = vld [vmem:[%s6] sm:$0xff]
        %v1609 = vld [vmem:[%s6 + $0x8] sm:$0xff]
        %v1610 = vld [vmem:[%s6 + $0x10] sm:$0xff]
        %v1611 = vld [vmem:[%s6 + $0x18] sm:$0xff]
        %v1612 = vld [vmem:[%s6 + $0x20] sm:$0xff]
        %v1613 = vld [vmem:[%s6 + $0x28] sm:$0xff]
        %v1614 = vld [vmem:[%s6 + $0x30] sm:$0xff]
        %v1615 = vld [vmem:[%s6 + $0x38] sm:$0xff]
        %1617 = vset.pattern.permute.xlu0 0
        %1618 = vperm.xlu0 %1617, %v1608
        %v1619 = vpop.permute.xlu0 %1618
        %1622 = vset.pattern.permute.xlu0 0
        %1623 = vperm.xlu0 %1622, %v1609
        %v1624 = vpop.permute.xlu0 %1623
        %1627 = vset.pattern.permute.xlu0 0
        %1628 = vperm.xlu0 %1627, %v1610
        %v1629 = vpop.permute.xlu0 %1628
        %1632 = vset.pattern.permute.xlu0 0
        %1633 = vperm.xlu0 %1632, %v1611
        %v1634 = vpop.permute.xlu0 %1633
        %1637 = vset.pattern.permute.xlu0 0
        %1638 = vperm.xlu0 %1637, %v1612
        %v1639 = vpop.permute.xlu0 %1638
        %1642 = vset.pattern.permute.xlu0 0
        %1643 = vperm.xlu0 %1642, %v1613
        %v1644 = vpop.permute.xlu0 %1643
        %1647 = vset.pattern.permute.xlu0 0
        %1648 = vperm.xlu0 %1647, %v1614
        %v1649 = vpop.permute.xlu0 %1648
        %1652 = vset.pattern.permute.xlu0 0
        %1653 = vperm.xlu0 %1652, %v1615
        %v1654 = vpop.permute.xlu0 %1653
        %vm1656 = vcmask 261120
        %v1658 = vsel %vm1656, %v1600, 0
        %v1661 = vsel %vm1656, %v1601, 0
        %v1664 = vsel %vm1656, %v1602, 0
        %v1667 = vsel %vm1656, %v1603, 0
        %v1670 = vsel %vm1656, %v1604, 0
        %v1673 = vsel %vm1656, %v1605, 0
        %v1676 = vsel %vm1656, %v1606, 0
        %v1679 = vsel %vm1656, %v1607, 0
        %1681 = vmatprep.subr.mxu0 %v1593
        %1682 = vmatpush1.msra.mxu0 %v1592
        %1683 = vmatprep.subr.mxu0 %v1595
        %1684 = vmatpush1.msra.mxu0 %v1594
        %1685 = vmatprep.subr.mxu0 %v1597
        %1686 = vmatpush1.msra.mxu0 %v1596
        %1687 = vmatprep.subr.mxu0 %v1599
        %1688 = vmatpush1.msra.mxu0 %v1598
        %1689 = vmatprep.subr.mxu0 0.0
        %1690 = vmatpush1.msra.mxu0 0.0
        %1691 = vmatprep.subr.mxu0 0.0
        %1692 = vmatpush1.msra.mxu0 0.0
        %1693 = vmatprep.subr.mxu0 0.0
        %1694 = vmatpush1.msra.mxu0 0.0
        %1695 = vmatprep.subr.mxu0 0.0
        %1696 = vmatpush1.msra.mxu0 0.0
        %1697 = vmatprep.subr.mxu0 0.0
        %1698 = vmatpush1.msra.mxu0 0.0
        %1699 = vmatprep.subr.mxu0 0.0
        %1700 = vmatpush1.msra.mxu0 0.0
        %1701 = vmatprep.subr.mxu0 0.0
        %1702 = vmatpush1.msra.mxu0 0.0
        %1703 = vmatprep.subr.mxu0 0.0
        %1704 = vmatpush1.msra.mxu0 0.0
        %1705 = vmatprep.subr.mxu0 0.0
        %1706 = vmatpush1.msra.mxu0 0.0
        %1707 = vmatprep.subr.mxu0 0.0
        %1708 = vmatpush1.msra.mxu0 0.0
        %1709 = vmatprep.subr.mxu0 0.0
        %1710 = vmatpush1.msra.mxu0 0.0
        %1711 = vmatprep.subr.mxu0 0.0
        %1712 = vmatpush1.msra.mxu0 0.0
        %1713 = vmatprep.subr.mxu0 0.0
        %1714 = vmatpush1.msra.mxu0 0.0
        %1715 = vmatprep.subr.mxu0 0.0
        %1716 = vmatpush1.msra.mxu0 0.0
        %1717 = vmatprep.subr.mxu0 0.0
        %1718 = vmatpush1.msra.mxu0 0.0
        %1719 = vmatprep.subr.mxu0 0.0
        %1720 = vmatpush1.msra.mxu0 0.0
        %1721 = vmatprep.subr.mxu0 0.0
        %1722 = vmatpush1.msra.mxu0 0.0
        %1723 = vmatprep.subr.mxu0 0.0
        %1724 = vmatpush1.msra.mxu0 0.0
        %1725 = vmatprep.subr.mxu0 0.0
        %1726 = vmatpush1.msra.mxu0 0.0
        %1727 = vmatprep.subr.mxu0 0.0
        %1728 = vmatpush1.msra.mxu0 0.0
        %1729 = vmatprep.subr.mxu0 0.0
        %1730 = vmatpush1.msra.mxu0 0.0
        %1731 = vmatprep.subr.mxu0 0.0
        %1732 = vmatpush1.msra.mxu0 0.0
        %1733 = vmatprep.subr.mxu0 0.0
        %1734 = vmatpush1.msra.mxu0 0.0
        %1735 = vmatprep.subr.mxu0 0.0
        %1736 = vmatpush1.msra.mxu0 0.0
        %1737 = vmatprep.subr.mxu0 0.0
        %1738 = vmatpush1.msra.mxu0 0.0
        %1739 = vmatprep.subr.mxu0 0.0
        %1740 = vmatpush1.msra.mxu0 0.0
        %1741 = vmatprep.subr.mxu0 0.0
        %1742 = vmatpush1.msra.mxu0 0.0
        %1743 = vmatprep.subr.mxu0 0.0
        %1744 = vmatpush1.msra.mxu0 0.0
        %1745 = vmatprep.mubr.f32.mxu0 0.0
        %1746 = vmatmul.mubr.f32.gmra.mrb[0].mxu0 %v1658
        %v1747 = vpop.f32.mrb[0].mxu0
        %v1748 = vadd.f32 %v1619, %v1747
        %v1749 = vpop.f32.mrb[0].mxu0
        %v1750 = vadd.f32 %v1619, %v1749
        %1751 = vmatprep.mubr.f32.mxu0 0.0
        %1752 = vmatmul.mubr.f32.gmra.mrb[0].mxu0 %v1661
        %v1753 = vpop.f32.mrb[0].mxu0
        %v1754 = vadd.f32 %v1624, %v1753
        %v1755 = vpop.f32.mrb[0].mxu0
        %v1756 = vadd.f32 %v1624, %v1755
        %1757 = vmatprep.mubr.f32.mxu0 0.0
        %1758 = vmatmul.mubr.f32.gmra.mrb[0].mxu0 %v1664
        %v1759 = vpop.f32.mrb[0].mxu0
        %v1760 = vadd.f32 %v1629, %v1759
        %v1761 = vpop.f32.mrb[0].mxu0
        %v1762 = vadd.f32 %v1629, %v1761
        %1763 = vmatprep.mubr.f32.mxu0 0.0
        %1764 = vmatmul.mubr.f32.gmra.mrb[0].mxu0 %v1667
        %v1765 = vpop.f32.mrb[0].mxu0
        %v1766 = vadd.f32 %v1634, %v1765
        %v1767 = vpop.f32.mrb[0].mxu0
        %v1768 = vadd.f32 %v1634, %v1767
        %1769 = vmatprep.mubr.f32.mxu0 0.0
        %1770 = vmatmul.mubr.f32.gmra.mrb[0].mxu0 %v1670
        %v1771 = vpop.f32.mrb[0].mxu0
        %v1772 = vadd.f32 %v1639, %v1771
        %v1773 = vpop.f32.mrb[0].mxu0
        %v1774 = vadd.f32 %v1639, %v1773
        %1775 = vmatprep.mubr.f32.mxu0 0.0
        %1776 = vmatmul.mubr.f32.gmra.mrb[0].mxu0 %v1673
        %v1777 = vpop.f32.mrb[0].mxu0
        %v1778 = vadd.f32 %v1644, %v1777
        %v1779 = vpop.f32.mrb[0].mxu0
        %v1780 = vadd.f32 %v1644, %v1779
        %1781 = vmatprep.mubr.f32.mxu0 0.0
        %1782 = vmatmul.mubr.f32.gmra.mrb[0].mxu0 %v1676
        %v1783 = vpop.f32.mrb[0].mxu0
        %v1784 = vadd.f32 %v1649, %v1783
        %v1785 = vpop.f32.mrb[0].mxu0
        %v1786 = vadd.f32 %v1649, %v1785
        %1787 = vmatprep.mubr.f32.mxu0 0.0
        %1788 = vmatmul.mubr.f32.gmra.mrb[0].mxu0 %v1679
        %v1789 = vpop.f32.mrb[0].mxu0
        %v1790 = vadd.f32 %v1654, %v1789
        %v1791 = vpop.f32.mrb[0].mxu0
        %v1792 = vadd.f32 %v1654, %v1791
        %1793 = vdwg.mxu0
        %v1794 = vmul.f32 %v1748, 0.5
        %v1795 = vmul.f32 %v1750, 0.5
        %v1796 = vmul.f32 %v1754, 0.5
        %v1797 = vmul.f32 %v1756, 0.5
        %v1798 = vmul.f32 %v1760, 0.5
        %v1799 = vmul.f32 %v1762, 0.5
        %v1800 = vmul.f32 %v1766, 0.5
        %v1801 = vmul.f32 %v1768, 0.5
        %v1802 = vmul.f32 %v1772, 0.5
        %v1803 = vmul.f32 %v1774, 0.5
        %v1804 = vmul.f32 %v1778, 0.5
        %v1805 = vmul.f32 %v1780, 0.5
        %v1806 = vmul.f32 %v1784, 0.5
        %v1807 = vmul.f32 %v1786, 0.5
        %v1808 = vmul.f32 %v1790, 0.5
        %v1809 = vmul.f32 %v1792, 0.5
        %v1810 = vmul.f32 %v1748, 0.70710677
        %v1811 = vmul.f32 %v1750, 0.70710677
        %v1812 = vmul.f32 %v1754, 0.70710677
        %v1813 = vmul.f32 %v1756, 0.70710677
        %v1814 = vmul.f32 %v1760, 0.70710677
        %v1815 = vmul.f32 %v1762, 0.70710677
        %v1816 = vmul.f32 %v1766, 0.70710677
        %v1817 = vmul.f32 %v1768, 0.70710677
        %v1818 = vmul.f32 %v1772, 0.70710677
        %v1819 = vmul.f32 %v1774, 0.70710677
        %v1820 = vmul.f32 %v1778, 0.70710677
        %v1821 = vmul.f32 %v1780, 0.70710677
        %v1822 = vmul.f32 %v1784, 0.70710677
        %v1823 = vmul.f32 %v1786, 0.70710677
        %v1824 = vmul.f32 %v1790, 0.70710677
        %v1825 = vmul.f32 %v1792, 0.70710677
        %vm1826 = vcmp.ge.f32.partialorder %v1810, 0.0
        %vm1827 = vcmp.ge.f32.partialorder %v1811, 0.0
        %vm1828 = vcmp.ge.f32.partialorder %v1812, 0.0
        %vm1829 = vcmp.ge.f32.partialorder %v1813, 0.0
        %vm1830 = vcmp.ge.f32.partialorder %v1814, 0.0
        %vm1831 = vcmp.ge.f32.partialorder %v1815, 0.0
        %vm1832 = vcmp.ge.f32.partialorder %v1816, 0.0
        %vm1833 = vcmp.ge.f32.partialorder %v1817, 0.0
        %vm1834 = vcmp.ge.f32.partialorder %v1818, 0.0
        %vm1835 = vcmp.ge.f32.partialorder %v1819, 0.0
        %vm1836 = vcmp.ge.f32.partialorder %v1820, 0.0
        %vm1837 = vcmp.ge.f32.partialorder %v1821, 0.0
        %vm1838 = vcmp.ge.f32.partialorder %v1822, 0.0
        %vm1839 = vcmp.ge.f32.partialorder %v1823, 0.0
        %vm1840 = vcmp.ge.f32.partialorder %v1824, 0.0
        %vm1841 = vcmp.ge.f32.partialorder %v1825, 0.0
        %v1842 = vsel %vm1826, 1.0, -1.0
        %v1843 = vsel %vm1827, 1.0, -1.0
        %v1844 = vsel %vm1828, 1.0, -1.0
        %v1845 = vsel %vm1829, 1.0, -1.0
        %v1846 = vsel %vm1830, 1.0, -1.0
        %v1847 = vsel %vm1831, 1.0, -1.0
        %v1848 = vsel %vm1832, 1.0, -1.0
        %v1849 = vsel %vm1833, 1.0, -1.0
        %v1850 = vsel %vm1834, 1.0, -1.0
        %v1851 = vsel %vm1835, 1.0, -1.0
        %v1852 = vsel %vm1836, 1.0, -1.0
        %v1853 = vsel %vm1837, 1.0, -1.0
        %v1854 = vsel %vm1838, 1.0, -1.0
        %v1855 = vsel %vm1839, 1.0, -1.0
        %v1856 = vsel %vm1840, 1.0, -1.0
        %v1857 = vsel %vm1841, 1.0, -1.0
        %v1858 = vand.u32 2147483647, %v1810
        %v1859 = vand.u32 2147483647, %v1811
        %v1860 = vand.u32 2147483647, %v1812
        %v1861 = vand.u32 2147483647, %v1813
        %v1862 = vand.u32 2147483647, %v1814
        %v1863 = vand.u32 2147483647, %v1815
        %v1864 = vand.u32 2147483647, %v1816
        %v1865 = vand.u32 2147483647, %v1817
        %v1866 = vand.u32 2147483647, %v1818
        %v1867 = vand.u32 2147483647, %v1819
        %v1868 = vand.u32 2147483647, %v1820
        %v1869 = vand.u32 2147483647, %v1821
        %v1870 = vand.u32 2147483647, %v1822
        %v1871 = vand.u32 2147483647, %v1823
        %v1872 = vand.u32 2147483647, %v1824
        %v1873 = vand.u32 2147483647, %v1825
        %v1874 = vmul.f32 %v1858, 0.3275911
        %v1875 = vmul.f32 %v1859, 0.3275911
        %v1876 = vmul.f32 %v1860, 0.3275911
        %v1877 = vmul.f32 %v1861, 0.3275911
        %v1878 = vmul.f32 %v1862, 0.3275911
        %v1879 = vmul.f32 %v1863, 0.3275911
        %v1880 = vmul.f32 %v1864, 0.3275911
        %v1881 = vmul.f32 %v1865, 0.3275911
        %v1882 = vmul.f32 %v1866, 0.3275911
        %v1883 = vmul.f32 %v1867, 0.3275911
        %v1884 = vmul.f32 %v1868, 0.3275911
        %v1885 = vmul.f32 %v1869, 0.3275911
        %v1886 = vmul.f32 %v1870, 0.3275911
        %v1887 = vmul.f32 %v1871, 0.3275911
        %v1888 = vmul.f32 %v1872, 0.3275911
        %v1889 = vmul.f32 %v1873, 0.3275911
        %v1890 = vadd.f32 %v1874, 1.0
        %v1891 = vadd.f32 %v1875, 1.0
        %v1892 = vadd.f32 %v1876, 1.0
        %v1893 = vadd.f32 %v1877, 1.0
        %v1894 = vadd.f32 %v1878, 1.0
        %v1895 = vadd.f32 %v1879, 1.0
        %v1896 = vadd.f32 %v1880, 1.0
        %v1897 = vadd.f32 %v1881, 1.0
        %v1898 = vadd.f32 %v1882, 1.0
        %v1899 = vadd.f32 %v1883, 1.0
        %v1900 = vadd.f32 %v1884, 1.0
        %v1901 = vadd.f32 %v1885, 1.0
        %v1902 = vadd.f32 %v1886, 1.0
        %v1903 = vadd.f32 %v1887, 1.0
        %v1904 = vadd.f32 %v1888, 1.0
        %v1905 = vadd.f32 %v1889, 1.0
        %v1906 = vrcp.pop %v1890
        %v1907 = vrcp.pop %v1891
        %v1908 = vrcp.pop %v1892
        %v1909 = vrcp.pop %v1893
        %v1910 = vrcp.pop %v1894
        %v1911 = vrcp.pop %v1895
        %v1912 = vrcp.pop %v1896
        %v1913 = vrcp.pop %v1897
        %v1914 = vrcp.pop %v1898
        %v1915 = vrcp.pop %v1899
        %v1916 = vrcp.pop %v1900
        %v1917 = vrcp.pop %v1901
        %v1918 = vrcp.pop %v1902
        %v1919 = vrcp.pop %v1903
        %v1920 = vrcp.pop %v1904
        %v1921 = vrcp.pop %v1905
        %v1922 = vmul.f32 %v1890, %v1906
        %v1923 = vmul.f32 %v1891, %v1907
        %v1924 = vmul.f32 %v1892, %v1908
        %v1925 = vmul.f32 %v1893, %v1909
        %v1926 = vmul.f32 %v1894, %v1910
        %v1927 = vmul.f32 %v1895, %v1911
        %v1928 = vmul.f32 %v1896, %v1912
        %v1929 = vmul.f32 %v1897, %v1913
        %v1930 = vmul.f32 %v1898, %v1914
        %v1931 = vmul.f32 %v1899, %v1915
        %v1932 = vmul.f32 %v1900, %v1916
        %v1933 = vmul.f32 %v1901, %v1917
        %v1934 = vmul.f32 %v1902, %v1918
        %v1935 = vmul.f32 %v1903, %v1919
        %v1936 = vmul.f32 %v1904, %v1920
        %v1937 = vmul.f32 %v1905, %v1921
        %v1938 = vsub.f32 2.0, %v1922
        %v1939 = vsub.f32 2.0, %v1923
        %v1940 = vsub.f32 2.0, %v1924
        %v1941 = vsub.f32 2.0, %v1925
        %v1942 = vsub.f32 2.0, %v1926
        %v1943 = vsub.f32 2.0, %v1927
        %v1944 = vsub.f32 2.0, %v1928
        %v1945 = vsub.f32 2.0, %v1929
        %v1946 = vsub.f32 2.0, %v1930
        %v1947 = vsub.f32 2.0, %v1931
        %v1948 = vsub.f32 2.0, %v1932
        %v1949 = vsub.f32 2.0, %v1933
        %v1950 = vsub.f32 2.0, %v1934
        %v1951 = vsub.f32 2.0, %v1935
        %v1952 = vsub.f32 2.0, %v1936
        %v1953 = vsub.f32 2.0, %v1937
        %v1954 = vmul.f32 %v1906, %v1938
        %v1955 = vmul.f32 %v1907, %v1939
        %v1956 = vmul.f32 %v1908, %v1940
        %v1957 = vmul.f32 %v1909, %v1941
        %v1958 = vmul.f32 %v1910, %v1942
        %v1959 = vmul.f32 %v1911, %v1943
        %v1960 = vmul.f32 %v1912, %v1944
        %v1961 = vmul.f32 %v1913, %v1945
        %v1962 = vmul.f32 %v1914, %v1946
        %v1963 = vmul.f32 %v1915, %v1947
        %v1964 = vmul.f32 %v1916, %v1948
        %v1965 = vmul.f32 %v1917, %v1949
        %v1966 = vmul.f32 %v1918, %v1950
        %v1967 = vmul.f32 %v1919, %v1951
        %v1968 = vmul.f32 %v1920, %v1952
        %v1969 = vmul.f32 %v1921, %v1953
        %v1970 = vmul.f32 %v1954, 1.0614054
        %v1971 = vmul.f32 %v1955, 1.0614054
        %v1972 = vmul.f32 %v1956, 1.0614054
        %v1973 = vmul.f32 %v1957, 1.0614054
        %v1974 = vmul.f32 %v1958, 1.0614054
        %v1975 = vmul.f32 %v1959, 1.0614054
        %v1976 = vmul.f32 %v1960, 1.0614054
        %v1977 = vmul.f32 %v1961, 1.0614054
        %v1978 = vmul.f32 %v1962, 1.0614054
        %v1979 = vmul.f32 %v1963, 1.0614054
        %v1980 = vmul.f32 %v1964, 1.0614054
        %v1981 = vmul.f32 %v1965, 1.0614054
        %v1982 = vmul.f32 %v1966, 1.0614054
        %v1983 = vmul.f32 %v1967, 1.0614054
        %v1984 = vmul.f32 %v1968, 1.0614054
        %v1985 = vmul.f32 %v1969, 1.0614054
        %v1986 = vadd.f32 %v1970, -1.4531521
        %v1987 = vadd.f32 %v1971, -1.4531521
        %v1988 = vadd.f32 %v1972, -1.4531521
        %v1989 = vadd.f32 %v1973, -1.4531521
        %v1990 = vadd.f32 %v1974, -1.4531521
        %v1991 = vadd.f32 %v1975, -1.4531521
        %v1992 = vadd.f32 %v1976, -1.4531521
        %v1993 = vadd.f32 %v1977, -1.4531521
        %v1994 = vadd.f32 %v1978, -1.4531521
        %v1995 = vadd.f32 %v1979, -1.4531521
        %v1996 = vadd.f32 %v1980, -1.4531521
        %v1997 = vadd.f32 %v1981, -1.4531521
        %v1998 = vadd.f32 %v1982, -1.4531521
        %v1999 = vadd.f32 %v1983, -1.4531521
        %v2000 = vadd.f32 %v1984, -1.4531521
        %v2001 = vadd.f32 %v1985, -1.4531521
        %v2002 = vmul.f32 %v1986, %v1954
        %v2003 = vmul.f32 %v1987, %v1955
        %v2004 = vmul.f32 %v1988, %v1956
        %v2005 = vmul.f32 %v1989, %v1957
        %v2006 = vmul.f32 %v1990, %v1958
        %v2007 = vmul.f32 %v1991, %v1959
        %v2008 = vmul.f32 %v1992, %v1960
        %v2009 = vmul.f32 %v1993, %v1961
        %v2010 = vmul.f32 %v1994, %v1962
        %v2011 = vmul.f32 %v1995, %v1963
        %v2012 = vmul.f32 %v1996, %v1964
        %v2013 = vmul.f32 %v1997, %v1965
        %v2014 = vmul.f32 %v1998, %v1966
        %v2015 = vmul.f32 %v1999, %v1967
        %v2016 = vmul.f32 %v2000, %v1968
        %v2017 = vmul.f32 %v2001, %v1969
        %v2018 = vadd.f32 %v2002, 1.4214138
        %v2019 = vadd.f32 %v2003, 1.4214138
        %v2020 = vadd.f32 %v2004, 1.4214138
        %v2021 = vadd.f32 %v2005, 1.4214138
        %v2022 = vadd.f32 %v2006, 1.4214138
        %v2023 = vadd.f32 %v2007, 1.4214138
        %v2024 = vadd.f32 %v2008, 1.4214138
        %v2025 = vadd.f32 %v2009, 1.4214138
        %v2026 = vadd.f32 %v2010, 1.4214138
        %v2027 = vadd.f32 %v2011, 1.4214138
        %v2028 = vadd.f32 %v2012, 1.4214138
        %v2029 = vadd.f32 %v2013, 1.4214138
        %v2030 = vadd.f32 %v2014, 1.4214138
        %v2031 = vadd.f32 %v2015, 1.4214138
        %v2032 = vadd.f32 %v2016, 1.4214138
        %v2033 = vadd.f32 %v2017, 1.4214138
        %v2034 = vmul.f32 %v2018, %v1954
        %v2035 = vmul.f32 %v2019, %v1955
        %v2036 = vmul.f32 %v2020, %v1956
        %v2037 = vmul.f32 %v2021, %v1957
        %v2038 = vmul.f32 %v2022, %v1958
        %v2039 = vmul.f32 %v2023, %v1959
        %v2040 = vmul.f32 %v2024, %v1960
        %v2041 = vmul.f32 %v2025, %v1961
        %v2042 = vmul.f32 %v2026, %v1962
        %v2043 = vmul.f32 %v2027, %v1963
        %v2044 = vmul.f32 %v2028, %v1964
        %v2045 = vmul.f32 %v2029, %v1965
        %v2046 = vmul.f32 %v2030, %v1966
        %v2047 = vmul.f32 %v2031, %v1967
        %v2048 = vmul.f32 %v2032, %v1968
        %v2049 = vmul.f32 %v2033, %v1969
        %v2050 = vadd.f32 %v2034, -0.28449672
        %v2051 = vadd.f32 %v2035, -0.28449672
        %v2052 = vadd.f32 %v2036, -0.28449672
        %v2053 = vadd.f32 %v2037, -0.28449672
        %v2054 = vadd.f32 %v2038, -0.28449672
        %v2055 = vadd.f32 %v2039, -0.28449672
        %v2056 = vadd.f32 %v2040, -0.28449672
        %v2057 = vadd.f32 %v2041, -0.28449672
        %v2058 = vadd.f32 %v2042, -0.28449672
        %v2059 = vadd.f32 %v2043, -0.28449672
        %v2060 = vadd.f32 %v2044, -0.28449672
        %v2061 = vadd.f32 %v2045, -0.28449672
        %v2062 = vadd.f32 %v2046, -0.28449672
        %v2063 = vadd.f32 %v2047, -0.28449672
        %v2064 = vadd.f32 %v2048, -0.28449672
        %v2065 = vadd.f32 %v2049, -0.28449672
        %v2066 = vmul.f32 %v2050, %v1954
        %v2067 = vmul.f32 %v2051, %v1955
        %v2068 = vmul.f32 %v2052, %v1956
        %v2069 = vmul.f32 %v2053, %v1957
        %v2070 = vmul.f32 %v2054, %v1958
        %v2071 = vmul.f32 %v2055, %v1959
        %v2072 = vmul.f32 %v2056, %v1960
        %v2073 = vmul.f32 %v2057, %v1961
        %v2074 = vmul.f32 %v2058, %v1962
        %v2075 = vmul.f32 %v2059, %v1963
        %v2076 = vmul.f32 %v2060, %v1964
        %v2077 = vmul.f32 %v2061, %v1965
        %v2078 = vmul.f32 %v2062, %v1966
        %v2079 = vmul.f32 %v2063, %v1967
        %v2080 = vmul.f32 %v2064, %v1968
        %v2081 = vmul.f32 %v2065, %v1969
        %v2082 = vadd.f32 %v2066, 0.2548296
        %v2083 = vadd.f32 %v2067, 0.2548296
        %v2084 = vadd.f32 %v2068, 0.2548296
        %v2085 = vadd.f32 %v2069, 0.2548296
        %v2086 = vadd.f32 %v2070, 0.2548296
        %v2087 = vadd.f32 %v2071, 0.2548296
        %v2088 = vadd.f32 %v2072, 0.2548296
        %v2089 = vadd.f32 %v2073, 0.2548296
        %v2090 = vadd.f32 %v2074, 0.2548296
        %v2091 = vadd.f32 %v2075, 0.2548296
        %v2092 = vadd.f32 %v2076, 0.2548296
        %v2093 = vadd.f32 %v2077, 0.2548296
        %v2094 = vadd.f32 %v2078, 0.2548296
        %v2095 = vadd.f32 %v2079, 0.2548296
        %v2096 = vadd.f32 %v2080, 0.2548296
        %v2097 = vadd.f32 %v2081, 0.2548296
        %v2098 = vmul.f32 %v2082, %v1954
        %v2099 = vmul.f32 %v2083, %v1955
        %v2100 = vmul.f32 %v2084, %v1956
        %v2101 = vmul.f32 %v2085, %v1957
        %v2102 = vmul.f32 %v2086, %v1958
        %v2103 = vmul.f32 %v2087, %v1959
        %v2104 = vmul.f32 %v2088, %v1960
        %v2105 = vmul.f32 %v2089, %v1961
        %v2106 = vmul.f32 %v2090, %v1962
        %v2107 = vmul.f32 %v2091, %v1963
        %v2108 = vmul.f32 %v2092, %v1964
        %v2109 = vmul.f32 %v2093, %v1965
        %v2110 = vmul.f32 %v2094, %v1966
        %v2111 = vmul.f32 %v2095, %v1967
        %v2112 = vmul.f32 %v2096, %v1968
        %v2113 = vmul.f32 %v2097, %v1969
        %v2114 = vsub.f32 0.0, %v1858
        %v2115 = vsub.f32 0.0, %v1859
        %v2116 = vsub.f32 0.0, %v1860
        %v2117 = vsub.f32 0.0, %v1861
        %v2118 = vsub.f32 0.0, %v1862
        %v2119 = vsub.f32 0.0, %v1863
        %v2120 = vsub.f32 0.0, %v1864
        %v2121 = vsub.f32 0.0, %v1865
        %v2122 = vsub.f32 0.0, %v1866
        %v2123 = vsub.f32 0.0, %v1867
        %v2124 = vsub.f32 0.0, %v1868
        %v2125 = vsub.f32 0.0, %v1869
        %v2126 = vsub.f32 0.0, %v1870
        %v2127 = vsub.f32 0.0, %v1871
        %v2128 = vsub.f32 0.0, %v1872
        %v2129 = vsub.f32 0.0, %v1873
        %v2130 = vmul.f32 %v2114, %v1858
        %v2131 = vmul.f32 %v2115, %v1859
        %v2132 = vmul.f32 %v2116, %v1860
        %v2133 = vmul.f32 %v2117, %v1861
        %v2134 = vmul.f32 %v2118, %v1862
        %v2135 = vmul.f32 %v2119, %v1863
        %v2136 = vmul.f32 %v2120, %v1864
        %v2137 = vmul.f32 %v2121, %v1865
        %v2138 = vmul.f32 %v2122, %v1866
        %v2139 = vmul.f32 %v2123, %v1867
        %v2140 = vmul.f32 %v2124, %v1868
        %v2141 = vmul.f32 %v2125, %v1869
        %v2142 = vmul.f32 %v2126, %v1870
        %v2143 = vmul.f32 %v2127, %v1871
        %v2144 = vmul.f32 %v2128, %v1872
        %v2145 = vmul.f32 %v2129, %v1873
        %v2146 = vmul.f32 %v2130, 1.442695
        %v2147 = vpow.pop %v2146
        %v2148 = vmul.f32 %v2131, 1.442695
        %v2149 = vpow.pop %v2148
        %v2150 = vmul.f32 %v2132, 1.442695
        %v2151 = vpow.pop %v2150
        %v2152 = vmul.f32 %v2133, 1.442695
        %v2153 = vpow.pop %v2152
        %v2154 = vmul.f32 %v2134, 1.442695
        %v2155 = vpow.pop %v2154
        %v2156 = vmul.f32 %v2135, 1.442695
        %v2157 = vpow.pop %v2156
        %v2158 = vmul.f32 %v2136, 1.442695
        %v2159 = vpow.pop %v2158
        %v2160 = vmul.f32 %v2137, 1.442695
        %v2161 = vpow.pop %v2160
        %v2162 = vmul.f32 %v2138, 1.442695
        %v2163 = vpow.pop %v2162
        %v2164 = vmul.f32 %v2139, 1.442695
        %v2165 = vpow.pop %v2164
        %v2166 = vmul.f32 %v2140, 1.442695
        %v2167 = vpow.pop %v2166
        %v2168 = vmul.f32 %v2141, 1.442695
        %v2169 = vpow.pop %v2168
        %v2170 = vmul.f32 %v2142, 1.442695
        %v2171 = vpow.pop %v2170
        %v2172 = vmul.f32 %v2143, 1.442695
        %v2173 = vpow.pop %v2172
        %v2174 = vmul.f32 %v2144, 1.442695
        %v2175 = vpow.pop %v2174
        %v2176 = vmul.f32 %v2145, 1.442695
        %v2177 = vpow.pop %v2176
        %v2178 = vmul.f32 %v2098, %v2147
        %v2179 = vmul.f32 %v2099, %v2149
        %v2180 = vmul.f32 %v2100, %v2151
        %v2181 = vmul.f32 %v2101, %v2153
        %v2182 = vmul.f32 %v2102, %v2155
        %v2183 = vmul.f32 %v2103, %v2157
        %v2184 = vmul.f32 %v2104, %v2159
        %v2185 = vmul.f32 %v2105, %v2161
        %v2186 = vmul.f32 %v2106, %v2163
        %v2187 = vmul.f32 %v2107, %v2165
        %v2188 = vmul.f32 %v2108, %v2167
        %v2189 = vmul.f32 %v2109, %v2169
        %v2190 = vmul.f32 %v2110, %v2171
        %v2191 = vmul.f32 %v2111, %v2173
        %v2192 = vmul.f32 %v2112, %v2175
        %v2193 = vmul.f32 %v2113, %v2177
        %v2194 = vsub.f32 1.0, %v2178
        %v2195 = vsub.f32 1.0, %v2179
        %v2196 = vsub.f32 1.0, %v2180
        %v2197 = vsub.f32 1.0, %v2181
        %v2198 = vsub.f32 1.0, %v2182
        %v2199 = vsub.f32 1.0, %v2183
        %v2200 = vsub.f32 1.0, %v2184
        %v2201 = vsub.f32 1.0, %v2185
        %v2202 = vsub.f32 1.0, %v2186
        %v2203 = vsub.f32 1.0, %v2187
        %v2204 = vsub.f32 1.0, %v2188
        %v2205 = vsub.f32 1.0, %v2189
        %v2206 = vsub.f32 1.0, %v2190
        %v2207 = vsub.f32 1.0, %v2191
        %v2208 = vsub.f32 1.0, %v2192
        %v2209 = vsub.f32 1.0, %v2193
        %v2210 = vmul.f32 %v1842, %v2194
        %v2211 = vmul.f32 %v1843, %v2195
        %v2212 = vmul.f32 %v1844, %v2196
        %v2213 = vmul.f32 %v1845, %v2197
        %v2214 = vmul.f32 %v1846, %v2198
        %v2215 = vmul.f32 %v1847, %v2199
        %v2216 = vmul.f32 %v1848, %v2200
        %v2217 = vmul.f32 %v1849, %v2201
        %v2218 = vmul.f32 %v1850, %v2202
        %v2219 = vmul.f32 %v1851, %v2203
        %v2220 = vmul.f32 %v1852, %v2204
        %v2221 = vmul.f32 %v1853, %v2205
        %v2222 = vmul.f32 %v1854, %v2206
        %v2223 = vmul.f32 %v1855, %v2207
        %v2224 = vmul.f32 %v1856, %v2208
        %v2225 = vmul.f32 %v1857, %v2209
        %v2226 = vadd.f32 %v2210, 1.0
        %v2227 = vadd.f32 %v2211, 1.0
        %v2228 = vadd.f32 %v2212, 1.0
        %v2229 = vadd.f32 %v2213, 1.0
        %v2230 = vadd.f32 %v2214, 1.0
        %v2231 = vadd.f32 %v2215, 1.0
        %v2232 = vadd.f32 %v2216, 1.0
        %v2233 = vadd.f32 %v2217, 1.0
        %v2234 = vadd.f32 %v2218, 1.0
        %v2235 = vadd.f32 %v2219, 1.0
        %v2236 = vadd.f32 %v2220, 1.0
        %v2237 = vadd.f32 %v2221, 1.0
        %v2238 = vadd.f32 %v2222, 1.0
        %v2239 = vadd.f32 %v2223, 1.0
        %v2240 = vadd.f32 %v2224, 1.0
        %v2241 = vadd.f32 %v2225, 1.0
        %v2242 = vmul.f32 %v1794, %v2226
        %v2243 = vmul.f32 %v1795, %v2227
        %v2244 = vmul.f32 %v1796, %v2228
        %v2245 = vmul.f32 %v1797, %v2229
        %v2246 = vmul.f32 %v1798, %v2230
        %v2247 = vmul.f32 %v1799, %v2231
        %v2248 = vmul.f32 %v1800, %v2232
        %v2249 = vmul.f32 %v1801, %v2233
        %v2250 = vmul.f32 %v1802, %v2234
        %v2251 = vmul.f32 %v1803, %v2235
        %v2252 = vmul.f32 %v1804, %v2236
        %v2253 = vmul.f32 %v1805, %v2237
        %v2254 = vmul.f32 %v1806, %v2238
        %v2255 = vmul.f32 %v1807, %v2239
        %v2256 = vmul.f32 %v1808, %v2240
        %v2257 = vmul.f32 %v1809, %v2241
        %v2258 = vld [vmem:[%s7] sm:$0xff]
        %v2259 = vld [vmem:[%s7 + $0x8] sm:$0xff]
        %v2260 = vld [vmem:[%s7 + $0x10] sm:$0xff]
        %v2261 = vld [vmem:[%s7 + $0x18] sm:$0xff]
        %v2262 = vld [vmem:[%s8] sm:$0xff]
        %v2263 = vld [vmem:[%s8 + $0x8] sm:$0xff]
        %v2264 = vld [vmem:[%s8 + $0x10] sm:$0xff]
        %v2265 = vld [vmem:[%s8 + $0x18] sm:$0xff]
        %2267 = vset.pattern.permute.xlu0 0
        %2268 = vperm.xlu0 %2267, %v2262
        %v2269 = vpop.permute.xlu0 %2268
        %2272 = vset.pattern.permute.xlu0 0
        %2273 = vperm.xlu0 %2272, %v2263
        %v2274 = vpop.permute.xlu0 %2273
        %2277 = vset.pattern.permute.xlu0 0
        %2278 = vperm.xlu0 %2277, %v2264
        %v2279 = vpop.permute.xlu0 %2278
        %2282 = vset.pattern.permute.xlu0 0
        %2283 = vperm.xlu0 %2282, %v2265
        %v2284 = vpop.permute.xlu0 %2283
        %vm2286 = vcmask 523264
        %v2288 = vsel %vm2286, %v2258, 0
        %v2291 = vsel %vm2286, %v2259, 0
        %v2294 = vsel %vm2286, %v2260, 0
        %v2297 = vsel %vm2286, %v2261, 0
        %2299 = vmatprep.subr.mxu0 %v2243
        %2300 = vmatpush1.msra.mxu0 %v2242
        %2301 = vmatprep.subr.mxu0 %v2245
        %2302 = vmatpush1.msra.mxu0 %v2244
        %2303 = vmatprep.subr.mxu0 %v2247
        %2304 = vmatpush1.msra.mxu0 %v2246
        %2305 = vmatprep.subr.mxu0 %v2249
        %2306 = vmatpush1.msra.mxu0 %v2248
        %2307 = vmatprep.subr.mxu0 %v2251
        %2308 = vmatpush1.msra.mxu0 %v2250
        %2309 = vmatprep.subr.mxu0 %v2253
        %2310 = vmatpush1.msra.mxu0 %v2252
        %2311 = vmatprep.subr.mxu0 %v2255
        %2312 = vmatpush1.msra.mxu0 %v2254
        %2313 = vmatprep.subr.mxu0 %v2257
        %2314 = vmatpush1.msra.mxu0 %v2256
        %2315 = vmatprep.subr.mxu0 0.0
        %2316 = vmatpush1.msra.mxu0 0.0
        %2317 = vmatprep.subr.mxu0 0.0
        %2318 = vmatpush1.msra.mxu0 0.0
        %2319 = vmatprep.subr.mxu0 0.0
        %2320 = vmatpush1.msra.mxu0 0.0
        %2321 = vmatprep.subr.mxu0 0.0
        %2322 = vmatpush1.msra.mxu0 0.0
        %2323 = vmatprep.subr.mxu0 0.0
        %2324 = vmatpush1.msra.mxu0 0.0
        %2325 = vmatprep.subr.mxu0 0.0
        %2326 = vmatpush1.msra.mxu0 0.0
        %2327 = vmatprep.subr.mxu0 0.0
        %2328 = vmatpush1.msra.mxu0 0.0
        %2329 = vmatprep.subr.mxu0 0.0
        %2330 = vmatpush1.msra.mxu0 0.0
        %2331 = vmatprep.subr.mxu0 0.0
        %2332 = vmatpush1.msra.mxu0 0.0
        %2333 = vmatprep.subr.mxu0 0.0
        %2334 = vmatpush1.msra.mxu0 0.0
        %2335 = vmatprep.subr.mxu0 0.0
        %2336 = vmatpush1.msra.mxu0 0.0
        %2337 = vmatprep.subr.mxu0 0.0
        %2338 = vmatpush1.msra.mxu0 0.0
        %2339 = vmatprep.subr.mxu0 0.0
        %2340 = vmatpush1.msra.mxu0 0.0
        %2341 = vmatprep.subr.mxu0 0.0
        %2342 = vmatpush1.msra.mxu0 0.0
        %2343 = vmatprep.subr.mxu0 0.0
        %2344 = vmatpush1.msra.mxu0 0.0
        %2345 = vmatprep.subr.mxu0 0.0
        %2346 = vmatpush1.msra.mxu0 0.0
        %2347 = vmatprep.subr.mxu0 0.0
        %2348 = vmatpush1.msra.mxu0 0.0
        %2349 = vmatprep.subr.mxu0 0.0
        %2350 = vmatpush1.msra.mxu0 0.0
        %2351 = vmatprep.subr.mxu0 0.0
        %2352 = vmatpush1.msra.mxu0 0.0
        %2353 = vmatprep.subr.mxu0 0.0
        %2354 = vmatpush1.msra.mxu0 0.0
        %2355 = vmatprep.subr.mxu0 0.0
        %2356 = vmatpush1.msra.mxu0 0.0
        %2357 = vmatprep.subr.mxu0 0.0
        %2358 = vmatpush1.msra.mxu0 0.0
        %2359 = vmatprep.subr.mxu0 0.0
        %2360 = vmatpush1.msra.mxu0 0.0
        %2361 = vmatprep.subr.mxu0 0.0
        %2362 = vmatpush1.msra.mxu0 0.0
        %2363 = vmatprep.mubr.f32.mxu0 0.0
        %2364 = vmatmul.mubr.f32.gmra.mrb[0].mxu0 %v2288
        %v2365 = vpop.f32.mrb[0].mxu0
        %v2366 = vadd.f32 %v2269, %v2365
        %v2367 = vpop.f32.mrb[0].mxu0
        %v2368 = vadd.f32 %v2269, %v2367
        %2369 = vmatprep.mubr.f32.mxu0 0.0
        %2370 = vmatmul.mubr.f32.gmra.mrb[0].mxu0 %v2291
        %v2371 = vpop.f32.mrb[0].mxu0
        %v2372 = vadd.f32 %v2274, %v2371
        %v2373 = vpop.f32.mrb[0].mxu0
        %v2374 = vadd.f32 %v2274, %v2373
        %2375 = vmatprep.mubr.f32.mxu0 0.0
        %2376 = vmatmul.mubr.f32.gmra.mrb[0].mxu0 %v2294
        %v2377 = vpop.f32.mrb[0].mxu0
        %v2378 = vadd.f32 %v2279, %v2377
        %v2379 = vpop.f32.mrb[0].mxu0
        %v2380 = vadd.f32 %v2279, %v2379
        %2381 = vmatprep.mubr.f32.mxu0 0.0
        %2382 = vmatmul.mubr.f32.gmra.mrb[0].mxu0 %v2297
        %v2383 = vpop.f32.mrb[0].mxu0
        %v2384 = vadd.f32 %v2284, %v2383
        %v2385 = vpop.f32.mrb[0].mxu0
        %v2386 = vadd.f32 %v2284, %v2385
        %2387 = vdwg.mxu0
        %v2388 = vadd.f32 %v371, %v2366
        %v2389 = vadd.f32 %v372, %v2368
        %v2390 = vadd.f32 %v373, %v2372
        %v2391 = vadd.f32 %v374, %v2374
        %v2392 = vadd.f32 %v375, %v2378
        %v2393 = vadd.f32 %v376, %v2380
        %v2394 = vadd.f32 %v377, %v2384
        %v2395 = vadd.f32 %v378, %v2386
        %2396 = vst [vmem:[%s368] sm:$0xff] %v2388
        %2397 = vst [vmem:[%s368 + $0x8] sm:$0xff] %v2389
        %2398 = vst [vmem:[%s368 + $0x10] sm:$0xff] %v2390
        %2399 = vst [vmem:[%s368 + $0x18] sm:$0xff] %v2391
        %2400 = vst [vmem:[%s368 + $0x20] sm:$0xff] %v2392
        %2401 = vst [vmem:[%s368 + $0x28] sm:$0xff] %v2393
        %2402 = vst [vmem:[%s368 + $0x30] sm:$0xff] %v2394
        %2403 = vst [vmem:[%s368 + $0x38] sm:$0xff] %v2395
        %s2404 = sand.u32 %s244, 1
        %s2405 = scalar_lea.sflag [#allocation4], %s2404
        %s2406 = sand.u32 %s244, 1
        %s2407 = smul.addr %s2406, 64
        %s2408 = scalar_lea.vmem [#allocation5], %s2407
        // Predicated region
        $region61: #{tpu_custom_call.1} parent=55 // pred_check
          %p2409 = pneg %p254
        $region62: #{tpu_custom_call.1} parent=55 // pred_check_branch
          %2411 = sbr.rel (%p2409) target = $region64
        $region63: #{tpu_custom_call.1} parent=55 // pred_region
          %s2412 = smul.u32 2, %s31
          %s2414 = ssub.s32 1024, 1024
          %2415 = vsyncadd %s2405, %s2414
          %s2416 = smul.addr %s30, 24
          %s2417 = sadd.s32 %s2412, %s2416
          %s2418 = smul.addr %s2417, 128
          %s2419 = scalar_lea.hbm %s9, %s2418
          %s2420 = sshll.u32 %s2408, 4
          %s2421 = int_to_ptr.vmem [resolvable:$true] %s2420
          %2426 = dma.vmem_to_hbm [thread:$0]  %s2421, 1024, %s2419, %s2405, 256, 768, 16
        $region64: #{tpu_custom_call.1} parent=55 // pred_fallthru
          _
      $region56: #{tpu_custom_call.1} parent=5 // pred_fallthru
        _
      %p2427 = scmp.le.s32.totalorder 2, %s21
      // Predicated region
      $region65: #{tpu_custom_call.1} parent=5 // pred_check
        %p2428 = pneg %p2427
      $region66: #{tpu_custom_call.1} parent=5 // pred_check_branch
        %2430 = sbr.rel (%p2428) target = $region68
      $region67: #{tpu_custom_call.1} parent=5 // pred_region
        %s2431 = ssub.s32 %s21, 2
        // Predicated region
        $region69: #{tpu_custom_call.1} parent=67 // pred_check
          %p2432 = pneg %p260
        $region70: #{tpu_custom_call.1} parent=67 // pred_check_branch
          %2434 = sbr.rel (%p2432) target = $region72
        $region71: #{tpu_custom_call.1} parent=67 // pred_region
          %s2435 = sand.u32 %s245, 1
          %s2436 = scalar_lea.sflag [#allocation4], %s2435
          %s2437 = sand.u32 %s245, 1
          %s2438 = smul.addr %s2437, 64
          %s2439 = scalar_lea.vmem [#allocation5], %s2438
          %2440 = dma.done %s2436, 1024
        $region72: #{tpu_custom_call.1} parent=67 // pred_fallthru
          _
      $region68: #{tpu_custom_call.1} parent=5 // pred_fallthru
        _
    $region6: #{tpu_custom_call.1} parent=1 // loop_footer
      %s25 = sadd.s32 1, %s21
    $region7: #{tpu_custom_call.1} parent=1 // loop_footer_branch
      %20 = sbr.rel target = $region3
    $region8: #{tpu_custom_call.1} parent=1 // loop_exit
      _
    %2441 = vsyncpa [#allocation3], 1
    %s2442 = scalar_lea.sflag [#allocation3], 1
    %2443 = vsyncpa %s2442, 1
    %2444 = vsyncpa [#allocation4], 1
    %s2445 = scalar_lea.sflag [#allocation4], 1
    %2446 = vsyncpa %s2445, 1

</llo_original>
